<compile_context>
chip_gen: v7x
topology: tpu7x:2x2x1
jax: 0.10.0
libtpu: 0.0.40
codegen_flags: <defaults>
</compile_context>

<pallas_src>
import functools

import jax
import jax.numpy as jnp
from jax.experimental import pallas as pl
from jax.experimental.pallas import tpu as pltpu

# ----------------------------- configuration (small synthetic sizes) ----------
N = 2             # batch
FC_DIM = 32       # encoder channels (PyTorch default: 2048)
MID = 16          # PPM / conv_last hidden channels (PyTorch default: 512)
NUM_CLASS = 8
H = W = 48        # divisible by all pool scales (1,2,3,6) and by ROW_TILE
POOL_SCALES = (1, 2, 3, 6)
BN_EPS = 1e-5
C_REAL = FC_DIM + len(POOL_SCALES) * MID          # 96 concatenated channels
CP = ((C_REAL + 127) // 128) * 128                # lane-padded to 128
ROW_TILE = 8                                      # 8 * 48 = 384 lanes (3 x 128)


# ----------------------------- Pallas kernels ---------------------------------
def _ppm_conv1x1_kernel(x_ref, w_ref, b_ref, o_ref):
    """One PPM branch per grid step: y = relu(x @ w + b). BN scale pre-folded into w."""
    y = jnp.dot(x_ref[0], w_ref[0], preferred_element_type=jnp.float32)
    o_ref[0] = jnp.maximum(y + b_ref[0], 0.0).astype(o_ref.dtype)


def ppm_conv1x1(pooled, w_stk, b_stk):
    """pooled: (S, R, Cin) bf16 row-padded; w_stk: (S, Cin, Cout) bf16; b_stk: (S, 1, Cout) f32."""
    s_cnt, r, cin = pooled.shape
    cout = w_stk.shape[-1]
    return pl.pallas_call(
        _ppm_conv1x1_kernel,
        out_shape=jax.ShapeDtypeStruct((s_cnt, r, cout), jnp.float32),
        grid=(s_cnt,),
        in_specs=[
            pl.BlockSpec((1, r, cin), lambda i: (i, 0, 0)),
            pl.BlockSpec((1, cin, cout), lambda i: (i, 0, 0)),
            pl.BlockSpec((1, 1, cout), lambda i: (i, 0, 0)),
        ],
        out_specs=pl.BlockSpec((1, r, cout), lambda i: (i, 0, 0)),
        compiler_params=pltpu.CompilerParams(dimension_semantics=("parallel",)),
    )(pooled, w_stk, b_stk)


def _conv_head_kernel(x_ref, w3_ref, b3_ref, wlt_ref, blt_ref, o_ref, *,
                      row_tile, w):
    """Fused conv_last for one (batch, row-block) grid step:
         3x3 conv (pad=1, BN scale folded into weights) + bias + ReLU
         -> 1x1 classifier (+bias) -> log_softmax over classes.
    x_ref:   (1, h+2, w+2, CP)   bf16 halo-padded activations (whole image, resident)
    w3_ref:  (3, 3*CP, mid)      bf16, laid out (dy, dx*cin, cout)
    b3_ref:  (1, mid)            f32
    wlt_ref: (nc, mid)           bf16
    blt_ref: (nc, 1)             f32
    o_ref:   (1, nc, row_tile*w) f32 lane-dense log-probs for this row block
    """
    rb = pl.program_id(1)
    r0 = pl.multiple_of(rb * row_tile, row_tile)   # padded row of the dy=0 tap
    mid = w3_ref.shape[-1]

    acc = None
    for dy in range(3):
        slab = x_ref[0, pl.ds(r0 + dy, row_tile), :, :]         # (rt, w+2, CP) bf16
        # per-dy im2col along the lane axis: one K = 3*CP MXU push (3 total, not 9)
        patches = jnp.concatenate([slab[:, dx:dx + w, :] for dx in range(3)],
                                  axis=-1)                      # (rt, w, 3*CP)
        part = jax.lax.dot_general(
            patches, w3_ref[dy],
            dimension_numbers=(((2,), (0,)), ((), ())),
            preferred_element_type=jnp.float32)                 # (rt, w, mid) f32
        acc = part if acc is None else acc + part

    y = jnp.maximum(acc + b3_ref[...], 0.0)                     # bias + ReLU (f32)
    y2 = y.reshape(row_tile * w, mid).astype(jnp.bfloat16)      # tile-aligned reshape

    # classifier in transposed orientation -> pixels land on the lane axis (384)
    logits_t = jax.lax.dot_general(
        wlt_ref[...], y2,
        dimension_numbers=(((1,), (1,)), ((), ())),
        preferred_element_type=jnp.float32) + blt_ref[...]      # (nc, rt*w) f32

    # log_softmax over the class (sublane) axis
    m = jnp.max(logits_t, axis=0, keepdims=True)
    z = logits_t - m
    lse = jnp.log(jnp.sum(jnp.exp(z), axis=0, keepdims=True))
    o_ref[0] = (z - lse).astype(o_ref.dtype)                    # unmasked lane-dense store


def fused_conv_head(cat_p, w3f, b3, wl_t, bl_t):
    """cat_p: (n, h+2, w+2, CP) bf16 halo-padded NHWC.
    Returns (n, num_class, h*w) f32 log-probs (row-major pixels on the lane axis)."""
    n, hp, wp, cp = cat_p.shape
    h, w = hp - 2, wp - 2
    mid = w3f.shape[-1]
    nc = wl_t.shape[0]
    kern = functools.partial(_conv_head_kernel, row_tile=ROW_TILE, w=w)
    return pl.pallas_call(
        kern,
        out_shape=jax.ShapeDtypeStruct((n, nc, h * w), jnp.float32),
        grid=(n, h // ROW_TILE),
        in_specs=[
            # whole padded image; index_map constant in rb -> DMA'd once per batch
            pl.BlockSpec((1, hp, wp, cp), lambda i, rb: (i, 0, 0, 0)),
            pl.BlockSpec((3, 3 * cp, mid), lambda i, rb: (0, 0, 0)),
            pl.BlockSpec((1, mid), lambda i, rb: (0, 0)),
            pl.BlockSpec((nc, mid), lambda i, rb: (0, 0)),
            pl.BlockSpec((nc, 1), lambda i, rb: (0, 0)),
        ],
        out_specs=pl.BlockSpec((1, nc, ROW_TILE * w), lambda i, rb: (i, 0, rb)),
        compiler_params=pltpu.CompilerParams(
            dimension_semantics=("parallel", "parallel")),
    )(cat_p, w3f, b3, wl_t, bl_t)


# ----------------------------- plain-JAX glue ----------------------------------
def adaptive_avg_pool_nhwc(x, scale):
    n, h, w, c = x.shape
    kh, kw = h // scale, w // scale          # divisible case
    return x.reshape(n, scale, kh, scale, kw, c).mean(axis=(2, 4))


def upsample_bilinear_nhwc(x, out_h, out_w):
    """PyTorch F.upsample(mode='bilinear', align_corners=False) semantics."""
    n, h, w, c = x.shape

    def src_idx(out_size, in_size):
        d = (jnp.arange(out_size, dtype=jnp.float32) + 0.5) * (in_size / out_size) - 0.5
        d = jnp.maximum(d, 0.0)
        i0 = jnp.minimum(jnp.floor(d).astype(jnp.int32), in_size - 1)
        i1 = jnp.minimum(i0 + 1, in_size - 1)
        lam = d - i0.astype(jnp.float32)
        return i0, i1, lam

    y0, y1, ly = src_idx(out_h, h)
    x0, x1, lx = src_idx(out_w, w)
    lx = lx[None, None, :, None]
    ly = ly[None, :, None, None]
    top = x[:, y0][:, :, x0] * (1.0 - lx) + x[:, y0][:, :, x1] * lx
    bot = x[:, y1][:, :, x0] * (1.0 - lx) + x[:, y1][:, :, x1] * lx
    return top * (1.0 - ly) + bot * ly


def fold_bn(gamma, beta, mean, var, eps=BN_EPS):
    inv = gamma / jnp.sqrt(var + eps)
    return inv, beta - mean * inv


# ----------------------------- forward pass ------------------------------------
def semantic_decoder_forward(x_nchw, params):
    x = jnp.transpose(x_nchw, (0, 2, 3, 1)).astype(jnp.float32)   # NCHW -> NHWC
    n, h, w, cin = x.shape

    # ---- PPM: one Pallas launch for all scales (stacked, row-padded, bf16) ----
    r_max = max(n * s * s for s in POOL_SCALES)
    r_pad = ((r_max + 7) // 8) * 8
    pooled = jnp.stack([
        jnp.pad(adaptive_avg_pool_nhwc(x, s).reshape(n * s * s, cin),
                ((0, r_pad - n * s * s), (0, 0)))
        for s in POOL_SCALES]).astype(jnp.bfloat16)               # (4, r_pad, cin)
    w_stk = jnp.stack([wm for (wm, _) in params["ppm"]])          # (4, cin, MID) bf16
    b_stk = jnp.stack([b.reshape(1, -1) for (_, b) in params["ppm"]])  # (4, 1, MID) f32
    ppm_y = ppm_conv1x1(pooled, w_stk, b_stk)                     # (4, r_pad, MID) f32

    feats = [x.astype(jnp.bfloat16)]
    for idx, s in enumerate(POOL_SCALES):
        y = ppm_y[idx, :n * s * s].reshape(n, s, s, MID)
        feats.append(upsample_bilinear_nhwc(y, h, w).astype(jnp.bfloat16))
    if CP > C_REAL:                                               # lane-pad channels 96 -> 128
        feats.append(jnp.zeros((n, h, w, CP - C_REAL), jnp.bfloat16))
    cat = jnp.concatenate(feats, axis=-1)                         # (n, h, w, CP) bf16
    # 1-pixel spatial halo folded into the wrapper (fuses with the concat's HBM
    # write); the kernel DMAs a ready-to-use (h+2, w+2, CP) tile — no VMEM halo copy.
    cat_p = jnp.pad(cat, ((0, 0), (1, 1), (1, 1), (0, 0)))

    # ---- fused conv_last (3x3 conv+BN+ReLU -> 1x1 cls -> log_softmax) ----
    w3f, b3 = params["conv3"]
    wl_t, bl_t = params["conv_cls"]
    out = fused_conv_head(cat_p, w3f, b3, wl_t, bl_t)             # (n, NC, h*w) log-probs
    out = out.reshape(n, NUM_CLASS, h, w)                         # directly NCHW (no transpose)

    # 8x nearest upsample AFTER log_softmax (commutes with a per-pixel repeat);
    # broadcast_to + reshape fuses into a single HBM write of the 64x tensor.
    out = jnp.broadcast_to(out[:, :, :, None, :, None],
                           (n, NUM_CLASS, h, 8, w, 8))
    return out.reshape(n, NUM_CLASS, 8 * h, 8 * w)


# ----------------------------- deterministic parameters ------------------------
def init_params(key):
    ks = iter(jax.random.split(key, 32))

    def nrm(shape, scale=1.0):
        return scale * jax.random.normal(next(ks), shape, dtype=jnp.float32)

    def uni(shape, lo, hi):
        return jax.random.uniform(next(ks), shape, jnp.float32, lo, hi)

    def bn_fold():
        gamma, beta = uni((MID,), 0.5, 1.5), nrm((MID,), 0.1)
        mean, var = nrm((MID,), 0.1), uni((MID,), 0.5, 1.5)
        return fold_bn(gamma, beta, mean, var)

    params = {"ppm": []}
    for _ in POOL_SCALES:
        wmat = nrm((FC_DIM, MID), 1.0 / (FC_DIM ** 0.5))          # 1x1 conv weight (Cin, Cout)
        s, b = bn_fold()
        params["ppm"].append(((wmat * s[None, :]).astype(jnp.bfloat16), b))  # BN scale folded

    w3 = nrm((3, 3, C_REAL, MID), 1.0 / ((9 * C_REAL) ** 0.5))    # 3x3 conv weight (dy,dx,Cin,Cout)
    s, b = bn_fold()
    w3 = w3 * s                                                   # fold BN scale
    w3 = jnp.pad(w3, ((0, 0), (0, 0), (0, CP - C_REAL), (0, 0)))  # lane-pad Cin to 128
    # (dy, dx, cin, cout) -> (dy, dx*cin, cout): matches the in-kernel per-dy
    # lane-axis concatenation of the 3 dx-shifted patches.
    w3 = w3.reshape(3, 3 * CP, MID).astype(jnp.bfloat16)
    params["conv3"] = (w3, b.reshape(1, MID))

    wl = nrm((MID, NUM_CLASS), 1.0 / (MID ** 0.5))                # final 1x1 conv weight
    bl = nrm((NUM_CLASS,), 0.1)                                   # final 1x1 conv bias
    params["conv_cls"] = (jnp.transpose(wl).astype(jnp.bfloat16),
                          bl.reshape(NUM_CLASS, 1))
    return params


# ----------------------------- main --------------------------------------------
if __name__ == "__main__":
    key = jax.random.PRNGKey(0)
    kx, kp = jax.random.split(key)
    x = jax.random.normal(kx, (N, FC_DIM, H, W), dtype=jnp.float32)   # NCHW, like PyTorch
    params = init_params(kp)

    fwd = jax.jit(semantic_decoder_forward)
    out = fwd(x, params)
    jax.block_until_ready(out)

    assert out.shape == (N, NUM_CLASS, 8 * H, 8 * W), out.shape
    assert bool(jnp.all(jnp.isfinite(out)))
    # log_softmax over the class dim: probabilities must sum to 1 per pixel
    assert bool(jnp.allclose(jnp.sum(jnp.exp(out), axis=1), 1.0, atol=1e-4))
    print("KERNEL_OK")
</pallas_src>

<mosaic_0001>
module attributes {stable_mosaic.version = 11 : i64} {
  func.func @_ppm_conv1x1_kernel(%arg0: i32, %arg1: memref<1x72x32xbf16, #tpu.memory_space<vmem>>, %arg2: memref<1x32x16xbf16, #tpu.memory_space<vmem>>, %arg3: memref<1x1x16xf32, #tpu.memory_space<vmem>>, %arg4: memref<1x72x16xf32, #tpu.memory_space<vmem>>) attributes {dimension_semantics = [#tpu.dimension_semantics<parallel>], iteration_bounds = array<i64: 4>, scalar_prefetch = 0 : i64, scratch_operands = 0 : i64, tpu.core_type = #tpu.core_type<tc>, window_params = [{transform_indices = @transform_0, window_bounds = array<i64: 1, 72, 32>}, {transform_indices = @transform_1, window_bounds = array<i64: 1, 32, 16>}, {transform_indices = @transform_2, window_bounds = array<i64: 1, 1, 16>}, {transform_indices = @transform_3, window_bounds = array<i64: 1, 72, 16>}]} {
    %c0 = arith.constant 0 : index
    %c0_0 = arith.constant 0 : index
    %c0_1 = arith.constant 0 : index
    %0 = vector.load %arg1[%c0, %c0_0, %c0_1] : memref<1x72x32xbf16, #tpu.memory_space<vmem>>, vector<1x72x32xbf16>
    %1 = vector.shape_cast %0 : vector<1x72x32xbf16> to vector<72x32xbf16>
    %c0_2 = arith.constant 0 : index
    %c0_3 = arith.constant 0 : index
    %c0_4 = arith.constant 0 : index
    %2 = vector.load %arg2[%c0_2, %c0_3, %c0_4] : memref<1x32x16xbf16, #tpu.memory_space<vmem>>, vector<1x32x16xbf16>
    %3 = vector.shape_cast %2 : vector<1x32x16xbf16> to vector<32x16xbf16>
    %cst = arith.constant dense<0.000000e+00> : vector<72x16xf32>
    %4 = tpu.matmul %1, %3, %cst {dimension_numbers = #tpu.dot_dimension_numbers<[1], [0], [0], [1], [0, 0, 1, 1], [], []>} : vector<72x32xbf16>, vector<32x16xbf16>, vector<72x16xf32> -> vector<72x16xf32>
    %c0_5 = arith.constant 0 : index
    %c0_6 = arith.constant 0 : index
    %c0_7 = arith.constant 0 : index
    %5 = vector.load %arg3[%c0_5, %c0_6, %c0_7] : memref<1x1x16xf32, #tpu.memory_space<vmem>>, vector<1x1x16xf32>
    %6 = vector.shape_cast %5 : vector<1x1x16xf32> to vector<1x16xf32>
    %7 = vector.broadcast %6 : vector<1x16xf32> to vector<72x16xf32>
    %8 = arith.addf %4, %7 : vector<72x16xf32>
    %cst_8 = arith.constant 0.000000e+00 : f32
    %9 = vector.broadcast %cst_8 : f32 to vector<72x16xf32>
    %10 = arith.maximumf %8, %9 : vector<72x16xf32>
    %c0_9 = arith.constant 0 : index
    %c0_10 = arith.constant 0 : index
    %c0_11 = arith.constant 0 : index
    %11 = vector.load %arg4[%c0_9, %c0_10, %c0_11] : memref<1x72x16xf32, #tpu.memory_space<vmem>>, vector<1x72x16xf32>
    %12 = vector.shape_cast %11 : vector<1x72x16xf32> to vector<72x16xf32>
    %13 = vector.shape_cast %10 : vector<72x16xf32> to vector<1x72x16xf32>
    tpu.vector_store %arg4[%c0_9, %c0_10, %c0_11], %13 {strides = array<i32>} : memref<1x72x16xf32, #tpu.memory_space<vmem>>, vector<1x72x16xf32>,
    return
  }
  func.func @transform_0(%arg0: i32) -> (i32, i32, i32) {
    %c0_i32 = arith.constant 0 : i32
    %c0_i32_0 = arith.constant 0 : i32
    %c0_i32_1 = arith.constant 0 : i32
    return %arg0, %c0_i32, %c0_i32_0 : i32, i32, i32
  }
  func.func @transform_1(%arg0: i32) -> (i32, i32, i32) {
    %c0_i32 = arith.constant 0 : i32
    %c0_i32_0 = arith.constant 0 : i32
    %c0_i32_1 = arith.constant 0 : i32
    return %arg0, %c0_i32, %c0_i32_0 : i32, i32, i32
  }
  func.func @transform_2(%arg0: i32) -> (i32, i32, i32) {
    %c0_i32 = arith.constant 0 : i32
    %c0_i32_0 = arith.constant 0 : i32
    %c0_i32_1 = arith.constant 0 : i32
    return %arg0, %c0_i32, %c0_i32_0 : i32, i32, i32
  }
  func.func @transform_3(%arg0: i32) -> (i32, i32, i32) {
    %c0_i32 = arith.constant 0 : i32
    %c0_i32_0 = arith.constant 0 : i32
    %c0_i32_1 = arith.constant 0 : i32
    return %arg0, %c0_i32, %c0_i32_0 : i32, i32, i32
  }
}

module attributes {stable_mosaic.version = 11 : i64} {
  func.func @_conv_head_kernel(%arg0: i32, %arg1: i32, %arg2: memref<1x50x50x128xbf16, #tpu.memory_space<vmem>>, %arg3: memref<3x384x16xbf16, #tpu.memory_space<vmem>>, %arg4: memref<1x16xf32, #tpu.memory_space<vmem>>, %arg5: memref<8x16xbf16, #tpu.memory_space<vmem>>, %arg6: memref<8x1xf32, #tpu.memory_space<vmem>>, %arg7: memref<1x8x384xf32, #tpu.memory_space<vmem>>) attributes {dimension_semantics = [#tpu.dimension_semantics<parallel>, #tpu.dimension_semantics<parallel>], iteration_bounds = array<i64: 2, 6>, scalar_prefetch = 0 : i64, scratch_operands = 0 : i64, tpu.core_type = #tpu.core_type<tc>, window_params = [{transform_indices = @transform_0, window_bounds = array<i64: 1, 50, 50, 128>}, {pipeline_mode = #tpu.pipeline_mode<synchronous>, transform_indices = @transform_1, window_bounds = array<i64: 3, 384, 16>}, {pipeline_mode = #tpu.pipeline_mode<synchronous>, transform_indices = @transform_2, window_bounds = array<i64: 1, 16>}, {pipeline_mode = #tpu.pipeline_mode<synchronous>, transform_indices = @transform_3, window_bounds = array<i64: 8, 16>}, {pipeline_mode = #tpu.pipeline_mode<synchronous>, transform_indices = @transform_4, window_bounds = array<i64: 8, 1>}, {transform_indices = @transform_5, window_bounds = array<i64: 1, 8, 384>}]} {
    %c8_i32 = arith.constant 8 : i32
    %0 = arith.muli %arg1, %c8_i32 : i32
    %1 = tpu.assume_multiple %0, 8 : i32
    %c0_i32 = arith.constant 0 : i32
    %2 = arith.addi %1, %c0_i32 : i32
    %c0 = arith.constant 0 : index
    %3 = arith.index_cast %2 : i32 to index
    %c0_0 = arith.constant 0 : index
    %c0_1 = arith.constant 0 : index
    %4 = vector.load %arg2[%c0, %3, %c0_0, %c0_1] : memref<1x50x50x128xbf16, #tpu.memory_space<vmem>>, vector<1x8x50x128xbf16>
    %5 = vector.shape_cast %4 : vector<1x8x50x128xbf16> to vector<8x50x128xbf16>
    %6 = vector.extract_strided_slice %5 {offsets = [0, 0, 0], sizes = [8, 48, 128], strides = [1, 1, 1]} : vector<8x50x128xbf16> to vector<8x48x128xbf16>
    %7 = vector.extract_strided_slice %5 {offsets = [0, 1, 0], sizes = [8, 48, 128], strides = [1, 1, 1]} : vector<8x50x128xbf16> to vector<8x48x128xbf16>
    %8 = vector.extract_strided_slice %5 {offsets = [0, 2, 0], sizes = [8, 48, 128], strides = [1, 1, 1]} : vector<8x50x128xbf16> to vector<8x48x128xbf16>
    %9 = tpu.concatenate %6, %7, %8 in 2 : vector<8x48x128xbf16>, vector<8x48x128xbf16>, vector<8x48x128xbf16> -> vector<8x48x384xbf16>
    %c0_2 = arith.constant 0 : index
    %c0_3 = arith.constant 0 : index
    %c0_4 = arith.constant 0 : index
    %10 = vector.load %arg3[%c0_2, %c0_3, %c0_4] : memref<3x384x16xbf16, #tpu.memory_space<vmem>>, vector<1x384x16xbf16>
    %11 = vector.shape_cast %10 : vector<1x384x16xbf16> to vector<384x16xbf16>
    %cst = arith.constant dense<0.000000e+00> : vector<8x48x16xf32>
    %12 = tpu.matmul %9, %11, %cst {dimension_numbers = #tpu.dot_dimension_numbers<[2], [0], [0, 1], [1], [0, 0, 0, 1, 1, 1], [], []>} : vector<8x48x384xbf16>, vector<384x16xbf16>, vector<8x48x16xf32> -> vector<8x48x16xf32>
    %c1_i32 = arith.constant 1 : i32
    %13 = arith.addi %1, %c1_i32 : i32
    %c0_5 = arith.constant 0 : index
    %14 = arith.index_cast %13 : i32 to index
    %c0_6 = arith.constant 0 : index
    %c0_7 = arith.constant 0 : index
    %15 = vector.load %arg2[%c0_5, %14, %c0_6, %c0_7] : memref<1x50x50x128xbf16, #tpu.memory_space<vmem>>, vector<1x8x50x128xbf16>
    %16 = vector.shape_cast %15 : vector<1x8x50x128xbf16> to vector<8x50x128xbf16>
    %17 = vector.extract_strided_slice %16 {offsets = [0, 0, 0], sizes = [8, 48, 128], strides = [1, 1, 1]} : vector<8x50x128xbf16> to vector<8x48x128xbf16>
    %18 = vector.extract_strided_slice %16 {offsets = [0, 1, 0], sizes = [8, 48, 128], strides = [1, 1, 1]} : vector<8x50x128xbf16> to vector<8x48x128xbf16>
    %19 = vector.extract_strided_slice %16 {offsets = [0, 2, 0], sizes = [8, 48, 128], strides = [1, 1, 1]} : vector<8x50x128xbf16> to vector<8x48x128xbf16>
    %20 = tpu.concatenate %17, %18, %19 in 2 : vector<8x48x128xbf16>, vector<8x48x128xbf16>, vector<8x48x128xbf16> -> vector<8x48x384xbf16>
    %c1 = arith.constant 1 : index
    %c0_8 = arith.constant 0 : index
    %c0_9 = arith.constant 0 : index
    %21 = vector.load %arg3[%c1, %c0_8, %c0_9] : memref<3x384x16xbf16, #tpu.memory_space<vmem>>, vector<1x384x16xbf16>
    %22 = vector.shape_cast %21 : vector<1x384x16xbf16> to vector<384x16xbf16>
    %cst_10 = arith.constant dense<0.000000e+00> : vector<8x48x16xf32>
    %23 = tpu.matmul %20, %22, %cst_10 {dimension_numbers = #tpu.dot_dimension_numbers<[2], [0], [0, 1], [1], [0, 0, 0, 1, 1, 1], [], []>} : vector<8x48x384xbf16>, vector<384x16xbf16>, vector<8x48x16xf32> -> vector<8x48x16xf32>
    %24 = arith.addf %12, %23 : vector<8x48x16xf32>
    %c2_i32 = arith.constant 2 : i32
    %25 = arith.addi %1, %c2_i32 : i32
    %c0_11 = arith.constant 0 : index
    %26 = arith.index_cast %25 : i32 to index
    %c0_12 = arith.constant 0 : index
    %c0_13 = arith.constant 0 : index
    %27 = vector.load %arg2[%c0_11, %26, %c0_12, %c0_13] : memref<1x50x50x128xbf16, #tpu.memory_space<vmem>>, vector<1x8x50x128xbf16>
    %28 = vector.shape_cast %27 : vector<1x8x50x128xbf16> to vector<8x50x128xbf16>
    %29 = vector.extract_strided_slice %28 {offsets = [0, 0, 0], sizes = [8, 48, 128], strides = [1, 1, 1]} : vector<8x50x128xbf16> to vector<8x48x128xbf16>
    %30 = vector.extract_strided_slice %28 {offsets = [0, 1, 0], sizes = [8, 48, 128], strides = [1, 1, 1]} : vector<8x50x128xbf16> to vector<8x48x128xbf16>
    %31 = vector.extract_strided_slice %28 {offsets = [0, 2, 0], sizes = [8, 48, 128], strides = [1, 1, 1]} : vector<8x50x128xbf16> to vector<8x48x128xbf16>
    %32 = tpu.concatenate %29, %30, %31 in 2 : vector<8x48x128xbf16>, vector<8x48x128xbf16>, vector<8x48x128xbf16> -> vector<8x48x384xbf16>
    %c2 = arith.constant 2 : index
    %c0_14 = arith.constant 0 : index
    %c0_15 = arith.constant 0 : index
    %33 = vector.load %arg3[%c2, %c0_14, %c0_15] : memref<3x384x16xbf16, #tpu.memory_space<vmem>>, vector<1x384x16xbf16>
    %34 = vector.shape_cast %33 : vector<1x384x16xbf16> to vector<384x16xbf16>
    %cst_16 = arith.constant dense<0.000000e+00> : vector<8x48x16xf32>
    %35 = tpu.matmul %32, %34, %cst_16 {dimension_numbers = #tpu.dot_dimension_numbers<[2], [0], [0, 1], [1], [0, 0, 0, 1, 1, 1], [], []>} : vector<8x48x384xbf16>, vector<384x16xbf16>, vector<8x48x16xf32> -> vector<8x48x16xf32>
    %36 = arith.addf %24, %35 : vector<8x48x16xf32>
    %c0_17 = arith.constant 0 : index
    %c0_18 = arith.constant 0 : index
    %37 = vector.load %arg4[%c0_17, %c0_18] : memref<1x16xf32, #tpu.memory_space<vmem>>, vector<1x16xf32>
    %38 = vector.shape_cast %37 : vector<1x16xf32> to vector<1x1x16xf32>
    %39 = vector.broadcast %38 : vector<1x1x16xf32> to vector<8x48x16xf32>
    %40 = arith.addf %36, %39 : vector<8x48x16xf32>
    %cst_19 = arith.constant 0.000000e+00 : f32
    %41 = vector.broadcast %cst_19 : f32 to vector<8x48x16xf32>
    %42 = arith.maximumf %40, %41 : vector<8x48x16xf32>
    %43 = vector.shape_cast %42 : vector<8x48x16xf32> to vector<384x16xf32>
    %44 = arith.truncf %43 : vector<384x16xf32> to vector<384x16xbf16>
    %c0_20 = arith.constant 0 : index
    %c0_21 = arith.constant 0 : index
    %45 = vector.load %arg5[%c0_20, %c0_21] : memref<8x16xbf16, #tpu.memory_space<vmem>>, vector<8x16xbf16>
    %cst_22 = arith.constant dense<0.000000e+00> : vector<8x384xf32>
    %46 = tpu.matmul %45, %44, %cst_22 {dimension_numbers = #tpu.dot_dimension_numbers<[1], [1], [0], [0], [0, 0, 1, 0], [], []>} : vector<8x16xbf16>, vector<384x16xbf16>, vector<8x384xf32> -> vector<8x384xf32>
    %c0_23 = arith.constant 0 : index
    %c0_24 = arith.constant 0 : index
    %47 = vector.load %arg6[%c0_23, %c0_24] : memref<8x1xf32, #tpu.memory_space<vmem>>, vector<8x1xf32>
    %48 = vector.broadcast %47 : vector<8x1xf32> to vector<8x384xf32>
    %49 = arith.addf %46, %48 : vector<8x384xf32>
    %cst_25 = arith.constant dense<0xFF800000> : vector<384xf32>
    %50 = vector.multi_reduction <maximumf>, %49, %cst_25 [0] : vector<8x384xf32> to vector<384xf32>
    %51 = vector.shape_cast %50 : vector<384xf32> to vector<1x384xf32>
    %52 = vector.broadcast %51 : vector<1x384xf32> to vector<8x384xf32>
    %53 = arith.subf %49, %52 : vector<8x384xf32>
    %54 = math.exp %53 : vector<8x384xf32>
    %cst_26 = arith.constant dense<0.000000e+00> : vector<384xf32>
    %55 = vector.multi_reduction <add>, %54, %cst_26 [0] : vector<8x384xf32> to vector<384xf32>
    %56 = vector.shape_cast %55 : vector<384xf32> to vector<1x384xf32>
    %57 = math.log %56 : vector<1x384xf32>
    %58 = vector.broadcast %57 : vector<1x384xf32> to vector<8x384xf32>
    %59 = arith.subf %53, %58 : vector<8x384xf32>
    %c0_27 = arith.constant 0 : index
    %c0_28 = arith.constant 0 : index
    %c0_29 = arith.constant 0 : index
    %60 = vector.load %arg7[%c0_27, %c0_28, %c0_29] : memref<1x8x384xf32, #tpu.memory_space<vmem>>, vector<1x8x384xf32>
    %61 = vector.shape_cast %60 : vector<1x8x384xf32> to vector<8x384xf32>
    %62 = vector.shape_cast %59 : vector<8x384xf32> to vector<1x8x384xf32>
    tpu.vector_store %arg7[%c0_27, %c0_28, %c0_29], %62 {strides = array<i32>} : memref<1x8x384xf32, #tpu.memory_space<vmem>>, vector<1x8x384xf32>,
    return
  }
  func.func @transform_0(%arg0: i32, %arg1: i32) -> (i32, i32, i32, i32) {
    %c0_i32 = arith.constant 0 : i32
    %c0_i32_0 = arith.constant 0 : i32
    %c0_i32_1 = arith.constant 0 : i32
    %c0_i32_2 = arith.constant 0 : i32
    return %arg0, %c0_i32, %c0_i32_0, %c0_i32_1 : i32, i32, i32, i32
  }
  func.func @transform_1(%arg0: i32, %arg1: i32) -> (i32, i32, i32) {
    %c0_i32 = arith.constant 0 : i32
    %c0_i32_0 = arith.constant 0 : i32
    %c0_i32_1 = arith.constant 0 : i32
    %c0_i32_2 = arith.constant 0 : i32
    return %c0_i32, %c0_i32_0, %c0_i32_1 : i32, i32, i32
  }
  func.func @transform_2(%arg0: i32, %arg1: i32) -> (i32, i32) {
    %c0_i32 = arith.constant 0 : i32
    %c0_i32_0 = arith.constant 0 : i32
    %c0_i32_1 = arith.constant 0 : i32
    return %c0_i32, %c0_i32_0 : i32, i32
  }
  func.func @transform_3(%arg0: i32, %arg1: i32) -> (i32, i32) {
    %c0_i32 = arith.constant 0 : i32
    %c0_i32_0 = arith.constant 0 : i32
    %c0_i32_1 = arith.constant 0 : i32
    return %c0_i32, %c0_i32_0 : i32, i32
  }
  func.func @transform_4(%arg0: i32, %arg1: i32) -> (i32, i32) {
    %c0_i32 = arith.constant 0 : i32
    %c0_i32_0 = arith.constant 0 : i32
    %c0_i32_1 = arith.constant 0 : i32
    return %c0_i32, %c0_i32_0 : i32, i32
  }
  func.func @transform_5(%arg0: i32, %arg1: i32) -> (i32, i32, i32) {
    %c0_i32 = arith.constant 0 : i32
    %c0_i32_0 = arith.constant 0 : i32
    return %arg0, %c0_i32, %arg1 : i32, i32, i32
  }
}

</mosaic_0001>

<llo_original>
// kernel: squeeze.6
$region0: #{squeeze.6}
  %s0 = inlined_call_operand.vmem [shape: f32[1,18,16], index: 0, kind: input, shape index: {}]
  %s1 = inlined_call_operand.vmem [shape: f32[2,3,3,16], index: 1, kind: output, shape index: {}]
  $region1: #{squeeze.6} parent=0
    #allocation0 [shape = 'u8[24576]{0}', space=vmem, size = 0x6000, scoped, tag = 'scoped mem for output reshape']
    %v2 = vld [vmem:[%s0] sm:$0xff]
    %vm3 = vcmask 130048
    %4 = vst.msk [vmem:[#allocation0] sm:$0x7] %vm3, %v2
    %s5 = scalar_lea.vmem [#allocation0], 5
    %6 = vst.msk [vmem:[%s5] sm:$0x38] %vm3, %v2
    %s7 = scalar_lea.vmem [#allocation0], 10
    %8 = vst.msk [vmem:[%s7] sm:$0xc0] %vm3, %v2
    %s9 = scalar_lea.vmem %s0, 8
    %v10 = vld [vmem:[%s9] sm:$0xff]
    %vm11 = vcmask 130048
    %s12 = scalar_lea.vmem [#allocation0], 18
    %13 = vst.msk [vmem:[%s12] ss:$6 sm:$0x3] %vm11, %v10
    %s14 = scalar_lea.vmem [#allocation0], 23
    %15 = vst.msk [vmem:[%s14] sm:$0xc] %vm11, %v10
    %s16 = scalar_lea.vmem [#allocation0], 28
    %17 = vst.msk [vmem:[%s16] sm:$0x70] %vm11, %v10
    %s18 = scalar_lea.vmem [#allocation0], 33
    %19 = vst.msk [vmem:[%s18] sm:$0x80] %vm11, %v10
    %s20 = scalar_lea.vmem %s0, 16
    %v21 = vld [vmem:[%s20] sm:$0x3]
    %vm22 = vcmask 130048
    %s23 = scalar_lea.vmem [#allocation0], 41
    %24 = vst.msk [vmem:[%s23] sm:$0x3] %vm22, %v21
    %s26 = sshllo.u32 0, 4
    %v28 = vld [vmem:[#allocation0] sm:%s26]
    %s29 = sshllo.u32 0, 4
    %30 = vst [vmem:[%s1] sm:%s29] %v28
    %s31 = scalar_lea.vmem [#allocation0], 8
    %v32 = vld [vmem:[%s31] sm:%s26]
    %s33 = sshllo.u32 0, 4
    %s34 = scalar_lea.vmem %s1, 4
    %35 = vst [vmem:[%s34] sm:%s33] %v32
    %s36 = scalar_lea.vmem [#allocation0], 16
    %v37 = vld [vmem:[%s36] sm:%s26]
    %s38 = sshllo.u32 0, 4
    %s39 = smul.addr 4, 2
    %s40 = scalar_lea.vmem %s1, %s39
    %41 = vst [vmem:[%s40] sm:%s38] %v37
    %s42 = scalar_lea.vmem [#allocation0], 24
    %v43 = vld [vmem:[%s42] sm:%s26]
    %s44 = sshllo.u32 0, 4
    %s45 = smul.addr 4, 3
    %s46 = scalar_lea.vmem %s1, %s45
    %47 = vst [vmem:[%s46] sm:%s44] %v43
    %s48 = scalar_lea.vmem [#allocation0], 32
    %v49 = vld [vmem:[%s48] sm:%s26]
    %s50 = sshllo.u32 0, 4
    %s51 = smul.addr 4, 4
    %s52 = scalar_lea.vmem %s1, %s51
    %53 = vst [vmem:[%s52] sm:%s50] %v49
    %s54 = scalar_lea.vmem [#allocation0], 40
    %v55 = vld [vmem:[%s54] sm:%s26]
    %s56 = sshllo.u32 0, 4
    %s57 = smul.addr 4, 5
    %s58 = scalar_lea.vmem %s1, %s57
    %59 = vst [vmem:[%s58] sm:%s56] %v55

// kernel: squeeze.7
$region0: #{squeeze.7}
  %s0 = inlined_call_operand.vmem [shape: f32[1,72,16], index: 0, kind: input, shape index: {}]
  %s1 = inlined_call_operand.vmem [shape: f32[2,6,6,16], index: 1, kind: output, shape index: {}]
  %v2 = vld [vmem:[%s0] sm:$0xff]
  %vm3 = vcmask 130048
  %4 = vst.msk [vmem:[%s1] sm:$0x3f] %vm3, %v2
  %s5 = scalar_lea.vmem %s1, 2
  %6 = vst.msk [vmem:[%s5] sm:$0xc0] %vm3, %v2
  %s7 = scalar_lea.vmem %s0, 8
  %v8 = vld [vmem:[%s7] sm:$0xff]
  %vm9 = vcmask 130048
  %s10 = scalar_lea.vmem %s1, 10
  %11 = vst.msk [vmem:[%s10] sm:$0xf] %vm9, %v8
  %s12 = scalar_lea.vmem %s1, 12
  %13 = vst.msk [vmem:[%s12] sm:$0xf0] %vm9, %v8
  %s14 = scalar_lea.vmem %s0, 16
  %v15 = vld [vmem:[%s14] sm:$0xff]
  %vm16 = vcmask 130048
  %s17 = scalar_lea.vmem %s1, 20
  %18 = vst.msk [vmem:[%s17] sm:$0x3] %vm16, %v15
  %s19 = scalar_lea.vmem %s1, 22
  %20 = vst.msk [vmem:[%s19] sm:$0xfc] %vm16, %v15
  %s21 = scalar_lea.vmem %s0, 24
  %v22 = vld [vmem:[%s21] sm:$0xff]
  %vm23 = vcmask 130048
  %s24 = scalar_lea.vmem %s1, 32
  %25 = vst.msk [vmem:[%s24] sm:$0x3f] %vm23, %v22
  %s26 = scalar_lea.vmem %s1, 34
  %27 = vst.msk [vmem:[%s26] sm:$0xc0] %vm23, %v22
  %s28 = scalar_lea.vmem %s0, 32
  %v29 = vld [vmem:[%s28] sm:$0xff]
  %vm30 = vcmask 130048
  %s31 = scalar_lea.vmem %s1, 42
  %32 = vst.msk [vmem:[%s31] sm:$0xf] %vm30, %v29
  %s33 = scalar_lea.vmem %s1, 44
  %34 = vst.msk [vmem:[%s33] sm:$0xf0] %vm30, %v29
  %s35 = scalar_lea.vmem %s0, 40
  %v36 = vld [vmem:[%s35] sm:$0xff]
  %vm37 = vcmask 130048
  %s38 = scalar_lea.vmem %s1, 52
  %39 = vst.msk [vmem:[%s38] sm:$0x3] %vm37, %v36
  %s40 = scalar_lea.vmem %s1, 54
  %41 = vst.msk [vmem:[%s40] sm:$0xfc] %vm37, %v36
  %s42 = scalar_lea.vmem %s0, 48
  %v43 = vld [vmem:[%s42] sm:$0xff]
  %vm44 = vcmask 130048
  %s45 = scalar_lea.vmem %s1, 64
  %46 = vst.msk [vmem:[%s45] sm:$0x3f] %vm44, %v43
  %s47 = scalar_lea.vmem %s1, 66
  %48 = vst.msk [vmem:[%s47] sm:$0xc0] %vm44, %v43
  %s49 = scalar_lea.vmem %s0, 56
  %v50 = vld [vmem:[%s49] sm:$0xff]
  %vm51 = vcmask 130048
  %s52 = scalar_lea.vmem %s1, 74
  %53 = vst.msk [vmem:[%s52] sm:$0xf] %vm51, %v50
  %s54 = scalar_lea.vmem %s1, 76
  %55 = vst.msk [vmem:[%s54] sm:$0xf0] %vm51, %v50
  %s56 = scalar_lea.vmem %s0, 64
  %v57 = vld [vmem:[%s56] sm:$0xff]
  %vm58 = vcmask 130048
  %s59 = scalar_lea.vmem %s1, 84
  %60 = vst.msk [vmem:[%s59] sm:$0x3] %vm58, %v57
  %s61 = scalar_lea.vmem %s1, 86
  %62 = vst.msk [vmem:[%s61] sm:$0xfc] %vm58, %v57

// kernel: semantic_decoder_forward.2
$region0: #{semantic_decoder_forward.2}
  #allocation0 [shape = 'u32[]', space=smem, size = 0x4, offset = 0x4, fixed_abs, tag = 'smem constant byte address 0x4 - core index']
  #allocation1 [shape = 'u32[144,128]{1,0:T(1,128)}', space=vmem, size = 0x12000, scoped, tag = 'internal scratch']
  %s0 = inlined_call_operand.vmem [shape: bf16[4,72,32], index: 0, kind: input, shape index: {}]
  %s1 = inlined_call_operand.vmem [shape: bf16[4,32,16], index: 1, kind: input, shape index: {}]
  %s2 = inlined_call_operand.vmem [shape: f32[4,1,16], index: 2, kind: input, shape index: {}]
  %s3 = inlined_call_operand.vmem [shape: f32[4,72,16], index: 3, kind: output, shape index: {}]
  %s4 = sld [smem:[#allocation0]]
  $region45: #{semantic_decoder_forward.2} parent=0
    _
  %s6 = ssub.s32 1, %s4
  %s7 = scalar_select 0, %s6, %s4
  loop: start=0, step=1, limit=6
  $region2: #{semantic_decoder_forward.2} parent=0 // loop_pre_header
    _
  $region3: #{semantic_decoder_forward.2} parent=0 // loop_header
    %s9 = sphi 0, %s13
    %p10 = scmp.ge.s32.totalorder %s9, 6
    %s19 = sphi 0, %s21
    %s22 = sphi 0, %s19
    %s23 = sphi 0, %s22
    %s39 = sphi 0, %s23
    %s45 = sphi 0, %s47
    %s48 = sphi 0, %s45
    %s49 = sphi 0, %s48
    %s65 = sphi 0, %s49
    %s71 = sphi 0, %s73
    %s74 = sphi 0, %s71
    %s75 = sphi 0, %s74
    %s91 = sphi 0, %s75
    %s97 = sphi 0, %s99
    %s100 = sphi 0, %s97
    %s101 = sphi 0, %s100
    %s117 = sphi 0, %s101
  $region4: #{semantic_decoder_forward.2} parent=0 // loop_header_branch
    %12 = sbr.rel (%p10) target = $region8
  $region5: #{semantic_decoder_forward.2} parent=0 // loop_body
    %s14 = ssub.s32 %s9, 1
    %s15 = ssub.s32 %s9, 2
    %s16 = sadd.s32 %s9, 1
    %s17 = ssub.s32 %s9, %s16
    %p18 = scmp.eq.s32.totalorder %s17, 0
    %s20 = sadd.s32 %s19, 1
    %s21 = scalar_select %p18, %s19, %s20
    %p24 = pneg %p18
    %p25 = scmp.eq.s32.totalorder %s9, 3
    %p26 = por %p24, %p25
    %p27 = scmp.ne.s32.totalorder %s19, %s22
    %p28 = scmp.eq.s32.totalorder %s9, 0
    %p29 = por %p27, %p28
    %p30 = scmp.ne.s32.totalorder %s19, %s22
    %p31 = scmp.eq.s32.totalorder %s14, 3
    %p32 = por %p30, %p31
    %p33 = scmp.ne.s32.totalorder %s22, %s23
    %p34 = scmp.eq.s32.totalorder %s14, 0
    %p35 = por %p33, %p34
    %p36 = scmp.ne.s32.totalorder %s22, %s23
    %p37 = scmp.eq.s32.totalorder %s15, 3
    %p38 = por %p36, %p37
    %p40 = scmp.ne.s32.totalorder %s23, %s39
    %p41 = scmp.eq.s32.totalorder %s15, 0
    %p42 = por %p40, %p41
    %s43 = ssub.s32 %s9, %s16
    %p44 = scmp.eq.s32.totalorder %s43, 0
    %s46 = sadd.s32 %s45, 1
    %s47 = scalar_select %p44, %s45, %s46
    %p50 = pneg %p44
    %p51 = scmp.eq.s32.totalorder %s9, 3
    %p52 = por %p50, %p51
    %p53 = scmp.ne.s32.totalorder %s45, %s48
    %p54 = scmp.eq.s32.totalorder %s9, 0
    %p55 = por %p53, %p54
    %p56 = scmp.ne.s32.totalorder %s45, %s48
    %p57 = scmp.eq.s32.totalorder %s14, 3
    %p58 = por %p56, %p57
    %p59 = scmp.ne.s32.totalorder %s48, %s49
    %p60 = scmp.eq.s32.totalorder %s14, 0
    %p61 = por %p59, %p60
    %p62 = scmp.ne.s32.totalorder %s48, %s49
    %p63 = scmp.eq.s32.totalorder %s15, 3
    %p64 = por %p62, %p63
    %p66 = scmp.ne.s32.totalorder %s49, %s65
    %p67 = scmp.eq.s32.totalorder %s15, 0
    %p68 = por %p66, %p67
    %s69 = ssub.s32 %s9, %s16
    %p70 = scmp.eq.s32.totalorder %s69, 0
    %s72 = sadd.s32 %s71, 1
    %s73 = scalar_select %p70, %s71, %s72
    %p76 = pneg %p70
    %p77 = scmp.eq.s32.totalorder %s9, 3
    %p78 = por %p76, %p77
    %p79 = scmp.ne.s32.totalorder %s71, %s74
    %p80 = scmp.eq.s32.totalorder %s9, 0
    %p81 = por %p79, %p80
    %p82 = scmp.ne.s32.totalorder %s71, %s74
    %p83 = scmp.eq.s32.totalorder %s14, 3
    %p84 = por %p82, %p83
    %p85 = scmp.ne.s32.totalorder %s74, %s75
    %p86 = scmp.eq.s32.totalorder %s14, 0
    %p87 = por %p85, %p86
    %p88 = scmp.ne.s32.totalorder %s74, %s75
    %p89 = scmp.eq.s32.totalorder %s15, 3
    %p90 = por %p88, %p89
    %p92 = scmp.ne.s32.totalorder %s75, %s91
    %p93 = scmp.eq.s32.totalorder %s15, 0
    %p94 = por %p92, %p93
    %s95 = ssub.s32 %s9, %s16
    %p96 = scmp.eq.s32.totalorder %s95, 0
    %s98 = sadd.s32 %s97, 1
    %s99 = scalar_select %p96, %s97, %s98
    %p102 = pneg %p96
    %p103 = scmp.eq.s32.totalorder %s9, 3
    %p104 = por %p102, %p103
    %p105 = scmp.ne.s32.totalorder %s97, %s100
    %p106 = scmp.eq.s32.totalorder %s9, 0
    %p107 = por %p105, %p106
    %p108 = scmp.ne.s32.totalorder %s97, %s100
    %p109 = scmp.eq.s32.totalorder %s14, 3
    %p110 = por %p108, %p109
    %p111 = scmp.ne.s32.totalorder %s100, %s101
    %p112 = scmp.eq.s32.totalorder %s14, 0
    %p113 = por %p111, %p112
    %p114 = scmp.ne.s32.totalorder %s100, %s101
    %p115 = scmp.eq.s32.totalorder %s15, 3
    %p116 = por %p114, %p115
    %p118 = scmp.ne.s32.totalorder %s101, %s117
    %p119 = scmp.eq.s32.totalorder %s15, 0
    %p120 = por %p118, %p119
    %p121 = scmp.le.s32.totalorder 1, %s9
    %p122 = scmp.lt.s32.totalorder %s9, 5
    %p123 = pnand %p121, %p122
    %p124 = pneg %p123
    // Predicated region
    $region9: #{semantic_decoder_forward.2} parent=5 // pred_check
      _
    $region10: #{semantic_decoder_forward.2} parent=5 // pred_check_branch
      %126 = sbr.rel (%p123) target = $region12
    $region11: #{semantic_decoder_forward.2} parent=5 // pred_region
      %s127 = ssub.s32 %s9, 1
    $region12: #{semantic_decoder_forward.2} parent=5 // pred_fallthru
      _
    %p128 = scmp.lt.s32.totalorder %s9, 4
    // Predicated region
    $region13: #{semantic_decoder_forward.2} parent=5 // pred_check
      %p129 = pneg %p128
    $region14: #{semantic_decoder_forward.2} parent=5 // pred_check_branch
      %131 = sbr.rel (%p129) target = $region16
    $region15: #{semantic_decoder_forward.2} parent=5 // pred_region
      // Predicated region
      $region17: #{semantic_decoder_forward.2} parent=15 // pred_check
        %p132 = pneg %p29
      $region18: #{semantic_decoder_forward.2} parent=15 // pred_check_branch
        %134 = sbr.rel (%p132) target = $region20
      $region19: #{semantic_decoder_forward.2} parent=15 // pred_region
        %p135 = scmp.lt.s32.totalorder %s9, 3
        %s136 = scalar_select %p135, %s9, 3
        %s137 = smul.addr %s136, 9
        %s138 = smul.addr %s137, 4
        %s139 = scalar_lea.vmem %s0, %s138
      $region20: #{semantic_decoder_forward.2} parent=15 // pred_fallthru
        _
      // Predicated region
      $region21: #{semantic_decoder_forward.2} parent=15 // pred_check
        %p140 = pneg %p55
      $region22: #{semantic_decoder_forward.2} parent=15 // pred_check_branch
        %142 = sbr.rel (%p140) target = $region24
      $region23: #{semantic_decoder_forward.2} parent=15 // pred_region
        %p143 = scmp.lt.s32.totalorder %s9, 3
        %s144 = scalar_select %p143, %s9, 3
        %s145 = smul.addr %s144, 4
        %s146 = smul.addr %s145, 4
        %s147 = scalar_lea.vmem %s1, %s146
      $region24: #{semantic_decoder_forward.2} parent=15 // pred_fallthru
        _
      // Predicated region
      $region25: #{semantic_decoder_forward.2} parent=15 // pred_check
        %p148 = pneg %p81
      $region26: #{semantic_decoder_forward.2} parent=15 // pred_check_branch
        %150 = sbr.rel (%p148) target = $region28
      $region27: #{semantic_decoder_forward.2} parent=15 // pred_region
        %p151 = scmp.lt.s32.totalorder %s9, 3
        %s152 = scalar_select %p151, %s9, 3
        %s153 = scalar_lea.vmem %s2, %s152
      $region28: #{semantic_decoder_forward.2} parent=15 // pred_fallthru
        _
    $region16: #{semantic_decoder_forward.2} parent=5 // pred_fallthru
      _
    %p154 = scmp.le.s32.totalorder 1, %s9
    %p155 = scmp.lt.s32.totalorder %s9, 5
    %p156 = pnand %p154, %p155
    %p157 = pneg %p156
    // Predicated region
    $region29: #{semantic_decoder_forward.2} parent=5 // pred_check
      _
    $region30: #{semantic_decoder_forward.2} parent=5 // pred_check_branch
      %159 = sbr.rel (%p156) target = $region32
    $region31: #{semantic_decoder_forward.2} parent=5 // pred_region
      %s160 = ssub.s32 %s9, 1
      %p161 = scmp.lt.s32.totalorder %s14, 3
      %s162 = scalar_select %p161, %s14, 3
      %s163 = smul.addr %s162, 9
      %s164 = smul.addr %s163, 4
      %s165 = scalar_lea.vmem %s0, %s164
      %p166 = pneg %p35
      %p167 = pneg %p32
      %p168 = scmp.lt.s32.totalorder %s14, 3
      %s169 = scalar_select %p168, %s14, 3
      %s170 = smul.addr %s169, 4
      %s171 = smul.addr %s170, 4
      %s172 = scalar_lea.vmem %s1, %s171
      %p173 = pneg %p61
      %p174 = pneg %p58
      %p175 = scmp.lt.s32.totalorder %s14, 3
      %s176 = scalar_select %p175, %s14, 3
      %s177 = scalar_lea.vmem %s2, %s176
      %p178 = pneg %p87
      %p179 = pneg %p84
      %p180 = pneg %p113
      %p181 = pneg %p110
      %p182 = scmp.lt.s32.totalorder %s14, 3
      %s183 = scalar_select %p182, %s14, 3
      %s184 = smul.addr %s183, 9
      %s185 = smul.addr %s184, 8
      %s186 = scalar_lea.vmem %s3, %s185
      %p187 = scmp.lt.s32.totalorder %s14, 3
      %s188 = scalar_select %p187, %s14, 3
      %s189 = smul.addr %s188, 9
      %s190 = smul.addr %s189, 4
      %s191 = scalar_lea.vmem %s0, %s190
      %p192 = scmp.lt.s32.totalorder %s14, 3
      %s193 = scalar_select %p192, %s14, 3
      %s194 = smul.addr %s193, 4
      %s195 = smul.addr %s194, 4
      %s196 = scalar_lea.vmem %s1, %s195
      %p197 = scmp.lt.s32.totalorder %s14, 3
      %s198 = scalar_select %p197, %s14, 3
      %s199 = scalar_lea.vmem %s2, %s198
      %p200 = scmp.lt.s32.totalorder %s14, 3
      %s201 = scalar_select %p200, %s14, 3
      %s202 = smul.addr %s201, 9
      %s203 = smul.addr %s202, 8
      %s204 = scalar_lea.vmem %s3, %s203
      %v206 = vld [vmem:[%s191] sm:$0xf]
      %v207 = vld [vmem:[%s191 + $0x4] sm:$0xf]
      %v208 = vld [vmem:[%s191 + $0x8] sm:$0xf]
      %v209 = vld [vmem:[%s191 + $0xc] sm:$0xf]
      %v210 = vld [vmem:[%s191 + $0x10] sm:$0xf]
      %v211 = vld [vmem:[%s191 + $0x14] sm:$0xf]
      %v212 = vld [vmem:[%s191 + $0x18] sm:$0xf]
      %v213 = vld [vmem:[%s191 + $0x1c] sm:$0xf]
      %v214 = vld [vmem:[%s191 + $0x20] sm:$0xf]
      %v215 = vld [vmem:[%s196] sm:$0xf]
      %v216 = vld [vmem:[%s196 + $0x4] sm:$0xf]
      %v217 = vld [vmem:[%s196 + $0x8] sm:$0xf]
      %v218 = vld [vmem:[%s196 + $0xc] sm:$0xf]
      %v219 = vld [vmem:[%s199] sm:$0x1]
      %v221 = vlaneseq
      %v222 = vshrl.u32 %v221, 7
      %v223 = vsub.s32 0, %v222
      %v224 = vrot.slane %v219, %v223
      %v235 = vunpack.c.l.b16 %v206
      %v236 = vunpack.c.l.b16 %v207
      %v237 = vunpack.c.l.b16 %v208
      %v238 = vunpack.c.l.b16 %v209
      %v239 = vunpack.c.l.b16 %v210
      %v240 = vunpack.c.l.b16 %v211
      %v241 = vunpack.c.l.b16 %v212
      %v242 = vunpack.c.l.b16 %v213
      %v243 = vunpack.c.l.b16 %v214
      %v244 = vpack.c.b16 %v236, %v235
      %v245 = vpack.c.b16 %v238, %v237
      %v246 = vpack.c.b16 %v240, %v239
      %v247 = vpack.c.b16 %v242, %v241
      %v248 = vpack.c.b16 %v243, %v243
      %v253 = vunpack.c.l.b16 %v215
      %v254 = vunpack.c.l.b16 %v216
      %v255 = vunpack.c.l.b16 %v217
      %v256 = vunpack.c.l.b16 %v218
      %v257 = vpack.c.b16 %v254, %v253
      %v258 = vpack.c.b16 %v256, %v255
      %vm261 = vcmask 261120
      %v263 = vsel %vm261, %v244, 0
      %v266 = vsel %vm261, %v245, 0
      %v269 = vsel %vm261, %v246, 0
      %v272 = vsel %vm261, %v247, 0
      %v275 = vsel %vm261, %v248, 0
      %277 = vmatprep.subr.bf16.mxu0 0
      %278 = vmatpush1.bf16.msra.mxu0 %v257
      %279 = vmatprep.subr.bf16.mxu0 0
      %280 = vmatpush1.bf16.msra.mxu0 %v258
      %281 = vmatprep.subr.bf16.mxu0 0
      %282 = vmatpush1.bf16.msra.mxu0 0
      %283 = vmatprep.subr.bf16.mxu0 0
      %284 = vmatpush1.bf16.msra.mxu0 0
      %285 = vmatprep.subr.bf16.mxu0 0
      %286 = vmatpush1.bf16.msra.mxu0 0
      %287 = vmatprep.subr.bf16.mxu0 0
      %288 = vmatpush1.bf16.msra.mxu0 0
      %289 = vmatprep.subr.bf16.mxu0 0
      %290 = vmatpush1.bf16.msra.mxu0 0
      %291 = vmatprep.subr.bf16.mxu0 0
      %292 = vmatpush1.bf16.msra.mxu0 0
      %293 = vmatprep.subr.bf16.mxu0 0
      %294 = vmatpush1.bf16.msra.mxu0 0
      %295 = vmatprep.subr.bf16.mxu0 0
      %296 = vmatpush1.bf16.msra.mxu0 0
      %297 = vmatprep.subr.bf16.mxu0 0
      %298 = vmatpush1.bf16.msra.mxu0 0
      %299 = vmatprep.subr.bf16.mxu0 0
      %300 = vmatpush1.bf16.msra.mxu0 0
      %301 = vmatprep.subr.bf16.mxu0 0
      %302 = vmatpush1.bf16.msra.mxu0 0
      %303 = vmatprep.subr.bf16.mxu0 0
      %304 = vmatpush1.bf16.msra.mxu0 0
      %305 = vmatprep.subr.bf16.mxu0 0
      %306 = vmatpush1.bf16.msra.mxu0 0
      %307 = vmatprep.subr.bf16.mxu0 0
      %308 = vmatpush1.bf16.msra.mxu0 0
      %309 = vmatprep.mubr.bf16.mxu0 0
      %310 = vmatmul.mubr.bf16.gmra.mrb[0].mxu0 %v263
      %v311 = vpop.f32.mrb[0].mxu0
      %v312 = vadd.f32 %v224, %v311
      %v313 = vpop.f32.mrb[0].mxu0
      %v314 = vpop.f32.mrb[0].mxu0
      %v315 = vadd.f32 %v224, %v314
      %v316 = vpop.f32.mrb[0].mxu0
      %317 = vmatprep.mubr.bf16.mxu0 0
      %318 = vmatmul.mubr.bf16.gmra.mrb[0].mxu0 %v266
      %v319 = vpop.f32.mrb[0].mxu0
      %v320 = vadd.f32 %v224, %v319
      %v321 = vpop.f32.mrb[0].mxu0
      %v322 = vpop.f32.mrb[0].mxu0
      %v323 = vadd.f32 %v224, %v322
      %v324 = vpop.f32.mrb[0].mxu0
      %325 = vmatprep.mubr.bf16.mxu0 0
      %326 = vmatmul.mubr.bf16.gmra.mrb[0].mxu0 %v269
      %v327 = vpop.f32.mrb[0].mxu0
      %v328 = vadd.f32 %v224, %v327
      %v329 = vpop.f32.mrb[0].mxu0
      %v330 = vpop.f32.mrb[0].mxu0
      %v331 = vadd.f32 %v224, %v330
      %v332 = vpop.f32.mrb[0].mxu0
      %333 = vmatprep.mubr.bf16.mxu0 0
      %334 = vmatmul.mubr.bf16.gmra.mrb[0].mxu0 %v272
      %v335 = vpop.f32.mrb[0].mxu0
      %v336 = vadd.f32 %v224, %v335
      %v337 = vpop.f32.mrb[0].mxu0
      %v338 = vpop.f32.mrb[0].mxu0
      %v339 = vadd.f32 %v224, %v338
      %v340 = vpop.f32.mrb[0].mxu0
      %341 = vmatprep.mubr.bf16.mxu0 0
      %342 = vmatmul.mubr.bf16.gmra.mrb[0].mxu0 %v275
      %v343 = vpop.f32.mrb[0].mxu0
      %v344 = vadd.f32 %v224, %v343
      %v345 = vpop.f32.mrb[0].mxu0
      %v346 = vpop.f32.mrb[0].mxu0
      %v347 = vpop.f32.mrb[0].mxu0
      %348 = vdwg.mxu0
      %v349 = vmax.f32 %v312, 0.0
      %v350 = vmax.f32 %v315, 0.0
      %v351 = vmax.f32 %v320, 0.0
      %v352 = vmax.f32 %v323, 0.0
      %v353 = vmax.f32 %v328, 0.0
      %v354 = vmax.f32 %v331, 0.0
      %v355 = vmax.f32 %v336, 0.0
      %v356 = vmax.f32 %v339, 0.0
      %v357 = vmax.f32 %v344, 0.0
      %vm358 = vcmask 130048
      %359 = vst.msk [vmem:[%s204] sm:$0xff] %vm358, %v349
      %360 = vst.msk [vmem:[%s204 + $0x8] sm:$0xff] %vm358, %v350
      %361 = vst.msk [vmem:[%s204 + $0x10] sm:$0xff] %vm358, %v351
      %362 = vst.msk [vmem:[%s204 + $0x18] sm:$0xff] %vm358, %v352
      %363 = vst.msk [vmem:[%s204 + $0x20] sm:$0xff] %vm358, %v353
      %364 = vst.msk [vmem:[%s204 + $0x28] sm:$0xff] %vm358, %v354
      %365 = vst.msk [vmem:[%s204 + $0x30] sm:$0xff] %vm358, %v355
      %366 = vst.msk [vmem:[%s204 + $0x38] sm:$0xff] %vm358, %v356
      %367 = vst.msk [vmem:[%s204 + $0x40] sm:$0xff] %vm358, %v357
      %p368 = scmp.lt.s32.totalorder %s14, 3
      %s369 = scalar_select %p368, %s14, 3
      %s370 = smul.addr %s369, 9
      %s371 = smul.addr %s370, 8
      %s372 = scalar_lea.vmem %s3, %s371
      // Predicated region
      $region33: #{semantic_decoder_forward.2} parent=31 // pred_check
        %p373 = pneg %p110
      $region34: #{semantic_decoder_forward.2} parent=31 // pred_check_branch
        %375 = sbr.rel (%p373) target = $region36
      $region35: #{semantic_decoder_forward.2} parent=31 // pred_region
        _
      $region36: #{semantic_decoder_forward.2} parent=31 // pred_fallthru
        _
    $region32: #{semantic_decoder_forward.2} parent=5 // pred_fallthru
      _
    %p376 = scmp.le.s32.totalorder 2, %s9
    // Predicated region
    $region37: #{semantic_decoder_forward.2} parent=5 // pred_check
      %p377 = pneg %p376
    $region38: #{semantic_decoder_forward.2} parent=5 // pred_check_branch
      %379 = sbr.rel (%p377) target = $region40
    $region39: #{semantic_decoder_forward.2} parent=5 // pred_region
      %s380 = ssub.s32 %s9, 2
      // Predicated region
      $region41: #{semantic_decoder_forward.2} parent=39 // pred_check
        %p381 = pneg %p116
      $region42: #{semantic_decoder_forward.2} parent=39 // pred_check_branch
        %383 = sbr.rel (%p381) target = $region44
      $region43: #{semantic_decoder_forward.2} parent=39 // pred_region
        %p384 = scmp.lt.s32.totalorder %s15, 3
        %s385 = scalar_select %p384, %s15, 3
        %s386 = smul.addr %s385, 9
        %s387 = smul.addr %s386, 8
        %s388 = scalar_lea.vmem %s3, %s387
      $region44: #{semantic_decoder_forward.2} parent=39 // pred_fallthru
        _
    $region40: #{semantic_decoder_forward.2} parent=5 // pred_fallthru
      _
  $region6: #{semantic_decoder_forward.2} parent=0 // loop_footer
    %s13 = sadd.s32 1, %s9
  $region7: #{semantic_decoder_forward.2} parent=0 // loop_footer_branch
    %8 = sbr.rel target = $region3
  $region8: #{semantic_decoder_forward.2} parent=0 // loop_exit
    _

// kernel: semantic_decoder_forward.3
$region0: #{semantic_decoder_forward.3}
  #allocation0 [shape = 'u32[]', space=smem, size = 0x4, offset = 0x4, fixed_abs, tag = 'smem constant byte address 0x4 - core index']
  #allocation1 [shape = 'u32[144,128]{1,0:T(1,128)}', space=vmem, size = 0x12000, scoped, tag = 'internal scratch']
  %s0 = inlined_call_operand.vmem [shape: bf16[2,50,50,128], index: 0, kind: input, shape index: {}]
  %s1 = inlined_call_operand.vmem [shape: bf16[3,384,16], index: 1, kind: input, shape index: {}]
  %s2 = inlined_call_operand.vmem [shape: f32[1,16], index: 2, kind: input, shape index: {}]
  %s3 = inlined_call_operand.vmem [shape: bf16[8,16], index: 3, kind: input, shape index: {}]
  %s4 = inlined_call_operand.vmem [shape: f32[8,1], index: 4, kind: input, shape index: {}]
  %s5 = inlined_call_operand.vmem [shape: f32[2,8,2304], index: 5, kind: output, shape index: {}]
  %s6 = sld [smem:[#allocation0]]
  $region53: #{semantic_decoder_forward.3} parent=0
    _
  %s8 = ssub.s32 1, %s6
  %s9 = scalar_select 0, %s8, %s6
  loop: start=0, step=1, limit=14
  $region2: #{semantic_decoder_forward.3} parent=0 // loop_pre_header
    _
  $region3: #{semantic_decoder_forward.3} parent=0 // loop_header
    %s11 = sphi 0, %s15
    %p12 = scmp.ge.s32.totalorder %s11, 14
    %s18 = sphi 0, %s30
    %s19 = sphi 0, %s26
    %s20 = sphi 0, %s18
    %s21 = sphi 0, %s19
    %s22 = sphi 0, %s20
    %s23 = sphi 0, %s21
    %s33 = sphi 0, %s35
    %s36 = sphi 0, %s33
    %s37 = sphi 0, %s36
    %s53 = sphi 0, %s37
    %s57 = sphi 0, %s57
    %s59 = sphi 0, %s57
    %s60 = sphi 0, %s59
    %s74 = sphi 0, %s60
    %s78 = sphi 0, %s78
    %s80 = sphi 0, %s78
    %s81 = sphi 0, %s80
    %s95 = sphi 0, %s81
    %s99 = sphi 0, %s99
    %s101 = sphi 0, %s99
    %s102 = sphi 0, %s101
    %s116 = sphi 0, %s102
    %s120 = sphi 0, %s120
    %s122 = sphi 0, %s120
    %s123 = sphi 0, %s122
    %s137 = sphi 0, %s123
    %s145 = sphi 0, %s147
    %s148 = sphi 0, %s145
    %s149 = sphi 0, %s148
    %s165 = sphi 0, %s149
  $region4: #{semantic_decoder_forward.3} parent=0 // loop_header_branch
    %14 = sbr.rel (%p12) target = $region8
  $region5: #{semantic_decoder_forward.3} parent=0 // loop_body
    %s16 = ssub.s32 %s11, 1
    %s17 = ssub.s32 %s11, 2
    %s24 = sadd.s32 1, %s19
    %p25 = scmp.ge.s32.totalorder %s24, 6
    %s26 = scalar_select %p25, 0, %s24
    %s27 = sadd.s32 1, %s18
    %s28 = scalar_select %p25, %s27, %s18
    %p29 = scmp.ge.s32.totalorder %s28, 2
    %s30 = scalar_select %p29, 0, %s28
    %s31 = ssub.s32 %s18, %s30
    %p32 = scmp.eq.s32.totalorder %s31, 0
    %s34 = sadd.s32 %s33, 1
    %s35 = scalar_select %p32, %s33, %s34
    %p38 = pneg %p32
    %p39 = scmp.eq.s32.totalorder %s11, 11
    %p40 = por %p38, %p39
    %p41 = scmp.ne.s32.totalorder %s33, %s36
    %p42 = scmp.eq.s32.totalorder %s11, 0
    %p43 = por %p41, %p42
    %p44 = scmp.ne.s32.totalorder %s33, %s36
    %p45 = scmp.eq.s32.totalorder %s16, 11
    %p46 = por %p44, %p45
    %p47 = scmp.ne.s32.totalorder %s36, %s37
    %p48 = scmp.eq.s32.totalorder %s16, 0
    %p49 = por %p47, %p48
    %p50 = scmp.ne.s32.totalorder %s36, %s37
    %p51 = scmp.eq.s32.totalorder %s17, 11
    %p52 = por %p50, %p51
    %p54 = scmp.ne.s32.totalorder %s37, %s53
    %p55 = scmp.eq.s32.totalorder %s17, 0
    %p56 = por %p54, %p55
    %s58 = sadd.s32 %s57, 1
    %p61 = scmp.eq.s32.totalorder %s11, 11
    %p62 = scmp.ne.s32.totalorder %s57, %s59
    %p63 = scmp.eq.s32.totalorder %s11, 0
    %p64 = por %p62, %p63
    %p65 = scmp.ne.s32.totalorder %s57, %s59
    %p66 = scmp.eq.s32.totalorder %s16, 11
    %p67 = por %p65, %p66
    %p68 = scmp.ne.s32.totalorder %s59, %s60
    %p69 = scmp.eq.s32.totalorder %s16, 0
    %p70 = por %p68, %p69
    %p71 = scmp.ne.s32.totalorder %s59, %s60
    %p72 = scmp.eq.s32.totalorder %s17, 11
    %p73 = por %p71, %p72
    %p75 = scmp.ne.s32.totalorder %s60, %s74
    %p76 = scmp.eq.s32.totalorder %s17, 0
    %p77 = por %p75, %p76
    %s79 = sadd.s32 %s78, 1
    %p82 = scmp.eq.s32.totalorder %s11, 11
    %p83 = scmp.ne.s32.totalorder %s78, %s80
    %p84 = scmp.eq.s32.totalorder %s11, 0
    %p85 = por %p83, %p84
    %p86 = scmp.ne.s32.totalorder %s78, %s80
    %p87 = scmp.eq.s32.totalorder %s16, 11
    %p88 = por %p86, %p87
    %p89 = scmp.ne.s32.totalorder %s80, %s81
    %p90 = scmp.eq.s32.totalorder %s16, 0
    %p91 = por %p89, %p90
    %p92 = scmp.ne.s32.totalorder %s80, %s81
    %p93 = scmp.eq.s32.totalorder %s17, 11
    %p94 = por %p92, %p93
    %p96 = scmp.ne.s32.totalorder %s81, %s95
    %p97 = scmp.eq.s32.totalorder %s17, 0
    %p98 = por %p96, %p97
    %s100 = sadd.s32 %s99, 1
    %p103 = scmp.eq.s32.totalorder %s11, 11
    %p104 = scmp.ne.s32.totalorder %s99, %s101
    %p105 = scmp.eq.s32.totalorder %s11, 0
    %p106 = por %p104, %p105
    %p107 = scmp.ne.s32.totalorder %s99, %s101
    %p108 = scmp.eq.s32.totalorder %s16, 11
    %p109 = por %p107, %p108
    %p110 = scmp.ne.s32.totalorder %s101, %s102
    %p111 = scmp.eq.s32.totalorder %s16, 0
    %p112 = por %p110, %p111
    %p113 = scmp.ne.s32.totalorder %s101, %s102
    %p114 = scmp.eq.s32.totalorder %s17, 11
    %p115 = por %p113, %p114
    %p117 = scmp.ne.s32.totalorder %s102, %s116
    %p118 = scmp.eq.s32.totalorder %s17, 0
    %p119 = por %p117, %p118
    %s121 = sadd.s32 %s120, 1
    %p124 = scmp.eq.s32.totalorder %s11, 11
    %p125 = scmp.ne.s32.totalorder %s120, %s122
    %p126 = scmp.eq.s32.totalorder %s11, 0
    %p127 = por %p125, %p126
    %p128 = scmp.ne.s32.totalorder %s120, %s122
    %p129 = scmp.eq.s32.totalorder %s16, 11
    %p130 = por %p128, %p129
    %p131 = scmp.ne.s32.totalorder %s122, %s123
    %p132 = scmp.eq.s32.totalorder %s16, 0
    %p133 = por %p131, %p132
    %p134 = scmp.ne.s32.totalorder %s122, %s123
    %p135 = scmp.eq.s32.totalorder %s17, 11
    %p136 = por %p134, %p135
    %p138 = scmp.ne.s32.totalorder %s123, %s137
    %p139 = scmp.eq.s32.totalorder %s17, 0
    %p140 = por %p138, %p139
    %s141 = ssub.s32 %s18, %s30
    %s142 = ssub.s32 %s19, %s26
    %s143 = sor.u32 %s141, %s142
    %p144 = scmp.eq.s32.totalorder %s143, 0
    %s146 = sadd.s32 %s145, 1
    %s147 = scalar_select %p144, %s145, %s146
    %p150 = pneg %p144
    %p151 = scmp.eq.s32.totalorder %s11, 11
    %p152 = por %p150, %p151
    %p153 = scmp.ne.s32.totalorder %s145, %s148
    %p154 = scmp.eq.s32.totalorder %s11, 0
    %p155 = por %p153, %p154
    %p156 = scmp.ne.s32.totalorder %s145, %s148
    %p157 = scmp.eq.s32.totalorder %s16, 11
    %p158 = por %p156, %p157
    %p159 = scmp.ne.s32.totalorder %s148, %s149
    %p160 = scmp.eq.s32.totalorder %s16, 0
    %p161 = por %p159, %p160
    %p162 = scmp.ne.s32.totalorder %s148, %s149
    %p163 = scmp.eq.s32.totalorder %s17, 11
    %p164 = por %p162, %p163
    %p166 = scmp.ne.s32.totalorder %s149, %s165
    %p167 = scmp.eq.s32.totalorder %s17, 0
    %p168 = por %p166, %p167
    %p169 = scmp.le.s32.totalorder 1, %s11
    %p170 = scmp.lt.s32.totalorder %s11, 13
    %p171 = pnand %p169, %p170
    %p172 = pneg %p171
    // Predicated region
    $region9: #{semantic_decoder_forward.3} parent=5 // pred_check
      _
    $region10: #{semantic_decoder_forward.3} parent=5 // pred_check_branch
      %174 = sbr.rel (%p171) target = $region12
    $region11: #{semantic_decoder_forward.3} parent=5 // pred_region
      %s175 = ssub.s32 %s11, 1
      // Predicated region
      $region13: #{semantic_decoder_forward.3} parent=11 // pred_check
        %p176 = pneg %p70
      $region14: #{semantic_decoder_forward.3} parent=11 // pred_check_branch
        %178 = sbr.rel (%p176) target = $region16
      $region15: #{semantic_decoder_forward.3} parent=11 // pred_region
        _
      $region16: #{semantic_decoder_forward.3} parent=11 // pred_fallthru
        _
      // Predicated region
      $region17: #{semantic_decoder_forward.3} parent=11 // pred_check
        %p179 = pneg %p91
      $region18: #{semantic_decoder_forward.3} parent=11 // pred_check_branch
        %181 = sbr.rel (%p179) target = $region20
      $region19: #{semantic_decoder_forward.3} parent=11 // pred_region
        _
      $region20: #{semantic_decoder_forward.3} parent=11 // pred_fallthru
        _
      // Predicated region
      $region21: #{semantic_decoder_forward.3} parent=11 // pred_check
        %p182 = pneg %p112
      $region22: #{semantic_decoder_forward.3} parent=11 // pred_check_branch
        %184 = sbr.rel (%p182) target = $region24
      $region23: #{semantic_decoder_forward.3} parent=11 // pred_region
        _
      $region24: #{semantic_decoder_forward.3} parent=11 // pred_fallthru
        _
      // Predicated region
      $region25: #{semantic_decoder_forward.3} parent=11 // pred_check
        %p185 = pneg %p133
      $region26: #{semantic_decoder_forward.3} parent=11 // pred_check_branch
        %187 = sbr.rel (%p185) target = $region28
      $region27: #{semantic_decoder_forward.3} parent=11 // pred_region
        _
      $region28: #{semantic_decoder_forward.3} parent=11 // pred_fallthru
        _
    $region12: #{semantic_decoder_forward.3} parent=5 // pred_fallthru
      _
    %p188 = scmp.lt.s32.totalorder %s11, 12
    // Predicated region
    $region29: #{semantic_decoder_forward.3} parent=5 // pred_check
      %p189 = pneg %p188
    $region30: #{semantic_decoder_forward.3} parent=5 // pred_check_branch
      %191 = sbr.rel (%p189) target = $region32
    $region31: #{semantic_decoder_forward.3} parent=5 // pred_region
      // Predicated region
      $region33: #{semantic_decoder_forward.3} parent=31 // pred_check
        %p192 = pneg %p43
      $region34: #{semantic_decoder_forward.3} parent=31 // pred_check_branch
        %194 = sbr.rel (%p192) target = $region36
      $region35: #{semantic_decoder_forward.3} parent=31 // pred_region
        %p195 = scmp.lt.s32.totalorder %s18, 1
        %s196 = scalar_select %p195, %s18, 1
        %s197 = smul.addr %s196, 350
        %s198 = smul.addr %s197, 4
        %s199 = scalar_lea.vmem %s0, %s198
      $region36: #{semantic_decoder_forward.3} parent=31 // pred_fallthru
        _
    $region32: #{semantic_decoder_forward.3} parent=5 // pred_fallthru
      _
    %p200 = scmp.le.s32.totalorder 1, %s11
    %p201 = scmp.lt.s32.totalorder %s11, 13
    %p202 = pnand %p200, %p201
    %p203 = pneg %p202
    // Predicated region
    $region37: #{semantic_decoder_forward.3} parent=5 // pred_check
      _
    $region38: #{semantic_decoder_forward.3} parent=5 // pred_check_branch
      %205 = sbr.rel (%p202) target = $region40
    $region39: #{semantic_decoder_forward.3} parent=5 // pred_region
      %s206 = ssub.s32 %s11, 1
      %p207 = scmp.lt.s32.totalorder %s20, 1
      %s208 = scalar_select %p207, %s20, 1
      %s209 = smul.addr %s208, 350
      %s210 = smul.addr %s209, 4
      %s211 = scalar_lea.vmem %s0, %s210
      %p212 = pneg %p49
      %p213 = pneg %p46
      %p214 = pneg %p70
      %p215 = pneg %p67
      %p216 = pneg %p91
      %p217 = pneg %p88
      %p218 = pneg %p112
      %p219 = pneg %p109
      %p220 = pneg %p133
      %p221 = pneg %p130
      %p222 = pneg %p161
      %p223 = pneg %p158
      %s224 = smul.u32 3, %s21
      %p225 = scmp.lt.s32.totalorder %s20, 1
      %s226 = scalar_select %p225, %s20, 1
      %p227 = scmp.lt.s32.totalorder %s224, 17
      %s228 = scalar_select %p227, %s224, 17
      %s229 = smul.addr %s226, 18
      %s230 = sadd.s32 %s228, %s229
      %s231 = smul.addr %s230, 8
      %s232 = scalar_lea.vmem %s5, %s231
      %p233 = scmp.lt.s32.totalorder %s20, 1
      %s234 = scalar_select %p233, %s20, 1
      %s235 = smul.addr %s234, 350
      %s236 = smul.addr %s235, 4
      %s237 = scalar_lea.vmem %s0, %s236
      %s238 = smul.u32 3, %s21
      %p239 = scmp.lt.s32.totalorder %s20, 1
      %s240 = scalar_select %p239, %s20, 1
      %p241 = scmp.lt.s32.totalorder %s238, 17
      %s242 = scalar_select %p241, %s238, 17
      %s243 = smul.addr %s240, 18
      %s244 = sadd.s32 %s242, %s243
      %s245 = smul.addr %s244, 8
      %s246 = scalar_lea.vmem %s5, %s245
      %s247 = smul.u32 3, %s21
      %s249 = smul.u32 %s21, 8
      %s250 = smul.u32 %s249, 7
      %s251 = smul.addr %s250, 4
      %s252 = scalar_lea.vmem %s237, %s251
      %v253 = vld [vmem:[%s252] sm:$0xf]
      %v254 = vld [vmem:[%s252 + $0x4] sm:$0xf]
      %v255 = vld [vmem:[%s252 + $0x8] sm:$0xf]
      %v256 = vld [vmem:[%s252 + $0xc] sm:$0xf]
      %v257 = vld [vmem:[%s252 + $0x10] sm:$0xf]
      %v258 = vld [vmem:[%s252 + $0x14] sm:$0xf]
      %v259 = vld [vmem:[%s252 + $0x18] sm:$0x1]
      %v260 = vld [vmem:[%s252 + $0x1c] sm:$0xf]
      %v261 = vld [vmem:[%s252 + $0x20] sm:$0xf]
      %v262 = vld [vmem:[%s252 + $0x24] sm:$0xf]
      %v263 = vld [vmem:[%s252 + $0x28] sm:$0xf]
      %v264 = vld [vmem:[%s252 + $0x2c] sm:$0xf]
      %v265 = vld [vmem:[%s252 + $0x30] sm:$0xf]
      %v266 = vld [vmem:[%s252 + $0x34] sm:$0x1]
      %v267 = vld [vmem:[%s252 + $0x38] sm:$0xf]
      %v268 = vld [vmem:[%s252 + $0x3c] sm:$0xf]
      %v269 = vld [vmem:[%s252 + $0x40] sm:$0xf]
      %v270 = vld [vmem:[%s252 + $0x44] sm:$0xf]
      %v271 = vld [vmem:[%s252 + $0x48] sm:$0xf]
      %v272 = vld [vmem:[%s252 + $0x4c] sm:$0xf]
      %v273 = vld [vmem:[%s252 + $0x50] sm:$0x1]
      %v274 = vld [vmem:[%s252 + $0x54] sm:$0xf]
      %v275 = vld [vmem:[%s252 + $0x58] sm:$0xf]
      %v276 = vld [vmem:[%s252 + $0x5c] sm:$0xf]
      %v277 = vld [vmem:[%s252 + $0x60] sm:$0xf]
      %v278 = vld [vmem:[%s252 + $0x64] sm:$0xf]
      %v279 = vld [vmem:[%s252 + $0x68] sm:$0xf]
      %v280 = vld [vmem:[%s252 + $0x6c] sm:$0x1]
      %v281 = vld [vmem:[%s252 + $0x70] sm:$0xf]
      %v282 = vld [vmem:[%s252 + $0x74] sm:$0xf]
      %v283 = vld [vmem:[%s252 + $0x78] sm:$0xf]
      %v284 = vld [vmem:[%s252 + $0x7c] sm:$0xf]
      %v285 = vld [vmem:[%s252 + $0x80] sm:$0xf]
      %v286 = vld [vmem:[%s252 + $0x84] sm:$0xf]
      %v287 = vld [vmem:[%s252 + $0x88] sm:$0x1]
      %v288 = vld [vmem:[%s252 + $0x8c] sm:$0xf]
      %v289 = vld [vmem:[%s252 + $0x90] sm:$0xf]
      %v290 = vld [vmem:[%s252 + $0x94] sm:$0xf]
      %v291 = vld [vmem:[%s252 + $0x98] sm:$0xf]
      %v292 = vld [vmem:[%s252 + $0x9c] sm:$0xf]
      %v293 = vld [vmem:[%s252 + $0xa0] sm:$0xf]
      %v294 = vld [vmem:[%s252 + $0xa4] sm:$0x1]
      %v295 = vld [vmem:[%s252 + $0xa8] sm:$0xf]
      %v296 = vld [vmem:[%s252 + $0xac] sm:$0xf]
      %v297 = vld [vmem:[%s252 + $0xb0] sm:$0xf]
      %v298 = vld [vmem:[%s252 + $0xb4] sm:$0xf]
      %v299 = vld [vmem:[%s252 + $0xb8] sm:$0xf]
      %v300 = vld [vmem:[%s252 + $0xbc] sm:$0xf]
      %v301 = vld [vmem:[%s252 + $0xc0] sm:$0x1]
      %v302 = vld [vmem:[%s252 + $0xc4] sm:$0xf]
      %v303 = vld [vmem:[%s252 + $0xc8] sm:$0xf]
      %v304 = vld [vmem:[%s252 + $0xcc] sm:$0xf]
      %v305 = vld [vmem:[%s252 + $0xd0] sm:$0xf]
      %v306 = vld [vmem:[%s252 + $0xd4] sm:$0xf]
      %v307 = vld [vmem:[%s252 + $0xd8] sm:$0xf]
      %v308 = vld [vmem:[%s252 + $0xdc] sm:$0x1]
      %v357 = vunpack.c.l.b16 %v253
      %v358 = vunpack.c.l.b16 %v254
      %v359 = vunpack.c.l.b16 %v255
      %v360 = vunpack.c.l.b16 %v256
      %v361 = vunpack.c.l.b16 %v257
      %v362 = vunpack.c.l.b16 %v258
      %v363 = vunpack.c.l.b16 %v260
      %v364 = vunpack.c.l.b16 %v261
      %v365 = vunpack.c.l.b16 %v262
      %v366 = vunpack.c.l.b16 %v263
      %v367 = vunpack.c.l.b16 %v264
      %v368 = vunpack.c.l.b16 %v265
      %v369 = vunpack.c.l.b16 %v267
      %v370 = vunpack.c.l.b16 %v268
      %v371 = vunpack.c.l.b16 %v269
      %v372 = vunpack.c.l.b16 %v270
      %v373 = vunpack.c.l.b16 %v271
      %v374 = vunpack.c.l.b16 %v272
      %v375 = vunpack.c.l.b16 %v274
      %v376 = vunpack.c.l.b16 %v275
      %v377 = vunpack.c.l.b16 %v276
      %v378 = vunpack.c.l.b16 %v277
      %v379 = vunpack.c.l.b16 %v278
      %v380 = vunpack.c.l.b16 %v279
      %v381 = vunpack.c.l.b16 %v281
      %v382 = vunpack.c.l.b16 %v282
      %v383 = vunpack.c.l.b16 %v283
      %v384 = vunpack.c.l.b16 %v284
      %v385 = vunpack.c.l.b16 %v285
      %v386 = vunpack.c.l.b16 %v286
      %v387 = vunpack.c.l.b16 %v288
      %v388 = vunpack.c.l.b16 %v289
      %v389 = vunpack.c.l.b16 %v290
      %v390 = vunpack.c.l.b16 %v291
      %v391 = vunpack.c.l.b16 %v292
      %v392 = vunpack.c.l.b16 %v293
      %v393 = vunpack.c.l.b16 %v295
      %v394 = vunpack.c.l.b16 %v296
      %v395 = vunpack.c.l.b16 %v297
      %v396 = vunpack.c.l.b16 %v298
      %v397 = vunpack.c.l.b16 %v299
      %v398 = vunpack.c.l.b16 %v300
      %v399 = vunpack.c.l.b16 %v302
      %v400 = vunpack.c.l.b16 %v303
      %v401 = vunpack.c.l.b16 %v304
      %v402 = vunpack.c.l.b16 %v305
      %v403 = vunpack.c.l.b16 %v306
      %v404 = vunpack.c.l.b16 %v307
      %v405 = vpack.c.b16 %v358, %v357
      %v406 = vpack.c.b16 %v360, %v359
      %v407 = vpack.c.b16 %v362, %v361
      %v408 = vpack.c.b16 %v364, %v363
      %v409 = vpack.c.b16 %v366, %v365
      %v410 = vpack.c.b16 %v368, %v367
      %v411 = vpack.c.b16 %v370, %v369
      %v412 = vpack.c.b16 %v372, %v371
      %v413 = vpack.c.b16 %v374, %v373
      %v414 = vpack.c.b16 %v376, %v375
      %v415 = vpack.c.b16 %v378, %v377
      %v416 = vpack.c.b16 %v380, %v379
      %v417 = vpack.c.b16 %v382, %v381
      %v418 = vpack.c.b16 %v384, %v383
      %v419 = vpack.c.b16 %v386, %v385
      %v420 = vpack.c.b16 %v388, %v387
      %v421 = vpack.c.b16 %v390, %v389
      %v422 = vpack.c.b16 %v392, %v391
      %v423 = vpack.c.b16 %v394, %v393
      %v424 = vpack.c.b16 %v396, %v395
      %v425 = vpack.c.b16 %v398, %v397
      %v426 = vpack.c.b16 %v400, %v399
      %v427 = vpack.c.b16 %v402, %v401
      %v428 = vpack.c.b16 %v404, %v403
      %v461 = vunpack.c.l.b16 %v259
      %v462 = vunpack.c.l.b16 %v266
      %v463 = vunpack.c.l.b16 %v273
      %v464 = vunpack.c.l.b16 %v280
      %v465 = vunpack.c.l.b16 %v287
      %v466 = vunpack.c.l.b16 %v294
      %v467 = vunpack.c.l.b16 %v301
      %v468 = vunpack.c.l.b16 %v308
      %v469 = vpack.c.b16 %v461, %v461
      %v470 = vpack.c.b16 %v462, %v462
      %v471 = vpack.c.b16 %v463, %v463
      %v472 = vpack.c.b16 %v464, %v464
      %v473 = vpack.c.b16 %v465, %v465
      %v474 = vpack.c.b16 %v466, %v466
      %v475 = vpack.c.b16 %v467, %v467
      %v476 = vpack.c.b16 %v468, %v468
      %vm477 = vsmask.f32 7424
      %v479 = vshrl.u32 %v405, 16
      %v481 = vshll.u32 %v405, 16
      %v483 = vrot.slane %v481, 1
      %v484 = vor.u32 %v479, %v483
      %v486 = vshll.u32 %v406, 16
      %v488 = vrot.slane %v486, 1
      %v489 = vsel %vm477, %v484, %v488
      %v490 = vshrl.u32 %v406, 16
      %v492 = vor.u32 %v490, %v488
      %v494 = vshll.u32 %v407, 16
      %v496 = vrot.slane %v494, 1
      %v497 = vsel %vm477, %v492, %v496
      %v498 = vshrl.u32 %v407, 16
      %v500 = vor.u32 %v498, %v496
      %v502 = vshll.u32 %v469, 16
      %v504 = vrot.slane %v502, 1
      %v505 = vsel %vm477, %v500, %v504
      %v507 = vshrl.u32 %v408, 16
      %v509 = vshll.u32 %v408, 16
      %v511 = vrot.slane %v509, 1
      %v512 = vor.u32 %v507, %v511
      %v514 = vshll.u32 %v409, 16
      %v516 = vrot.slane %v514, 1
      %v517 = vsel %vm477, %v512, %v516
      %v518 = vshrl.u32 %v409, 16
      %v520 = vor.u32 %v518, %v516
      %v522 = vshll.u32 %v410, 16
      %v524 = vrot.slane %v522, 1
      %v525 = vsel %vm477, %v520, %v524
      %v526 = vshrl.u32 %v410, 16
      %v528 = vor.u32 %v526, %v524
      %v530 = vshll.u32 %v470, 16
      %v532 = vrot.slane %v530, 1
      %v533 = vsel %vm477, %v528, %v532
      %v535 = vshrl.u32 %v411, 16
      %v537 = vshll.u32 %v411, 16
      %v539 = vrot.slane %v537, 1
      %v540 = vor.u32 %v535, %v539
      %v542 = vshll.u32 %v412, 16
      %v544 = vrot.slane %v542, 1
      %v545 = vsel %vm477, %v540, %v544
      %v546 = vshrl.u32 %v412, 16
      %v548 = vor.u32 %v546, %v544
      %v550 = vshll.u32 %v413, 16
      %v552 = vrot.slane %v550, 1
      %v553 = vsel %vm477, %v548, %v552
      %v554 = vshrl.u32 %v413, 16
      %v556 = vor.u32 %v554, %v552
      %v558 = vshll.u32 %v471, 16
      %v560 = vrot.slane %v558, 1
      %v561 = vsel %vm477, %v556, %v560
      %v563 = vshrl.u32 %v414, 16
      %v565 = vshll.u32 %v414, 16
      %v567 = vrot.slane %v565, 1
      %v568 = vor.u32 %v563, %v567
      %v570 = vshll.u32 %v415, 16
      %v572 = vrot.slane %v570, 1
      %v573 = vsel %vm477, %v568, %v572
      %v574 = vshrl.u32 %v415, 16
      %v576 = vor.u32 %v574, %v572
      %v578 = vshll.u32 %v416, 16
      %v580 = vrot.slane %v578, 1
      %v581 = vsel %vm477, %v576, %v580
      %v582 = vshrl.u32 %v416, 16
      %v584 = vor.u32 %v582, %v580
      %v586 = vshll.u32 %v472, 16
      %v588 = vrot.slane %v586, 1
      %v589 = vsel %vm477, %v584, %v588
      %v591 = vshrl.u32 %v417, 16
      %v593 = vshll.u32 %v417, 16
      %v595 = vrot.slane %v593, 1
      %v596 = vor.u32 %v591, %v595
      %v598 = vshll.u32 %v418, 16
      %v600 = vrot.slane %v598, 1
      %v601 = vsel %vm477, %v596, %v600
      %v602 = vshrl.u32 %v418, 16
      %v604 = vor.u32 %v602, %v600
      %v606 = vshll.u32 %v419, 16
      %v608 = vrot.slane %v606, 1
      %v609 = vsel %vm477, %v604, %v608
      %v610 = vshrl.u32 %v419, 16
      %v612 = vor.u32 %v610, %v608
      %v614 = vshll.u32 %v473, 16
      %v616 = vrot.slane %v614, 1
      %v617 = vsel %vm477, %v612, %v616
      %v619 = vshrl.u32 %v420, 16
      %v621 = vshll.u32 %v420, 16
      %v623 = vrot.slane %v621, 1
      %v624 = vor.u32 %v619, %v623
      %v626 = vshll.u32 %v421, 16
      %v628 = vrot.slane %v626, 1
      %v629 = vsel %vm477, %v624, %v628
      %v630 = vshrl.u32 %v421, 16
      %v632 = vor.u32 %v630, %v628
      %v634 = vshll.u32 %v422, 16
      %v636 = vrot.slane %v634, 1
      %v637 = vsel %vm477, %v632, %v636
      %v638 = vshrl.u32 %v422, 16
      %v640 = vor.u32 %v638, %v636
      %v642 = vshll.u32 %v474, 16
      %v644 = vrot.slane %v642, 1
      %v645 = vsel %vm477, %v640, %v644
      %v647 = vshrl.u32 %v423, 16
      %v649 = vshll.u32 %v423, 16
      %v651 = vrot.slane %v649, 1
      %v652 = vor.u32 %v647, %v651
      %v654 = vshll.u32 %v424, 16
      %v656 = vrot.slane %v654, 1
      %v657 = vsel %vm477, %v652, %v656
      %v658 = vshrl.u32 %v424, 16
      %v660 = vor.u32 %v658, %v656
      %v662 = vshll.u32 %v425, 16
      %v664 = vrot.slane %v662, 1
      %v665 = vsel %vm477, %v660, %v664
      %v666 = vshrl.u32 %v425, 16
      %v668 = vor.u32 %v666, %v664
      %v670 = vshll.u32 %v475, 16
      %v672 = vrot.slane %v670, 1
      %v673 = vsel %vm477, %v668, %v672
      %v675 = vshrl.u32 %v426, 16
      %v677 = vshll.u32 %v426, 16
      %v679 = vrot.slane %v677, 1
      %v680 = vor.u32 %v675, %v679
      %v682 = vshll.u32 %v427, 16
      %v684 = vrot.slane %v682, 1
      %v685 = vsel %vm477, %v680, %v684
      %v686 = vshrl.u32 %v427, 16
      %v688 = vor.u32 %v686, %v684
      %v690 = vshll.u32 %v428, 16
      %v692 = vrot.slane %v690, 1
      %v693 = vsel %vm477, %v688, %v692
      %v694 = vshrl.u32 %v428, 16
      %v696 = vor.u32 %v694, %v692
      %v698 = vshll.u32 %v476, 16
      %v700 = vrot.slane %v698, 1
      %v701 = vsel %vm477, %v696, %v700
      %vm726 = vcmask 1046528
      %v727 = vrot.slane %v405, 1
      %v728 = vrot.slane %v406, 1
      %v729 = vsel %vm726, %v727, %v728
      %v730 = vrot.slane %v407, 1
      %v731 = vsel %vm726, %v728, %v730
      %v732 = vrot.slane %v469, 1
      %v733 = vsel %vm726, %v730, %v732
      %v734 = vrot.slane %v408, 1
      %v735 = vrot.slane %v409, 1
      %v736 = vsel %vm726, %v734, %v735
      %v737 = vrot.slane %v410, 1
      %v738 = vsel %vm726, %v735, %v737
      %v739 = vrot.slane %v470, 1
      %v740 = vsel %vm726, %v737, %v739
      %v741 = vrot.slane %v411, 1
      %v742 = vrot.slane %v412, 1
      %v743 = vsel %vm726, %v741, %v742
      %v744 = vrot.slane %v413, 1
      %v745 = vsel %vm726, %v742, %v744
      %v746 = vrot.slane %v471, 1
      %v747 = vsel %vm726, %v744, %v746
      %v748 = vrot.slane %v414, 1
      %v749 = vrot.slane %v415, 1
      %v750 = vsel %vm726, %v748, %v749
      %v751 = vrot.slane %v416, 1
      %v752 = vsel %vm726, %v749, %v751
      %v753 = vrot.slane %v472, 1
      %v754 = vsel %vm726, %v751, %v753
      %v755 = vrot.slane %v417, 1
      %v756 = vrot.slane %v418, 1
      %v757 = vsel %vm726, %v755, %v756
      %v758 = vrot.slane %v419, 1
      %v759 = vsel %vm726, %v756, %v758
      %v760 = vrot.slane %v473, 1
      %v761 = vsel %vm726, %v758, %v760
      %v762 = vrot.slane %v420, 1
      %v763 = vrot.slane %v421, 1
      %v764 = vsel %vm726, %v762, %v763
      %v765 = vrot.slane %v422, 1
      %v766 = vsel %vm726, %v763, %v765
      %v767 = vrot.slane %v474, 1
      %v768 = vsel %vm726, %v765, %v767
      %v769 = vrot.slane %v423, 1
      %v770 = vrot.slane %v424, 1
      %v771 = vsel %vm726, %v769, %v770
      %v772 = vrot.slane %v425, 1
      %v773 = vsel %vm726, %v770, %v772
      %v774 = vrot.slane %v475, 1
      %v775 = vsel %vm726, %v772, %v774
      %v776 = vrot.slane %v426, 1
      %v777 = vrot.slane %v427, 1
      %v778 = vsel %vm726, %v776, %v777
      %v779 = vrot.slane %v428, 1
      %v780 = vsel %vm726, %v777, %v779
      %v781 = vrot.slane %v476, 1
      %v782 = vsel %vm726, %v779, %v781
      %v807 = vld [vmem:[%s1] sm:$0xf]
      %v808 = vld [vmem:[%s1 + $0x4] sm:$0xf]
      %v809 = vld [vmem:[%s1 + $0x8] sm:$0xf]
      %v810 = vld [vmem:[%s1 + $0xc] sm:$0xf]
      %v811 = vld [vmem:[%s1 + $0x10] sm:$0xf]
      %v812 = vld [vmem:[%s1 + $0x14] sm:$0xf]
      %v813 = vld [vmem:[%s1 + $0x18] sm:$0xf]
      %v814 = vld [vmem:[%s1 + $0x1c] sm:$0xf]
      %v815 = vld [vmem:[%s1 + $0x20] sm:$0xf]
      %v816 = vld [vmem:[%s1 + $0x24] sm:$0xf]
      %v817 = vld [vmem:[%s1 + $0x28] sm:$0xf]
      %v818 = vld [vmem:[%s1 + $0x2c] sm:$0xf]
      %v819 = vld [vmem:[%s1 + $0x30] sm:$0xf]
      %v820 = vld [vmem:[%s1 + $0x34] sm:$0xf]
      %v821 = vld [vmem:[%s1 + $0x38] sm:$0xf]
      %v822 = vld [vmem:[%s1 + $0x3c] sm:$0xf]
      %v823 = vld [vmem:[%s1 + $0x40] sm:$0xf]
      %v824 = vld [vmem:[%s1 + $0x44] sm:$0xf]
      %v825 = vld [vmem:[%s1 + $0x48] sm:$0xf]
      %v826 = vld [vmem:[%s1 + $0x4c] sm:$0xf]
      %v827 = vld [vmem:[%s1 + $0x50] sm:$0xf]
      %v828 = vld [vmem:[%s1 + $0x54] sm:$0xf]
      %v829 = vld [vmem:[%s1 + $0x58] sm:$0xf]
      %v830 = vld [vmem:[%s1 + $0x5c] sm:$0xf]
      %v831 = vld [vmem:[%s1 + $0x60] sm:$0xf]
      %v832 = vld [vmem:[%s1 + $0x64] sm:$0xf]
      %v833 = vld [vmem:[%s1 + $0x68] sm:$0xf]
      %v834 = vld [vmem:[%s1 + $0x6c] sm:$0xf]
      %v835 = vld [vmem:[%s1 + $0x70] sm:$0xf]
      %v836 = vld [vmem:[%s1 + $0x74] sm:$0xf]
      %v837 = vld [vmem:[%s1 + $0x78] sm:$0xf]
      %v838 = vld [vmem:[%s1 + $0x7c] sm:$0xf]
      %v839 = vld [vmem:[%s1 + $0x80] sm:$0xf]
      %v840 = vld [vmem:[%s1 + $0x84] sm:$0xf]
      %v841 = vld [vmem:[%s1 + $0x88] sm:$0xf]
      %v842 = vld [vmem:[%s1 + $0x8c] sm:$0xf]
      %v843 = vld [vmem:[%s1 + $0x90] sm:$0xf]
      %v844 = vld [vmem:[%s1 + $0x94] sm:$0xf]
      %v845 = vld [vmem:[%s1 + $0x98] sm:$0xf]
      %v846 = vld [vmem:[%s1 + $0x9c] sm:$0xf]
      %v847 = vld [vmem:[%s1 + $0xa0] sm:$0xf]
      %v848 = vld [vmem:[%s1 + $0xa4] sm:$0xf]
      %v849 = vld [vmem:[%s1 + $0xa8] sm:$0xf]
      %v850 = vld [vmem:[%s1 + $0xac] sm:$0xf]
      %v851 = vld [vmem:[%s1 + $0xb0] sm:$0xf]
      %v852 = vld [vmem:[%s1 + $0xb4] sm:$0xf]
      %v853 = vld [vmem:[%s1 + $0xb8] sm:$0xf]
      %v854 = vld [vmem:[%s1 + $0xbc] sm:$0xf]
      %s855 = sadd.s32 %s249, 1
      %s856 = smul.u32 %s855, 7
      %s857 = smul.addr %s856, 4
      %s858 = scalar_lea.vmem %s237, %s857
      %v859 = vld [vmem:[%s858] sm:$0xf]
      %v860 = vld [vmem:[%s858 + $0x4] sm:$0xf]
      %v861 = vld [vmem:[%s858 + $0x8] sm:$0xf]
      %v862 = vld [vmem:[%s858 + $0xc] sm:$0xf]
      %v863 = vld [vmem:[%s858 + $0x10] sm:$0xf]
      %v864 = vld [vmem:[%s858 + $0x14] sm:$0xf]
      %v865 = vld [vmem:[%s858 + $0x18] sm:$0x1]
      %v866 = vld [vmem:[%s858 + $0x1c] sm:$0xf]
      %v867 = vld [vmem:[%s858 + $0x20] sm:$0xf]
      %v868 = vld [vmem:[%s858 + $0x24] sm:$0xf]
      %v869 = vld [vmem:[%s858 + $0x28] sm:$0xf]
      %v870 = vld [vmem:[%s858 + $0x2c] sm:$0xf]
      %v871 = vld [vmem:[%s858 + $0x30] sm:$0xf]
      %v872 = vld [vmem:[%s858 + $0x34] sm:$0x1]
      %v873 = vld [vmem:[%s858 + $0x38] sm:$0xf]
      %v874 = vld [vmem:[%s858 + $0x3c] sm:$0xf]
      %v875 = vld [vmem:[%s858 + $0x40] sm:$0xf]
      %v876 = vld [vmem:[%s858 + $0x44] sm:$0xf]
      %v877 = vld [vmem:[%s858 + $0x48] sm:$0xf]
      %v878 = vld [vmem:[%s858 + $0x4c] sm:$0xf]
      %v879 = vld [vmem:[%s858 + $0x50] sm:$0x1]
      %v880 = vld [vmem:[%s858 + $0x54] sm:$0xf]
      %v881 = vld [vmem:[%s858 + $0x58] sm:$0xf]
      %v882 = vld [vmem:[%s858 + $0x5c] sm:$0xf]
      %v883 = vld [vmem:[%s858 + $0x60] sm:$0xf]
      %v884 = vld [vmem:[%s858 + $0x64] sm:$0xf]
      %v885 = vld [vmem:[%s858 + $0x68] sm:$0xf]
      %v886 = vld [vmem:[%s858 + $0x6c] sm:$0x1]
      %v887 = vld [vmem:[%s858 + $0x70] sm:$0xf]
      %v888 = vld [vmem:[%s858 + $0x74] sm:$0xf]
      %v889 = vld [vmem:[%s858 + $0x78] sm:$0xf]
      %v890 = vld [vmem:[%s858 + $0x7c] sm:$0xf]
      %v891 = vld [vmem:[%s858 + $0x80] sm:$0xf]
      %v892 = vld [vmem:[%s858 + $0x84] sm:$0xf]
      %v893 = vld [vmem:[%s858 + $0x88] sm:$0x1]
      %v894 = vld [vmem:[%s858 + $0x8c] sm:$0xf]
      %v895 = vld [vmem:[%s858 + $0x90] sm:$0xf]
      %v896 = vld [vmem:[%s858 + $0x94] sm:$0xf]
      %v897 = vld [vmem:[%s858 + $0x98] sm:$0xf]
      %v898 = vld [vmem:[%s858 + $0x9c] sm:$0xf]
      %v899 = vld [vmem:[%s858 + $0xa0] sm:$0xf]
      %v900 = vld [vmem:[%s858 + $0xa4] sm:$0x1]
      %v901 = vld [vmem:[%s858 + $0xa8] sm:$0xf]
      %v902 = vld [vmem:[%s858 + $0xac] sm:$0xf]
      %v903 = vld [vmem:[%s858 + $0xb0] sm:$0xf]
      %v904 = vld [vmem:[%s858 + $0xb4] sm:$0xf]
      %v905 = vld [vmem:[%s858 + $0xb8] sm:$0xf]
      %v906 = vld [vmem:[%s858 + $0xbc] sm:$0xf]
      %v907 = vld [vmem:[%s858 + $0xc0] sm:$0x1]
      %v908 = vld [vmem:[%s858 + $0xc4] sm:$0xf]
      %v909 = vld [vmem:[%s858 + $0xc8] sm:$0xf]
      %v910 = vld [vmem:[%s858 + $0xcc] sm:$0xf]
      %v911 = vld [vmem:[%s858 + $0xd0] sm:$0xf]
      %v912 = vld [vmem:[%s858 + $0xd4] sm:$0xf]
      %v913 = vld [vmem:[%s858 + $0xd8] sm:$0xf]
      %v914 = vld [vmem:[%s858 + $0xdc] sm:$0x1]
      %v963 = vunpack.c.l.b16 %v859
      %v964 = vunpack.c.l.b16 %v860
      %v965 = vunpack.c.l.b16 %v861
      %v966 = vunpack.c.l.b16 %v862
      %v967 = vunpack.c.l.b16 %v863
      %v968 = vunpack.c.l.b16 %v864
      %v969 = vunpack.c.l.b16 %v866
      %v970 = vunpack.c.l.b16 %v867
      %v971 = vunpack.c.l.b16 %v868
      %v972 = vunpack.c.l.b16 %v869
      %v973 = vunpack.c.l.b16 %v870
      %v974 = vunpack.c.l.b16 %v871
      %v975 = vunpack.c.l.b16 %v873
      %v976 = vunpack.c.l.b16 %v874
      %v977 = vunpack.c.l.b16 %v875
      %v978 = vunpack.c.l.b16 %v876
      %v979 = vunpack.c.l.b16 %v877
      %v980 = vunpack.c.l.b16 %v878
      %v981 = vunpack.c.l.b16 %v880
      %v982 = vunpack.c.l.b16 %v881
      %v983 = vunpack.c.l.b16 %v882
      %v984 = vunpack.c.l.b16 %v883
      %v985 = vunpack.c.l.b16 %v884
      %v986 = vunpack.c.l.b16 %v885
      %v987 = vunpack.c.l.b16 %v887
      %v988 = vunpack.c.l.b16 %v888
      %v989 = vunpack.c.l.b16 %v889
      %v990 = vunpack.c.l.b16 %v890
      %v991 = vunpack.c.l.b16 %v891
      %v992 = vunpack.c.l.b16 %v892
      %v993 = vunpack.c.l.b16 %v894
      %v994 = vunpack.c.l.b16 %v895
      %v995 = vunpack.c.l.b16 %v896
      %v996 = vunpack.c.l.b16 %v897
      %v997 = vunpack.c.l.b16 %v898
      %v998 = vunpack.c.l.b16 %v899
      %v999 = vunpack.c.l.b16 %v901
      %v1000 = vunpack.c.l.b16 %v902
      %v1001 = vunpack.c.l.b16 %v903
      %v1002 = vunpack.c.l.b16 %v904
      %v1003 = vunpack.c.l.b16 %v905
      %v1004 = vunpack.c.l.b16 %v906
      %v1005 = vunpack.c.l.b16 %v908
      %v1006 = vunpack.c.l.b16 %v909
      %v1007 = vunpack.c.l.b16 %v910
      %v1008 = vunpack.c.l.b16 %v911
      %v1009 = vunpack.c.l.b16 %v912
      %v1010 = vunpack.c.l.b16 %v913
      %v1011 = vpack.c.b16 %v964, %v963
      %v1012 = vpack.c.b16 %v966, %v965
      %v1013 = vpack.c.b16 %v968, %v967
      %v1014 = vpack.c.b16 %v970, %v969
      %v1015 = vpack.c.b16 %v972, %v971
      %v1016 = vpack.c.b16 %v974, %v973
      %v1017 = vpack.c.b16 %v976, %v975
      %v1018 = vpack.c.b16 %v978, %v977
      %v1019 = vpack.c.b16 %v980, %v979
      %v1020 = vpack.c.b16 %v982, %v981
      %v1021 = vpack.c.b16 %v984, %v983
      %v1022 = vpack.c.b16 %v986, %v985
      %v1023 = vpack.c.b16 %v988, %v987
      %v1024 = vpack.c.b16 %v990, %v989
      %v1025 = vpack.c.b16 %v992, %v991
      %v1026 = vpack.c.b16 %v994, %v993
      %v1027 = vpack.c.b16 %v996, %v995
      %v1028 = vpack.c.b16 %v998, %v997
      %v1029 = vpack.c.b16 %v1000, %v999
      %v1030 = vpack.c.b16 %v1002, %v1001
      %v1031 = vpack.c.b16 %v1004, %v1003
      %v1032 = vpack.c.b16 %v1006, %v1005
      %v1033 = vpack.c.b16 %v1008, %v1007
      %v1034 = vpack.c.b16 %v1010, %v1009
      %v1067 = vunpack.c.l.b16 %v865
      %v1068 = vunpack.c.l.b16 %v872
      %v1069 = vunpack.c.l.b16 %v879
      %v1070 = vunpack.c.l.b16 %v886
      %v1071 = vunpack.c.l.b16 %v893
      %v1072 = vunpack.c.l.b16 %v900
      %v1073 = vunpack.c.l.b16 %v907
      %v1074 = vunpack.c.l.b16 %v914
      %v1075 = vpack.c.b16 %v1067, %v1067
      %v1076 = vpack.c.b16 %v1068, %v1068
      %v1077 = vpack.c.b16 %v1069, %v1069
      %v1078 = vpack.c.b16 %v1070, %v1070
      %v1079 = vpack.c.b16 %v1071, %v1071
      %v1080 = vpack.c.b16 %v1072, %v1072
      %v1081 = vpack.c.b16 %v1073, %v1073
      %v1082 = vpack.c.b16 %v1074, %v1074
      %v1084 = vshrl.u32 %v1011, 16
      %v1086 = vshll.u32 %v1011, 16
      %v1088 = vrot.slane %v1086, 1
      %v1089 = vor.u32 %v1084, %v1088
      %v1091 = vshll.u32 %v1012, 16
      %v1093 = vrot.slane %v1091, 1
      %v1094 = vsel %vm477, %v1089, %v1093
      %v1095 = vshrl.u32 %v1012, 16
      %v1097 = vor.u32 %v1095, %v1093
      %v1099 = vshll.u32 %v1013, 16
      %v1101 = vrot.slane %v1099, 1
      %v1102 = vsel %vm477, %v1097, %v1101
      %v1103 = vshrl.u32 %v1013, 16
      %v1105 = vor.u32 %v1103, %v1101
      %v1107 = vshll.u32 %v1075, 16
      %v1109 = vrot.slane %v1107, 1
      %v1110 = vsel %vm477, %v1105, %v1109
      %v1112 = vshrl.u32 %v1014, 16
      %v1114 = vshll.u32 %v1014, 16
      %v1116 = vrot.slane %v1114, 1
      %v1117 = vor.u32 %v1112, %v1116
      %v1119 = vshll.u32 %v1015, 16
      %v1121 = vrot.slane %v1119, 1
      %v1122 = vsel %vm477, %v1117, %v1121
      %v1123 = vshrl.u32 %v1015, 16
      %v1125 = vor.u32 %v1123, %v1121
      %v1127 = vshll.u32 %v1016, 16
      %v1129 = vrot.slane %v1127, 1
      %v1130 = vsel %vm477, %v1125, %v1129
      %v1131 = vshrl.u32 %v1016, 16
      %v1133 = vor.u32 %v1131, %v1129
      %v1135 = vshll.u32 %v1076, 16
      %v1137 = vrot.slane %v1135, 1
      %v1138 = vsel %vm477, %v1133, %v1137
      %v1140 = vshrl.u32 %v1017, 16
      %v1142 = vshll.u32 %v1017, 16
      %v1144 = vrot.slane %v1142, 1
      %v1145 = vor.u32 %v1140, %v1144
      %v1147 = vshll.u32 %v1018, 16
      %v1149 = vrot.slane %v1147, 1
      %v1150 = vsel %vm477, %v1145, %v1149
      %v1151 = vshrl.u32 %v1018, 16
      %v1153 = vor.u32 %v1151, %v1149
      %v1155 = vshll.u32 %v1019, 16
      %v1157 = vrot.slane %v1155, 1
      %v1158 = vsel %vm477, %v1153, %v1157
      %v1159 = vshrl.u32 %v1019, 16
      %v1161 = vor.u32 %v1159, %v1157
      %v1163 = vshll.u32 %v1077, 16
      %v1165 = vrot.slane %v1163, 1
      %v1166 = vsel %vm477, %v1161, %v1165
      %v1168 = vshrl.u32 %v1020, 16
      %v1170 = vshll.u32 %v1020, 16
      %v1172 = vrot.slane %v1170, 1
      %v1173 = vor.u32 %v1168, %v1172
      %v1175 = vshll.u32 %v1021, 16
      %v1177 = vrot.slane %v1175, 1
      %v1178 = vsel %vm477, %v1173, %v1177
      %v1179 = vshrl.u32 %v1021, 16
      %v1181 = vor.u32 %v1179, %v1177
      %v1183 = vshll.u32 %v1022, 16
      %v1185 = vrot.slane %v1183, 1
      %v1186 = vsel %vm477, %v1181, %v1185
      %v1187 = vshrl.u32 %v1022, 16
      %v1189 = vor.u32 %v1187, %v1185
      %v1191 = vshll.u32 %v1078, 16
      %v1193 = vrot.slane %v1191, 1
      %v1194 = vsel %vm477, %v1189, %v1193
      %v1196 = vshrl.u32 %v1023, 16
      %v1198 = vshll.u32 %v1023, 16
      %v1200 = vrot.slane %v1198, 1
      %v1201 = vor.u32 %v1196, %v1200
      %v1203 = vshll.u32 %v1024, 16
      %v1205 = vrot.slane %v1203, 1
      %v1206 = vsel %vm477, %v1201, %v1205
      %v1207 = vshrl.u32 %v1024, 16
      %v1209 = vor.u32 %v1207, %v1205
      %v1211 = vshll.u32 %v1025, 16
      %v1213 = vrot.slane %v1211, 1
      %v1214 = vsel %vm477, %v1209, %v1213
      %v1215 = vshrl.u32 %v1025, 16
      %v1217 = vor.u32 %v1215, %v1213
      %v1219 = vshll.u32 %v1079, 16
      %v1221 = vrot.slane %v1219, 1
      %v1222 = vsel %vm477, %v1217, %v1221
      %v1224 = vshrl.u32 %v1026, 16
      %v1226 = vshll.u32 %v1026, 16
      %v1228 = vrot.slane %v1226, 1
      %v1229 = vor.u32 %v1224, %v1228
      %v1231 = vshll.u32 %v1027, 16
      %v1233 = vrot.slane %v1231, 1
      %v1234 = vsel %vm477, %v1229, %v1233
      %v1235 = vshrl.u32 %v1027, 16
      %v1237 = vor.u32 %v1235, %v1233
      %v1239 = vshll.u32 %v1028, 16
      %v1241 = vrot.slane %v1239, 1
      %v1242 = vsel %vm477, %v1237, %v1241
      %v1243 = vshrl.u32 %v1028, 16
      %v1245 = vor.u32 %v1243, %v1241
      %v1247 = vshll.u32 %v1080, 16
      %v1249 = vrot.slane %v1247, 1
      %v1250 = vsel %vm477, %v1245, %v1249
      %v1252 = vshrl.u32 %v1029, 16
      %v1254 = vshll.u32 %v1029, 16
      %v1256 = vrot.slane %v1254, 1
      %v1257 = vor.u32 %v1252, %v1256
      %v1259 = vshll.u32 %v1030, 16
      %v1261 = vrot.slane %v1259, 1
      %v1262 = vsel %vm477, %v1257, %v1261
      %v1263 = vshrl.u32 %v1030, 16
      %v1265 = vor.u32 %v1263, %v1261
      %v1267 = vshll.u32 %v1031, 16
      %v1269 = vrot.slane %v1267, 1
      %v1270 = vsel %vm477, %v1265, %v1269
      %v1271 = vshrl.u32 %v1031, 16
      %v1273 = vor.u32 %v1271, %v1269
      %v1275 = vshll.u32 %v1081, 16
      %v1277 = vrot.slane %v1275, 1
      %v1278 = vsel %vm477, %v1273, %v1277
      %v1280 = vshrl.u32 %v1032, 16
      %v1282 = vshll.u32 %v1032, 16
      %v1284 = vrot.slane %v1282, 1
      %v1285 = vor.u32 %v1280, %v1284
      %v1287 = vshll.u32 %v1033, 16
      %v1289 = vrot.slane %v1287, 1
      %v1290 = vsel %vm477, %v1285, %v1289
      %v1291 = vshrl.u32 %v1033, 16
      %v1293 = vor.u32 %v1291, %v1289
      %v1295 = vshll.u32 %v1034, 16
      %v1297 = vrot.slane %v1295, 1
      %v1298 = vsel %vm477, %v1293, %v1297
      %v1299 = vshrl.u32 %v1034, 16
      %v1301 = vor.u32 %v1299, %v1297
      %v1303 = vshll.u32 %v1082, 16
      %v1305 = vrot.slane %v1303, 1
      %v1306 = vsel %vm477, %v1301, %v1305
      %v1331 = vrot.slane %v1011, 1
      %v1332 = vrot.slane %v1012, 1
      %v1333 = vsel %vm726, %v1331, %v1332
      %v1334 = vrot.slane %v1013, 1
      %v1335 = vsel %vm726, %v1332, %v1334
      %v1336 = vrot.slane %v1075, 1
      %v1337 = vsel %vm726, %v1334, %v1336
      %v1338 = vrot.slane %v1014, 1
      %v1339 = vrot.slane %v1015, 1
      %v1340 = vsel %vm726, %v1338, %v1339
      %v1341 = vrot.slane %v1016, 1
      %v1342 = vsel %vm726, %v1339, %v1341
      %v1343 = vrot.slane %v1076, 1
      %v1344 = vsel %vm726, %v1341, %v1343
      %v1345 = vrot.slane %v1017, 1
      %v1346 = vrot.slane %v1018, 1
      %v1347 = vsel %vm726, %v1345, %v1346
      %v1348 = vrot.slane %v1019, 1
      %v1349 = vsel %vm726, %v1346, %v1348
      %v1350 = vrot.slane %v1077, 1
      %v1351 = vsel %vm726, %v1348, %v1350
      %v1352 = vrot.slane %v1020, 1
      %v1353 = vrot.slane %v1021, 1
      %v1354 = vsel %vm726, %v1352, %v1353
      %v1355 = vrot.slane %v1022, 1
      %v1356 = vsel %vm726, %v1353, %v1355
      %v1357 = vrot.slane %v1078, 1
      %v1358 = vsel %vm726, %v1355, %v1357
      %v1359 = vrot.slane %v1023, 1
      %v1360 = vrot.slane %v1024, 1
      %v1361 = vsel %vm726, %v1359, %v1360
      %v1362 = vrot.slane %v1025, 1
      %v1363 = vsel %vm726, %v1360, %v1362
      %v1364 = vrot.slane %v1079, 1
      %v1365 = vsel %vm726, %v1362, %v1364
      %v1366 = vrot.slane %v1026, 1
      %v1367 = vrot.slane %v1027, 1
      %v1368 = vsel %vm726, %v1366, %v1367
      %v1369 = vrot.slane %v1028, 1
      %v1370 = vsel %vm726, %v1367, %v1369
      %v1371 = vrot.slane %v1080, 1
      %v1372 = vsel %vm726, %v1369, %v1371
      %v1373 = vrot.slane %v1029, 1
      %v1374 = vrot.slane %v1030, 1
      %v1375 = vsel %vm726, %v1373, %v1374
      %v1376 = vrot.slane %v1031, 1
      %v1377 = vsel %vm726, %v1374, %v1376
      %v1378 = vrot.slane %v1081, 1
      %v1379 = vsel %vm726, %v1376, %v1378
      %v1380 = vrot.slane %v1032, 1
      %v1381 = vrot.slane %v1033, 1
      %v1382 = vsel %vm726, %v1380, %v1381
      %v1383 = vrot.slane %v1034, 1
      %v1384 = vsel %vm726, %v1381, %v1383
      %v1385 = vrot.slane %v1082, 1
      %v1386 = vsel %vm726, %v1383, %v1385
      %s1411 = scalar_lea.vmem %s1, 192
      %v1412 = vld [vmem:[%s1411] sm:$0xf]
      %v1413 = vld [vmem:[%s1411 + $0x4] sm:$0xf]
      %v1414 = vld [vmem:[%s1411 + $0x8] sm:$0xf]
      %v1415 = vld [vmem:[%s1411 + $0xc] sm:$0xf]
      %v1416 = vld [vmem:[%s1411 + $0x10] sm:$0xf]
      %v1417 = vld [vmem:[%s1411 + $0x14] sm:$0xf]
      %v1418 = vld [vmem:[%s1411 + $0x18] sm:$0xf]
      %v1419 = vld [vmem:[%s1411 + $0x1c] sm:$0xf]
      %v1420 = vld [vmem:[%s1411 + $0x20] sm:$0xf]
      %v1421 = vld [vmem:[%s1411 + $0x24] sm:$0xf]
      %v1422 = vld [vmem:[%s1411 + $0x28] sm:$0xf]
      %v1423 = vld [vmem:[%s1411 + $0x2c] sm:$0xf]
      %v1424 = vld [vmem:[%s1411 + $0x30] sm:$0xf]
      %v1425 = vld [vmem:[%s1411 + $0x34] sm:$0xf]
      %v1426 = vld [vmem:[%s1411 + $0x38] sm:$0xf]
      %v1427 = vld [vmem:[%s1411 + $0x3c] sm:$0xf]
      %v1428 = vld [vmem:[%s1411 + $0x40] sm:$0xf]
      %v1429 = vld [vmem:[%s1411 + $0x44] sm:$0xf]
      %v1430 = vld [vmem:[%s1411 + $0x48] sm:$0xf]
      %v1431 = vld [vmem:[%s1411 + $0x4c] sm:$0xf]
      %v1432 = vld [vmem:[%s1411 + $0x50] sm:$0xf]
      %v1433 = vld [vmem:[%s1411 + $0x54] sm:$0xf]
      %v1434 = vld [vmem:[%s1411 + $0x58] sm:$0xf]
      %v1435 = vld [vmem:[%s1411 + $0x5c] sm:$0xf]
      %v1436 = vld [vmem:[%s1411 + $0x60] sm:$0xf]
      %v1437 = vld [vmem:[%s1411 + $0x64] sm:$0xf]
      %v1438 = vld [vmem:[%s1411 + $0x68] sm:$0xf]
      %v1439 = vld [vmem:[%s1411 + $0x6c] sm:$0xf]
      %v1440 = vld [vmem:[%s1411 + $0x70] sm:$0xf]
      %v1441 = vld [vmem:[%s1411 + $0x74] sm:$0xf]
      %v1442 = vld [vmem:[%s1411 + $0x78] sm:$0xf]
      %v1443 = vld [vmem:[%s1411 + $0x7c] sm:$0xf]
      %v1444 = vld [vmem:[%s1411 + $0x80] sm:$0xf]
      %v1445 = vld [vmem:[%s1411 + $0x84] sm:$0xf]
      %v1446 = vld [vmem:[%s1411 + $0x88] sm:$0xf]
      %v1447 = vld [vmem:[%s1411 + $0x8c] sm:$0xf]
      %v1448 = vld [vmem:[%s1411 + $0x90] sm:$0xf]
      %v1449 = vld [vmem:[%s1411 + $0x94] sm:$0xf]
      %v1450 = vld [vmem:[%s1411 + $0x98] sm:$0xf]
      %v1451 = vld [vmem:[%s1411 + $0x9c] sm:$0xf]
      %v1452 = vld [vmem:[%s1411 + $0xa0] sm:$0xf]
      %v1453 = vld [vmem:[%s1411 + $0xa4] sm:$0xf]
      %v1454 = vld [vmem:[%s1411 + $0xa8] sm:$0xf]
      %v1455 = vld [vmem:[%s1411 + $0xac] sm:$0xf]
      %v1456 = vld [vmem:[%s1411 + $0xb0] sm:$0xf]
      %v1457 = vld [vmem:[%s1411 + $0xb4] sm:$0xf]
      %v1458 = vld [vmem:[%s1411 + $0xb8] sm:$0xf]
      %v1459 = vld [vmem:[%s1411 + $0xbc] sm:$0xf]
      %v1508 = vunpack.c.l.b16 %v1412
      %v1509 = vunpack.c.l.b16 %v1413
      %v1510 = vunpack.c.l.b16 %v1414
      %v1511 = vunpack.c.l.b16 %v1415
      %v1512 = vunpack.c.l.b16 %v1416
      %v1513 = vunpack.c.l.b16 %v1417
      %v1514 = vunpack.c.l.b16 %v1418
      %v1515 = vunpack.c.l.b16 %v1419
      %v1516 = vunpack.c.l.b16 %v1420
      %v1517 = vunpack.c.l.b16 %v1421
      %v1518 = vunpack.c.l.b16 %v1422
      %v1519 = vunpack.c.l.b16 %v1423
      %v1520 = vunpack.c.l.b16 %v1424
      %v1521 = vunpack.c.l.b16 %v1425
      %v1522 = vunpack.c.l.b16 %v1426
      %v1523 = vunpack.c.l.b16 %v1427
      %v1524 = vunpack.c.l.b16 %v1428
      %v1525 = vunpack.c.l.b16 %v1429
      %v1526 = vunpack.c.l.b16 %v1430
      %v1527 = vunpack.c.l.b16 %v1431
      %v1528 = vunpack.c.l.b16 %v1432
      %v1529 = vunpack.c.l.b16 %v1433
      %v1530 = vunpack.c.l.b16 %v1434
      %v1531 = vunpack.c.l.b16 %v1435
      %v1532 = vunpack.c.l.b16 %v1436
      %v1533 = vunpack.c.l.b16 %v1437
      %v1534 = vunpack.c.l.b16 %v1438
      %v1535 = vunpack.c.l.b16 %v1439
      %v1536 = vunpack.c.l.b16 %v1440
      %v1537 = vunpack.c.l.b16 %v1441
      %v1538 = vunpack.c.l.b16 %v1442
      %v1539 = vunpack.c.l.b16 %v1443
      %v1540 = vunpack.c.l.b16 %v1444
      %v1541 = vunpack.c.l.b16 %v1445
      %v1542 = vunpack.c.l.b16 %v1446
      %v1543 = vunpack.c.l.b16 %v1447
      %v1544 = vunpack.c.l.b16 %v1448
      %v1545 = vunpack.c.l.b16 %v1449
      %v1546 = vunpack.c.l.b16 %v1450
      %v1547 = vunpack.c.l.b16 %v1451
      %v1548 = vunpack.c.l.b16 %v1452
      %v1549 = vunpack.c.l.b16 %v1453
      %v1550 = vunpack.c.l.b16 %v1454
      %v1551 = vunpack.c.l.b16 %v1455
      %v1552 = vunpack.c.l.b16 %v1456
      %v1553 = vunpack.c.l.b16 %v1457
      %v1554 = vunpack.c.l.b16 %v1458
      %v1555 = vunpack.c.l.b16 %v1459
      %v1556 = vpack.c.b16 %v1509, %v1508
      %v1557 = vpack.c.b16 %v1511, %v1510
      %v1558 = vpack.c.b16 %v1513, %v1512
      %v1559 = vpack.c.b16 %v1515, %v1514
      %v1560 = vpack.c.b16 %v1517, %v1516
      %v1561 = vpack.c.b16 %v1519, %v1518
      %v1562 = vpack.c.b16 %v1521, %v1520
      %v1563 = vpack.c.b16 %v1523, %v1522
      %v1564 = vpack.c.b16 %v1525, %v1524
      %v1565 = vpack.c.b16 %v1527, %v1526
      %v1566 = vpack.c.b16 %v1529, %v1528
      %v1567 = vpack.c.b16 %v1531, %v1530
      %v1568 = vpack.c.b16 %v1533, %v1532
      %v1569 = vpack.c.b16 %v1535, %v1534
      %v1570 = vpack.c.b16 %v1537, %v1536
      %v1571 = vpack.c.b16 %v1539, %v1538
      %v1572 = vpack.c.b16 %v1541, %v1540
      %v1573 = vpack.c.b16 %v1543, %v1542
      %v1574 = vpack.c.b16 %v1545, %v1544
      %v1575 = vpack.c.b16 %v1547, %v1546
      %v1576 = vpack.c.b16 %v1549, %v1548
      %v1577 = vpack.c.b16 %v1551, %v1550
      %v1578 = vpack.c.b16 %v1553, %v1552
      %v1579 = vpack.c.b16 %v1555, %v1554
      %1604 = vmatprep.subr.bf16.mxu0 0
      %1605 = vmatpush1.bf16.msra.mxu0 %v1556
      %1606 = vmatprep.subr.bf16.mxu0 0
      %1607 = vmatpush1.bf16.msra.mxu0 %v1557
      %1608 = vmatprep.subr.bf16.mxu0 0
      %1609 = vmatpush1.bf16.msra.mxu0 %v1558
      %1610 = vmatprep.subr.bf16.mxu0 0
      %1611 = vmatpush1.bf16.msra.mxu0 %v1559
      %1612 = vmatprep.subr.bf16.mxu0 0
      %1613 = vmatpush1.bf16.msra.mxu0 %v1560
      %1614 = vmatprep.subr.bf16.mxu0 0
      %1615 = vmatpush1.bf16.msra.mxu0 %v1561
      %1616 = vmatprep.subr.bf16.mxu0 0
      %1617 = vmatpush1.bf16.msra.mxu0 %v1562
      %1618 = vmatprep.subr.bf16.mxu0 0
      %1619 = vmatpush1.bf16.msra.mxu0 %v1563
      %1620 = vmatprep.subr.bf16.mxu0 0
      %1621 = vmatpush1.bf16.msra.mxu0 %v1564
      %1622 = vmatprep.subr.bf16.mxu0 0
      %1623 = vmatpush1.bf16.msra.mxu0 %v1565
      %1624 = vmatprep.subr.bf16.mxu0 0
      %1625 = vmatpush1.bf16.msra.mxu0 %v1566
      %1626 = vmatprep.subr.bf16.mxu0 0
      %1627 = vmatpush1.bf16.msra.mxu0 %v1567
      %1628 = vmatprep.subr.bf16.mxu0 0
      %1629 = vmatpush1.bf16.msra.mxu0 %v1568
      %1630 = vmatprep.subr.bf16.mxu0 0
      %1631 = vmatpush1.bf16.msra.mxu0 %v1569
      %1632 = vmatprep.subr.bf16.mxu0 0
      %1633 = vmatpush1.bf16.msra.mxu0 %v1570
      %1634 = vmatprep.subr.bf16.mxu0 0
      %1635 = vmatpush1.bf16.msra.mxu0 %v1571
      %1636 = vmatprep.mubr.bf16.mxu0 %v1094
      %1637 = vmatmul.mubr.bf16.gmra.mrb[0].mxu0 %v1011
      %v1638 = vpop.f32.mrb[0].mxu0
      %v1639 = vadd.f32 0.0, %v1638
      %v1640 = vpop.f32.mrb[0].mxu0
      %v1641 = vpop.f32.mrb[0].mxu0
      %v1642 = vadd.f32 0.0, %v1641
      %v1643 = vpop.f32.mrb[0].mxu0
      %1644 = vmatprep.mubr.bf16.mxu0 %v1102
      %1645 = vmatmul.mubr.bf16.gmra.mrb[0].mxu0 %v1012
      %v1646 = vpop.f32.mrb[0].mxu0
      %v1647 = vadd.f32 0.0, %v1646
      %v1648 = vpop.f32.mrb[0].mxu0
      %v1649 = vpop.f32.mrb[0].mxu0
      %v1650 = vadd.f32 0.0, %v1649
      %v1651 = vpop.f32.mrb[0].mxu0
      %1652 = vmatprep.mubr.bf16.mxu0 %v1110
      %1653 = vmatmul.mubr.bf16.gmra.mrb[0].mxu0 %v1013
      %v1654 = vpop.f32.mrb[0].mxu0
      %v1655 = vadd.f32 0.0, %v1654
      %v1656 = vpop.f32.mrb[0].mxu0
      %v1657 = vpop.f32.mrb[0].mxu0
      %v1658 = vadd.f32 0.0, %v1657
      %v1659 = vpop.f32.mrb[0].mxu0
      %1660 = vmatprep.mubr.bf16.mxu0 %v1122
      %1661 = vmatmul.mubr.bf16.gmra.mrb[0].mxu0 %v1014
      %v1662 = vpop.f32.mrb[0].mxu0
      %v1663 = vadd.f32 0.0, %v1662
      %v1664 = vpop.f32.mrb[0].mxu0
      %v1665 = vpop.f32.mrb[0].mxu0
      %v1666 = vadd.f32 0.0, %v1665
      %v1667 = vpop.f32.mrb[0].mxu0
      %1668 = vmatprep.mubr.bf16.mxu0 %v1130
      %1669 = vmatmul.mubr.bf16.gmra.mrb[0].mxu0 %v1015
      %v1670 = vpop.f32.mrb[0].mxu0
      %v1671 = vadd.f32 0.0, %v1670
      %v1672 = vpop.f32.mrb[0].mxu0
      %v1673 = vpop.f32.mrb[0].mxu0
      %v1674 = vadd.f32 0.0, %v1673
      %v1675 = vpop.f32.mrb[0].mxu0
      %1676 = vmatprep.mubr.bf16.mxu0 %v1138
      %1677 = vmatmul.mubr.bf16.gmra.mrb[0].mxu0 %v1016
      %v1678 = vpop.f32.mrb[0].mxu0
      %v1679 = vadd.f32 0.0, %v1678
      %v1680 = vpop.f32.mrb[0].mxu0
      %v1681 = vpop.f32.mrb[0].mxu0
      %v1682 = vadd.f32 0.0, %v1681
      %v1683 = vpop.f32.mrb[0].mxu0
      %1684 = vmatprep.mubr.bf16.mxu0 %v1150
      %1685 = vmatmul.mubr.bf16.gmra.mrb[0].mxu0 %v1017
      %v1686 = vpop.f32.mrb[0].mxu0
      %v1687 = vadd.f32 0.0, %v1686
      %v1688 = vpop.f32.mrb[0].mxu0
      %v1689 = vpop.f32.mrb[0].mxu0
      %v1690 = vadd.f32 0.0, %v1689
      %v1691 = vpop.f32.mrb[0].mxu0
      %1692 = vmatprep.mubr.bf16.mxu0 %v1158
      %1693 = vmatmul.mubr.bf16.gmra.mrb[0].mxu0 %v1018
      %v1694 = vpop.f32.mrb[0].mxu0
      %v1695 = vadd.f32 0.0, %v1694
      %v1696 = vpop.f32.mrb[0].mxu0
      %v1697 = vpop.f32.mrb[0].mxu0
      %v1698 = vadd.f32 0.0, %v1697
      %v1699 = vpop.f32.mrb[0].mxu0
      %1700 = vmatprep.mubr.bf16.mxu0 %v1166
      %1701 = vmatmul.mubr.bf16.gmra.mrb[0].mxu0 %v1019
      %v1702 = vpop.f32.mrb[0].mxu0
      %v1703 = vadd.f32 0.0, %v1702
      %v1704 = vpop.f32.mrb[0].mxu0
      %v1705 = vpop.f32.mrb[0].mxu0
      %v1706 = vadd.f32 0.0, %v1705
      %v1707 = vpop.f32.mrb[0].mxu0
      %1708 = vmatprep.mubr.bf16.mxu0 %v1178
      %1709 = vmatmul.mubr.bf16.gmra.mrb[0].mxu0 %v1020
      %v1710 = vpop.f32.mrb[0].mxu0
      %v1711 = vadd.f32 0.0, %v1710
      %v1712 = vpop.f32.mrb[0].mxu0
      %v1713 = vpop.f32.mrb[0].mxu0
      %v1714 = vadd.f32 0.0, %v1713
      %v1715 = vpop.f32.mrb[0].mxu0
      %1716 = vmatprep.mubr.bf16.mxu0 %v1186
      %1717 = vmatmul.mubr.bf16.gmra.mrb[0].mxu0 %v1021
      %v1718 = vpop.f32.mrb[0].mxu0
      %v1719 = vadd.f32 0.0, %v1718
      %v1720 = vpop.f32.mrb[0].mxu0
      %v1721 = vpop.f32.mrb[0].mxu0
      %v1722 = vadd.f32 0.0, %v1721
      %v1723 = vpop.f32.mrb[0].mxu0
      %1724 = vmatprep.mubr.bf16.mxu0 %v1194
      %1725 = vmatmul.mubr.bf16.gmra.mrb[0].mxu0 %v1022
      %v1726 = vpop.f32.mrb[0].mxu0
      %v1727 = vadd.f32 0.0, %v1726
      %v1728 = vpop.f32.mrb[0].mxu0
      %v1729 = vpop.f32.mrb[0].mxu0
      %v1730 = vadd.f32 0.0, %v1729
      %v1731 = vpop.f32.mrb[0].mxu0
      %1732 = vmatprep.mubr.bf16.mxu0 %v1206
      %1733 = vmatmul.mubr.bf16.gmra.mrb[0].mxu0 %v1023
      %v1734 = vpop.f32.mrb[0].mxu0
      %v1735 = vadd.f32 0.0, %v1734
      %v1736 = vpop.f32.mrb[0].mxu0
      %v1737 = vpop.f32.mrb[0].mxu0
      %v1738 = vadd.f32 0.0, %v1737
      %v1739 = vpop.f32.mrb[0].mxu0
      %1740 = vmatprep.mubr.bf16.mxu0 %v1214
      %1741 = vmatmul.mubr.bf16.gmra.mrb[0].mxu0 %v1024
      %v1742 = vpop.f32.mrb[0].mxu0
      %v1743 = vadd.f32 0.0, %v1742
      %v1744 = vpop.f32.mrb[0].mxu0
      %v1745 = vpop.f32.mrb[0].mxu0
      %v1746 = vadd.f32 0.0, %v1745
      %v1747 = vpop.f32.mrb[0].mxu0
      %1748 = vmatprep.mubr.bf16.mxu0 %v1222
      %1749 = vmatmul.mubr.bf16.gmra.mrb[0].mxu0 %v1025
      %v1750 = vpop.f32.mrb[0].mxu0
      %v1751 = vadd.f32 0.0, %v1750
      %v1752 = vpop.f32.mrb[0].mxu0
      %v1753 = vpop.f32.mrb[0].mxu0
      %v1754 = vadd.f32 0.0, %v1753
      %v1755 = vpop.f32.mrb[0].mxu0
      %1756 = vmatprep.mubr.bf16.mxu0 %v1234
      %1757 = vmatmul.mubr.bf16.gmra.mrb[0].mxu0 %v1026
      %v1758 = vpop.f32.mrb[0].mxu0
      %v1759 = vadd.f32 0.0, %v1758
      %v1760 = vpop.f32.mrb[0].mxu0
      %v1761 = vpop.f32.mrb[0].mxu0
      %v1762 = vadd.f32 0.0, %v1761
      %v1763 = vpop.f32.mrb[0].mxu0
      %1764 = vmatprep.mubr.bf16.mxu0 %v1242
      %1765 = vmatmul.mubr.bf16.gmra.mrb[0].mxu0 %v1027
      %v1766 = vpop.f32.mrb[0].mxu0
      %v1767 = vadd.f32 0.0, %v1766
      %v1768 = vpop.f32.mrb[0].mxu0
      %v1769 = vpop.f32.mrb[0].mxu0
      %v1770 = vadd.f32 0.0, %v1769
      %v1771 = vpop.f32.mrb[0].mxu0
      %1772 = vmatprep.mubr.bf16.mxu0 %v1250
      %1773 = vmatmul.mubr.bf16.gmra.mrb[0].mxu0 %v1028
      %v1774 = vpop.f32.mrb[0].mxu0
      %v1775 = vadd.f32 0.0, %v1774
      %v1776 = vpop.f32.mrb[0].mxu0
      %v1777 = vpop.f32.mrb[0].mxu0
      %v1778 = vadd.f32 0.0, %v1777
      %v1779 = vpop.f32.mrb[0].mxu0
      %1780 = vmatprep.mubr.bf16.mxu0 %v1262
      %1781 = vmatmul.mubr.bf16.gmra.mrb[0].mxu0 %v1029
      %v1782 = vpop.f32.mrb[0].mxu0
      %v1783 = vadd.f32 0.0, %v1782
      %v1784 = vpop.f32.mrb[0].mxu0
      %v1785 = vpop.f32.mrb[0].mxu0
      %v1786 = vadd.f32 0.0, %v1785
      %v1787 = vpop.f32.mrb[0].mxu0
      %1788 = vmatprep.mubr.bf16.mxu0 %v1270
      %1789 = vmatmul.mubr.bf16.gmra.mrb[0].mxu0 %v1030
      %v1790 = vpop.f32.mrb[0].mxu0
      %v1791 = vadd.f32 0.0, %v1790
      %v1792 = vpop.f32.mrb[0].mxu0
      %v1793 = vpop.f32.mrb[0].mxu0
      %v1794 = vadd.f32 0.0, %v1793
      %v1795 = vpop.f32.mrb[0].mxu0
      %1796 = vmatprep.mubr.bf16.mxu0 %v1278
      %1797 = vmatmul.mubr.bf16.gmra.mrb[0].mxu0 %v1031
      %v1798 = vpop.f32.mrb[0].mxu0
      %v1799 = vadd.f32 0.0, %v1798
      %v1800 = vpop.f32.mrb[0].mxu0
      %v1801 = vpop.f32.mrb[0].mxu0
      %v1802 = vadd.f32 0.0, %v1801
      %v1803 = vpop.f32.mrb[0].mxu0
      %1804 = vmatprep.mubr.bf16.mxu0 %v1290
      %1805 = vmatmul.mubr.bf16.gmra.mrb[0].mxu0 %v1032
      %v1806 = vpop.f32.mrb[0].mxu0
      %v1807 = vadd.f32 0.0, %v1806
      %v1808 = vpop.f32.mrb[0].mxu0
      %v1809 = vpop.f32.mrb[0].mxu0
      %v1810 = vadd.f32 0.0, %v1809
      %v1811 = vpop.f32.mrb[0].mxu0
      %1812 = vmatprep.mubr.bf16.mxu0 %v1298
      %1813 = vmatmul.mubr.bf16.gmra.mrb[0].mxu0 %v1033
      %v1814 = vpop.f32.mrb[0].mxu0
      %v1815 = vadd.f32 0.0, %v1814
      %v1816 = vpop.f32.mrb[0].mxu0
      %v1817 = vpop.f32.mrb[0].mxu0
      %v1818 = vadd.f32 0.0, %v1817
      %v1819 = vpop.f32.mrb[0].mxu0
      %1820 = vmatprep.mubr.bf16.mxu0 %v1306
      %1821 = vmatmul.mubr.bf16.gmra.mrb[0].mxu0 %v1034
      %v1822 = vpop.f32.mrb[0].mxu0
      %v1823 = vadd.f32 0.0, %v1822
      %v1824 = vpop.f32.mrb[0].mxu0
      %v1825 = vpop.f32.mrb[0].mxu0
      %v1826 = vadd.f32 0.0, %v1825
      %v1827 = vpop.f32.mrb[0].mxu0
      %1828 = vdwg.mxu0
      %1829 = vmatprep.subr.bf16.mxu0 0
      %1830 = vmatpush1.bf16.msra.mxu0 %v1572
      %1831 = vmatprep.subr.bf16.mxu0 0
      %1832 = vmatpush1.bf16.msra.mxu0 %v1573
      %1833 = vmatprep.subr.bf16.mxu0 0
      %1834 = vmatpush1.bf16.msra.mxu0 %v1574
      %1835 = vmatprep.subr.bf16.mxu0 0
      %1836 = vmatpush1.bf16.msra.mxu0 %v1575
      %1837 = vmatprep.subr.bf16.mxu0 0
      %1838 = vmatpush1.bf16.msra.mxu0 %v1576
      %1839 = vmatprep.subr.bf16.mxu0 0
      %1840 = vmatpush1.bf16.msra.mxu0 %v1577
      %1841 = vmatprep.subr.bf16.mxu0 0
      %1842 = vmatpush1.bf16.msra.mxu0 %v1578
      %1843 = vmatprep.subr.bf16.mxu0 0
      %1844 = vmatpush1.bf16.msra.mxu0 %v1579
      %1845 = vmatprep.subr.bf16.mxu0 0
      %1846 = vmatpush1.bf16.msra.mxu0 0
      %1847 = vmatprep.subr.bf16.mxu0 0
      %1848 = vmatpush1.bf16.msra.mxu0 0
      %1849 = vmatprep.subr.bf16.mxu0 0
      %1850 = vmatpush1.bf16.msra.mxu0 0
      %1851 = vmatprep.subr.bf16.mxu0 0
      %1852 = vmatpush1.bf16.msra.mxu0 0
      %1853 = vmatprep.subr.bf16.mxu0 0
      %1854 = vmatpush1.bf16.msra.mxu0 0
      %1855 = vmatprep.subr.bf16.mxu0 0
      %1856 = vmatpush1.bf16.msra.mxu0 0
      %1857 = vmatprep.subr.bf16.mxu0 0
      %1858 = vmatpush1.bf16.msra.mxu0 0
      %1859 = vmatprep.subr.bf16.mxu0 0
      %1860 = vmatpush1.bf16.msra.mxu0 0
      %1861 = vmatprep.mubr.bf16.mxu0 0
      %1862 = vmatmul.mubr.bf16.gmra.mrb[0].mxu0 %v1333
      %v1863 = vpop.f32.mrb[0].mxu0
      %v1864 = vadd.f32 %v1639, %v1863
      %v1865 = vpop.f32.mrb[0].mxu0
      %v1866 = vpop.f32.mrb[0].mxu0
      %v1867 = vadd.f32 %v1642, %v1866
      %v1868 = vpop.f32.mrb[0].mxu0
      %1869 = vmatprep.mubr.bf16.mxu0 0
      %1870 = vmatmul.mubr.bf16.gmra.mrb[0].mxu0 %v1335
      %v1871 = vpop.f32.mrb[0].mxu0
      %v1872 = vadd.f32 %v1647, %v1871
      %v1873 = vpop.f32.mrb[0].mxu0
      %v1874 = vpop.f32.mrb[0].mxu0
      %v1875 = vadd.f32 %v1650, %v1874
      %v1876 = vpop.f32.mrb[0].mxu0
      %1877 = vmatprep.mubr.bf16.mxu0 0
      %1878 = vmatmul.mubr.bf16.gmra.mrb[0].mxu0 %v1337
      %v1879 = vpop.f32.mrb[0].mxu0
      %v1880 = vadd.f32 %v1655, %v1879
      %v1881 = vpop.f32.mrb[0].mxu0
      %v1882 = vpop.f32.mrb[0].mxu0
      %v1883 = vadd.f32 %v1658, %v1882
      %v1884 = vpop.f32.mrb[0].mxu0
      %1885 = vmatprep.mubr.bf16.mxu0 0
      %1886 = vmatmul.mubr.bf16.gmra.mrb[0].mxu0 %v1340
      %v1887 = vpop.f32.mrb[0].mxu0
      %v1888 = vadd.f32 %v1663, %v1887
      %v1889 = vpop.f32.mrb[0].mxu0
      %v1890 = vpop.f32.mrb[0].mxu0
      %v1891 = vadd.f32 %v1666, %v1890
      %v1892 = vpop.f32.mrb[0].mxu0
      %1893 = vmatprep.mubr.bf16.mxu0 0
      %1894 = vmatmul.mubr.bf16.gmra.mrb[0].mxu0 %v1342
      %v1895 = vpop.f32.mrb[0].mxu0
      %v1896 = vadd.f32 %v1671, %v1895
      %v1897 = vpop.f32.mrb[0].mxu0
      %v1898 = vpop.f32.mrb[0].mxu0
      %v1899 = vadd.f32 %v1674, %v1898
      %v1900 = vpop.f32.mrb[0].mxu0
      %1901 = vmatprep.mubr.bf16.mxu0 0
      %1902 = vmatmul.mubr.bf16.gmra.mrb[0].mxu0 %v1344
      %v1903 = vpop.f32.mrb[0].mxu0
      %v1904 = vadd.f32 %v1679, %v1903
      %v1905 = vpop.f32.mrb[0].mxu0
      %v1906 = vpop.f32.mrb[0].mxu0
      %v1907 = vadd.f32 %v1682, %v1906
      %v1908 = vpop.f32.mrb[0].mxu0
      %1909 = vmatprep.mubr.bf16.mxu0 0
      %1910 = vmatmul.mubr.bf16.gmra.mrb[0].mxu0 %v1347
      %v1911 = vpop.f32.mrb[0].mxu0
      %v1912 = vadd.f32 %v1687, %v1911
      %v1913 = vpop.f32.mrb[0].mxu0
      %v1914 = vpop.f32.mrb[0].mxu0
      %v1915 = vadd.f32 %v1690, %v1914
      %v1916 = vpop.f32.mrb[0].mxu0
      %1917 = vmatprep.mubr.bf16.mxu0 0
      %1918 = vmatmul.mubr.bf16.gmra.mrb[0].mxu0 %v1349
      %v1919 = vpop.f32.mrb[0].mxu0
      %v1920 = vadd.f32 %v1695, %v1919
      %v1921 = vpop.f32.mrb[0].mxu0
      %v1922 = vpop.f32.mrb[0].mxu0
      %v1923 = vadd.f32 %v1698, %v1922
      %v1924 = vpop.f32.mrb[0].mxu0
      %1925 = vmatprep.mubr.bf16.mxu0 0
      %1926 = vmatmul.mubr.bf16.gmra.mrb[0].mxu0 %v1351
      %v1927 = vpop.f32.mrb[0].mxu0
      %v1928 = vadd.f32 %v1703, %v1927
      %v1929 = vpop.f32.mrb[0].mxu0
      %v1930 = vpop.f32.mrb[0].mxu0
      %v1931 = vadd.f32 %v1706, %v1930
      %v1932 = vpop.f32.mrb[0].mxu0
      %1933 = vmatprep.mubr.bf16.mxu0 0
      %1934 = vmatmul.mubr.bf16.gmra.mrb[0].mxu0 %v1354
      %v1935 = vpop.f32.mrb[0].mxu0
      %v1936 = vadd.f32 %v1711, %v1935
      %v1937 = vpop.f32.mrb[0].mxu0
      %v1938 = vpop.f32.mrb[0].mxu0
      %v1939 = vadd.f32 %v1714, %v1938
      %v1940 = vpop.f32.mrb[0].mxu0
      %1941 = vmatprep.mubr.bf16.mxu0 0
      %1942 = vmatmul.mubr.bf16.gmra.mrb[0].mxu0 %v1356
      %v1943 = vpop.f32.mrb[0].mxu0
      %v1944 = vadd.f32 %v1719, %v1943
      %v1945 = vpop.f32.mrb[0].mxu0
      %v1946 = vpop.f32.mrb[0].mxu0
      %v1947 = vadd.f32 %v1722, %v1946
      %v1948 = vpop.f32.mrb[0].mxu0
      %1949 = vmatprep.mubr.bf16.mxu0 0
      %1950 = vmatmul.mubr.bf16.gmra.mrb[0].mxu0 %v1358
      %v1951 = vpop.f32.mrb[0].mxu0
      %v1952 = vadd.f32 %v1727, %v1951
      %v1953 = vpop.f32.mrb[0].mxu0
      %v1954 = vpop.f32.mrb[0].mxu0
      %v1955 = vadd.f32 %v1730, %v1954
      %v1956 = vpop.f32.mrb[0].mxu0
      %1957 = vmatprep.mubr.bf16.mxu0 0
      %1958 = vmatmul.mubr.bf16.gmra.mrb[0].mxu0 %v1361
      %v1959 = vpop.f32.mrb[0].mxu0
      %v1960 = vadd.f32 %v1735, %v1959
      %v1961 = vpop.f32.mrb[0].mxu0
      %v1962 = vpop.f32.mrb[0].mxu0
      %v1963 = vadd.f32 %v1738, %v1962
      %v1964 = vpop.f32.mrb[0].mxu0
      %1965 = vmatprep.mubr.bf16.mxu0 0
      %1966 = vmatmul.mubr.bf16.gmra.mrb[0].mxu0 %v1363
      %v1967 = vpop.f32.mrb[0].mxu0
      %v1968 = vadd.f32 %v1743, %v1967
      %v1969 = vpop.f32.mrb[0].mxu0
      %v1970 = vpop.f32.mrb[0].mxu0
      %v1971 = vadd.f32 %v1746, %v1970
      %v1972 = vpop.f32.mrb[0].mxu0
      %1973 = vmatprep.mubr.bf16.mxu0 0
      %1974 = vmatmul.mubr.bf16.gmra.mrb[0].mxu0 %v1365
      %v1975 = vpop.f32.mrb[0].mxu0
      %v1976 = vadd.f32 %v1751, %v1975
      %v1977 = vpop.f32.mrb[0].mxu0
      %v1978 = vpop.f32.mrb[0].mxu0
      %v1979 = vadd.f32 %v1754, %v1978
      %v1980 = vpop.f32.mrb[0].mxu0
      %1981 = vmatprep.mubr.bf16.mxu0 0
      %1982 = vmatmul.mubr.bf16.gmra.mrb[0].mxu0 %v1368
      %v1983 = vpop.f32.mrb[0].mxu0
      %v1984 = vadd.f32 %v1759, %v1983
      %v1985 = vpop.f32.mrb[0].mxu0
      %v1986 = vpop.f32.mrb[0].mxu0
      %v1987 = vadd.f32 %v1762, %v1986
      %v1988 = vpop.f32.mrb[0].mxu0
      %1989 = vmatprep.mubr.bf16.mxu0 0
      %1990 = vmatmul.mubr.bf16.gmra.mrb[0].mxu0 %v1370
      %v1991 = vpop.f32.mrb[0].mxu0
      %v1992 = vadd.f32 %v1767, %v1991
      %v1993 = vpop.f32.mrb[0].mxu0
      %v1994 = vpop.f32.mrb[0].mxu0
      %v1995 = vadd.f32 %v1770, %v1994
      %v1996 = vpop.f32.mrb[0].mxu0
      %1997 = vmatprep.mubr.bf16.mxu0 0
      %1998 = vmatmul.mubr.bf16.gmra.mrb[0].mxu0 %v1372
      %v1999 = vpop.f32.mrb[0].mxu0
      %v2000 = vadd.f32 %v1775, %v1999
      %v2001 = vpop.f32.mrb[0].mxu0
      %v2002 = vpop.f32.mrb[0].mxu0
      %v2003 = vadd.f32 %v1778, %v2002
      %v2004 = vpop.f32.mrb[0].mxu0
      %2005 = vmatprep.mubr.bf16.mxu0 0
      %2006 = vmatmul.mubr.bf16.gmra.mrb[0].mxu0 %v1375
      %v2007 = vpop.f32.mrb[0].mxu0
      %v2008 = vadd.f32 %v1783, %v2007
      %v2009 = vpop.f32.mrb[0].mxu0
      %v2010 = vpop.f32.mrb[0].mxu0
      %v2011 = vadd.f32 %v1786, %v2010
      %v2012 = vpop.f32.mrb[0].mxu0
      %2013 = vmatprep.mubr.bf16.mxu0 0
      %2014 = vmatmul.mubr.bf16.gmra.mrb[0].mxu0 %v1377
      %v2015 = vpop.f32.mrb[0].mxu0
      %v2016 = vadd.f32 %v1791, %v2015
      %v2017 = vpop.f32.mrb[0].mxu0
      %v2018 = vpop.f32.mrb[0].mxu0
      %v2019 = vadd.f32 %v1794, %v2018
      %v2020 = vpop.f32.mrb[0].mxu0
      %2021 = vmatprep.mubr.bf16.mxu0 0
      %2022 = vmatmul.mubr.bf16.gmra.mrb[0].mxu0 %v1379
      %v2023 = vpop.f32.mrb[0].mxu0
      %v2024 = vadd.f32 %v1799, %v2023
      %v2025 = vpop.f32.mrb[0].mxu0
      %v2026 = vpop.f32.mrb[0].mxu0
      %v2027 = vadd.f32 %v1802, %v2026
      %v2028 = vpop.f32.mrb[0].mxu0
      %2029 = vmatprep.mubr.bf16.mxu0 0
      %2030 = vmatmul.mubr.bf16.gmra.mrb[0].mxu0 %v1382
      %v2031 = vpop.f32.mrb[0].mxu0
      %v2032 = vadd.f32 %v1807, %v2031
      %v2033 = vpop.f32.mrb[0].mxu0
      %v2034 = vpop.f32.mrb[0].mxu0
      %v2035 = vadd.f32 %v1810, %v2034
      %v2036 = vpop.f32.mrb[0].mxu0
      %2037 = vmatprep.mubr.bf16.mxu0 0
      %2038 = vmatmul.mubr.bf16.gmra.mrb[0].mxu0 %v1384
      %v2039 = vpop.f32.mrb[0].mxu0
      %v2040 = vadd.f32 %v1815, %v2039
      %v2041 = vpop.f32.mrb[0].mxu0
      %v2042 = vpop.f32.mrb[0].mxu0
      %v2043 = vadd.f32 %v1818, %v2042
      %v2044 = vpop.f32.mrb[0].mxu0
      %2045 = vmatprep.mubr.bf16.mxu0 0
      %2046 = vmatmul.mubr.bf16.gmra.mrb[0].mxu0 %v1386
      %v2047 = vpop.f32.mrb[0].mxu0
      %v2048 = vadd.f32 %v1823, %v2047
      %v2049 = vpop.f32.mrb[0].mxu0
      %v2050 = vpop.f32.mrb[0].mxu0
      %v2051 = vadd.f32 %v1826, %v2050
      %v2052 = vpop.f32.mrb[0].mxu0
      %2053 = vdwg.mxu0
      %v2102 = vunpack.c.l.b16 %v807
      %v2103 = vunpack.c.l.b16 %v808
      %v2104 = vunpack.c.l.b16 %v809
      %v2105 = vunpack.c.l.b16 %v810
      %v2106 = vunpack.c.l.b16 %v811
      %v2107 = vunpack.c.l.b16 %v812
      %v2108 = vunpack.c.l.b16 %v813
      %v2109 = vunpack.c.l.b16 %v814
      %v2110 = vunpack.c.l.b16 %v815
      %v2111 = vunpack.c.l.b16 %v816
      %v2112 = vunpack.c.l.b16 %v817
      %v2113 = vunpack.c.l.b16 %v818
      %v2114 = vunpack.c.l.b16 %v819
      %v2115 = vunpack.c.l.b16 %v820
      %v2116 = vunpack.c.l.b16 %v821
      %v2117 = vunpack.c.l.b16 %v822
      %v2118 = vunpack.c.l.b16 %v823
      %v2119 = vunpack.c.l.b16 %v824
      %v2120 = vunpack.c.l.b16 %v825
      %v2121 = vunpack.c.l.b16 %v826
      %v2122 = vunpack.c.l.b16 %v827
      %v2123 = vunpack.c.l.b16 %v828
      %v2124 = vunpack.c.l.b16 %v829
      %v2125 = vunpack.c.l.b16 %v830
      %v2126 = vunpack.c.l.b16 %v831
      %v2127 = vunpack.c.l.b16 %v832
      %v2128 = vunpack.c.l.b16 %v833
      %v2129 = vunpack.c.l.b16 %v834
      %v2130 = vunpack.c.l.b16 %v835
      %v2131 = vunpack.c.l.b16 %v836
      %v2132 = vunpack.c.l.b16 %v837
      %v2133 = vunpack.c.l.b16 %v838
      %v2134 = vunpack.c.l.b16 %v839
      %v2135 = vunpack.c.l.b16 %v840
      %v2136 = vunpack.c.l.b16 %v841
      %v2137 = vunpack.c.l.b16 %v842
      %v2138 = vunpack.c.l.b16 %v843
      %v2139 = vunpack.c.l.b16 %v844
      %v2140 = vunpack.c.l.b16 %v845
      %v2141 = vunpack.c.l.b16 %v846
      %v2142 = vunpack.c.l.b16 %v847
      %v2143 = vunpack.c.l.b16 %v848
      %v2144 = vunpack.c.l.b16 %v849
      %v2145 = vunpack.c.l.b16 %v850
      %v2146 = vunpack.c.l.b16 %v851
      %v2147 = vunpack.c.l.b16 %v852
      %v2148 = vunpack.c.l.b16 %v853
      %v2149 = vunpack.c.l.b16 %v854
      %v2150 = vpack.c.b16 %v2103, %v2102
      %v2151 = vpack.c.b16 %v2105, %v2104
      %v2152 = vpack.c.b16 %v2107, %v2106
      %v2153 = vpack.c.b16 %v2109, %v2108
      %v2154 = vpack.c.b16 %v2111, %v2110
      %v2155 = vpack.c.b16 %v2113, %v2112
      %v2156 = vpack.c.b16 %v2115, %v2114
      %v2157 = vpack.c.b16 %v2117, %v2116
      %v2158 = vpack.c.b16 %v2119, %v2118
      %v2159 = vpack.c.b16 %v2121, %v2120
      %v2160 = vpack.c.b16 %v2123, %v2122
      %v2161 = vpack.c.b16 %v2125, %v2124
      %v2162 = vpack.c.b16 %v2127, %v2126
      %v2163 = vpack.c.b16 %v2129, %v2128
      %v2164 = vpack.c.b16 %v2131, %v2130
      %v2165 = vpack.c.b16 %v2133, %v2132
      %v2166 = vpack.c.b16 %v2135, %v2134
      %v2167 = vpack.c.b16 %v2137, %v2136
      %v2168 = vpack.c.b16 %v2139, %v2138
      %v2169 = vpack.c.b16 %v2141, %v2140
      %v2170 = vpack.c.b16 %v2143, %v2142
      %v2171 = vpack.c.b16 %v2145, %v2144
      %v2172 = vpack.c.b16 %v2147, %v2146
      %v2173 = vpack.c.b16 %v2149, %v2148
      %2198 = vmatprep.subr.bf16.mxu0 0
      %2199 = vmatpush1.bf16.msra.mxu0 %v2150
      %2200 = vmatprep.subr.bf16.mxu0 0
      %2201 = vmatpush1.bf16.msra.mxu0 %v2151
      %2202 = vmatprep.subr.bf16.mxu0 0
      %2203 = vmatpush1.bf16.msra.mxu0 %v2152
      %2204 = vmatprep.subr.bf16.mxu0 0
      %2205 = vmatpush1.bf16.msra.mxu0 %v2153
      %2206 = vmatprep.subr.bf16.mxu0 0
      %2207 = vmatpush1.bf16.msra.mxu0 %v2154
      %2208 = vmatprep.subr.bf16.mxu0 0
      %2209 = vmatpush1.bf16.msra.mxu0 %v2155
      %2210 = vmatprep.subr.bf16.mxu0 0
      %2211 = vmatpush1.bf16.msra.mxu0 %v2156
      %2212 = vmatprep.subr.bf16.mxu0 0
      %2213 = vmatpush1.bf16.msra.mxu0 %v2157
      %2214 = vmatprep.subr.bf16.mxu0 0
      %2215 = vmatpush1.bf16.msra.mxu0 %v2158
      %2216 = vmatprep.subr.bf16.mxu0 0
      %2217 = vmatpush1.bf16.msra.mxu0 %v2159
      %2218 = vmatprep.subr.bf16.mxu0 0
      %2219 = vmatpush1.bf16.msra.mxu0 %v2160
      %2220 = vmatprep.subr.bf16.mxu0 0
      %2221 = vmatpush1.bf16.msra.mxu0 %v2161
      %2222 = vmatprep.subr.bf16.mxu0 0
      %2223 = vmatpush1.bf16.msra.mxu0 %v2162
      %2224 = vmatprep.subr.bf16.mxu0 0
      %2225 = vmatpush1.bf16.msra.mxu0 %v2163
      %2226 = vmatprep.subr.bf16.mxu0 0
      %2227 = vmatpush1.bf16.msra.mxu0 %v2164
      %2228 = vmatprep.subr.bf16.mxu0 0
      %2229 = vmatpush1.bf16.msra.mxu0 %v2165
      %2230 = vmatprep.mubr.bf16.mxu0 %v489
      %2231 = vmatmul.mubr.bf16.gmra.mrb[0].mxu0 %v405
      %v2232 = vpop.f32.mrb[0].mxu0
      %v2233 = vadd.f32 %v1864, %v2232
      %v2234 = vpop.f32.mrb[0].mxu0
      %v2235 = vpop.f32.mrb[0].mxu0
      %v2236 = vadd.f32 %v1867, %v2235
      %v2237 = vpop.f32.mrb[0].mxu0
      %2238 = vmatprep.mubr.bf16.mxu0 %v497
      %2239 = vmatmul.mubr.bf16.gmra.mrb[0].mxu0 %v406
      %v2240 = vpop.f32.mrb[0].mxu0
      %v2241 = vadd.f32 %v1872, %v2240
      %v2242 = vpop.f32.mrb[0].mxu0
      %v2243 = vpop.f32.mrb[0].mxu0
      %v2244 = vadd.f32 %v1875, %v2243
      %v2245 = vpop.f32.mrb[0].mxu0
      %2246 = vmatprep.mubr.bf16.mxu0 %v505
      %2247 = vmatmul.mubr.bf16.gmra.mrb[0].mxu0 %v407
      %v2248 = vpop.f32.mrb[0].mxu0
      %v2249 = vadd.f32 %v1880, %v2248
      %v2250 = vpop.f32.mrb[0].mxu0
      %v2251 = vpop.f32.mrb[0].mxu0
      %v2252 = vadd.f32 %v1883, %v2251
      %v2253 = vpop.f32.mrb[0].mxu0
      %2254 = vmatprep.mubr.bf16.mxu0 %v517
      %2255 = vmatmul.mubr.bf16.gmra.mrb[0].mxu0 %v408
      %v2256 = vpop.f32.mrb[0].mxu0
      %v2257 = vadd.f32 %v1888, %v2256
      %v2258 = vpop.f32.mrb[0].mxu0
      %v2259 = vpop.f32.mrb[0].mxu0
      %v2260 = vadd.f32 %v1891, %v2259
      %v2261 = vpop.f32.mrb[0].mxu0
      %2262 = vmatprep.mubr.bf16.mxu0 %v525
      %2263 = vmatmul.mubr.bf16.gmra.mrb[0].mxu0 %v409
      %v2264 = vpop.f32.mrb[0].mxu0
      %v2265 = vadd.f32 %v1896, %v2264
      %v2266 = vpop.f32.mrb[0].mxu0
      %v2267 = vpop.f32.mrb[0].mxu0
      %v2268 = vadd.f32 %v1899, %v2267
      %v2269 = vpop.f32.mrb[0].mxu0
      %2270 = vmatprep.mubr.bf16.mxu0 %v533
      %2271 = vmatmul.mubr.bf16.gmra.mrb[0].mxu0 %v410
      %v2272 = vpop.f32.mrb[0].mxu0
      %v2273 = vadd.f32 %v1904, %v2272
      %v2274 = vpop.f32.mrb[0].mxu0
      %v2275 = vpop.f32.mrb[0].mxu0
      %v2276 = vadd.f32 %v1907, %v2275
      %v2277 = vpop.f32.mrb[0].mxu0
      %2278 = vmatprep.mubr.bf16.mxu0 %v545
      %2279 = vmatmul.mubr.bf16.gmra.mrb[0].mxu0 %v411
      %v2280 = vpop.f32.mrb[0].mxu0
      %v2281 = vadd.f32 %v1912, %v2280
      %v2282 = vpop.f32.mrb[0].mxu0
      %v2283 = vpop.f32.mrb[0].mxu0
      %v2284 = vadd.f32 %v1915, %v2283
      %v2285 = vpop.f32.mrb[0].mxu0
      %2286 = vmatprep.mubr.bf16.mxu0 %v553
      %2287 = vmatmul.mubr.bf16.gmra.mrb[0].mxu0 %v412
      %v2288 = vpop.f32.mrb[0].mxu0
      %v2289 = vadd.f32 %v1920, %v2288
      %v2290 = vpop.f32.mrb[0].mxu0
      %v2291 = vpop.f32.mrb[0].mxu0
      %v2292 = vadd.f32 %v1923, %v2291
      %v2293 = vpop.f32.mrb[0].mxu0
      %2294 = vmatprep.mubr.bf16.mxu0 %v561
      %2295 = vmatmul.mubr.bf16.gmra.mrb[0].mxu0 %v413
      %v2296 = vpop.f32.mrb[0].mxu0
      %v2297 = vadd.f32 %v1928, %v2296
      %v2298 = vpop.f32.mrb[0].mxu0
      %v2299 = vpop.f32.mrb[0].mxu0
      %v2300 = vadd.f32 %v1931, %v2299
      %v2301 = vpop.f32.mrb[0].mxu0
      %2302 = vmatprep.mubr.bf16.mxu0 %v573
      %2303 = vmatmul.mubr.bf16.gmra.mrb[0].mxu0 %v414
      %v2304 = vpop.f32.mrb[0].mxu0
      %v2305 = vadd.f32 %v1936, %v2304
      %v2306 = vpop.f32.mrb[0].mxu0
      %v2307 = vpop.f32.mrb[0].mxu0
      %v2308 = vadd.f32 %v1939, %v2307
      %v2309 = vpop.f32.mrb[0].mxu0
      %2310 = vmatprep.mubr.bf16.mxu0 %v581
      %2311 = vmatmul.mubr.bf16.gmra.mrb[0].mxu0 %v415
      %v2312 = vpop.f32.mrb[0].mxu0
      %v2313 = vadd.f32 %v1944, %v2312
      %v2314 = vpop.f32.mrb[0].mxu0
      %v2315 = vpop.f32.mrb[0].mxu0
      %v2316 = vadd.f32 %v1947, %v2315
      %v2317 = vpop.f32.mrb[0].mxu0
      %2318 = vmatprep.mubr.bf16.mxu0 %v589
      %2319 = vmatmul.mubr.bf16.gmra.mrb[0].mxu0 %v416
      %v2320 = vpop.f32.mrb[0].mxu0
      %v2321 = vadd.f32 %v1952, %v2320
      %v2322 = vpop.f32.mrb[0].mxu0
      %v2323 = vpop.f32.mrb[0].mxu0
      %v2324 = vadd.f32 %v1955, %v2323
      %v2325 = vpop.f32.mrb[0].mxu0
      %2326 = vmatprep.mubr.bf16.mxu0 %v601
      %2327 = vmatmul.mubr.bf16.gmra.mrb[0].mxu0 %v417
      %v2328 = vpop.f32.mrb[0].mxu0
      %v2329 = vadd.f32 %v1960, %v2328
      %v2330 = vpop.f32.mrb[0].mxu0
      %v2331 = vpop.f32.mrb[0].mxu0
      %v2332 = vadd.f32 %v1963, %v2331
      %v2333 = vpop.f32.mrb[0].mxu0
      %2334 = vmatprep.mubr.bf16.mxu0 %v609
      %2335 = vmatmul.mubr.bf16.gmra.mrb[0].mxu0 %v418
      %v2336 = vpop.f32.mrb[0].mxu0
      %v2337 = vadd.f32 %v1968, %v2336
      %v2338 = vpop.f32.mrb[0].mxu0
      %v2339 = vpop.f32.mrb[0].mxu0
      %v2340 = vadd.f32 %v1971, %v2339
      %v2341 = vpop.f32.mrb[0].mxu0
      %2342 = vmatprep.mubr.bf16.mxu0 %v617
      %2343 = vmatmul.mubr.bf16.gmra.mrb[0].mxu0 %v419
      %v2344 = vpop.f32.mrb[0].mxu0
      %v2345 = vadd.f32 %v1976, %v2344
      %v2346 = vpop.f32.mrb[0].mxu0
      %v2347 = vpop.f32.mrb[0].mxu0
      %v2348 = vadd.f32 %v1979, %v2347
      %v2349 = vpop.f32.mrb[0].mxu0
      %2350 = vmatprep.mubr.bf16.mxu0 %v629
      %2351 = vmatmul.mubr.bf16.gmra.mrb[0].mxu0 %v420
      %v2352 = vpop.f32.mrb[0].mxu0
      %v2353 = vadd.f32 %v1984, %v2352
      %v2354 = vpop.f32.mrb[0].mxu0
      %v2355 = vpop.f32.mrb[0].mxu0
      %v2356 = vadd.f32 %v1987, %v2355
      %v2357 = vpop.f32.mrb[0].mxu0
      %2358 = vmatprep.mubr.bf16.mxu0 %v637
      %2359 = vmatmul.mubr.bf16.gmra.mrb[0].mxu0 %v421
      %v2360 = vpop.f32.mrb[0].mxu0
      %v2361 = vadd.f32 %v1992, %v2360
      %v2362 = vpop.f32.mrb[0].mxu0
      %v2363 = vpop.f32.mrb[0].mxu0
      %v2364 = vadd.f32 %v1995, %v2363
      %v2365 = vpop.f32.mrb[0].mxu0
      %2366 = vmatprep.mubr.bf16.mxu0 %v645
      %2367 = vmatmul.mubr.bf16.gmra.mrb[0].mxu0 %v422
      %v2368 = vpop.f32.mrb[0].mxu0
      %v2369 = vadd.f32 %v2000, %v2368
      %v2370 = vpop.f32.mrb[0].mxu0
      %v2371 = vpop.f32.mrb[0].mxu0
      %v2372 = vadd.f32 %v2003, %v2371
      %v2373 = vpop.f32.mrb[0].mxu0
      %2374 = vmatprep.mubr.bf16.mxu0 %v657
      %2375 = vmatmul.mubr.bf16.gmra.mrb[0].mxu0 %v423
      %v2376 = vpop.f32.mrb[0].mxu0
      %v2377 = vadd.f32 %v2008, %v2376
      %v2378 = vpop.f32.mrb[0].mxu0
      %v2379 = vpop.f32.mrb[0].mxu0
      %v2380 = vadd.f32 %v2011, %v2379
      %v2381 = vpop.f32.mrb[0].mxu0
      %2382 = vmatprep.mubr.bf16.mxu0 %v665
      %2383 = vmatmul.mubr.bf16.gmra.mrb[0].mxu0 %v424
      %v2384 = vpop.f32.mrb[0].mxu0
      %v2385 = vadd.f32 %v2016, %v2384
      %v2386 = vpop.f32.mrb[0].mxu0
      %v2387 = vpop.f32.mrb[0].mxu0
      %v2388 = vadd.f32 %v2019, %v2387
      %v2389 = vpop.f32.mrb[0].mxu0
      %2390 = vmatprep.mubr.bf16.mxu0 %v673
      %2391 = vmatmul.mubr.bf16.gmra.mrb[0].mxu0 %v425
      %v2392 = vpop.f32.mrb[0].mxu0
      %v2393 = vadd.f32 %v2024, %v2392
      %v2394 = vpop.f32.mrb[0].mxu0
      %v2395 = vpop.f32.mrb[0].mxu0
      %v2396 = vadd.f32 %v2027, %v2395
      %v2397 = vpop.f32.mrb[0].mxu0
      %2398 = vmatprep.mubr.bf16.mxu0 %v685
      %2399 = vmatmul.mubr.bf16.gmra.mrb[0].mxu0 %v426
      %v2400 = vpop.f32.mrb[0].mxu0
      %v2401 = vadd.f32 %v2032, %v2400
      %v2402 = vpop.f32.mrb[0].mxu0
      %v2403 = vpop.f32.mrb[0].mxu0
      %v2404 = vadd.f32 %v2035, %v2403
      %v2405 = vpop.f32.mrb[0].mxu0
      %2406 = vmatprep.mubr.bf16.mxu0 %v693
      %2407 = vmatmul.mubr.bf16.gmra.mrb[0].mxu0 %v427
      %v2408 = vpop.f32.mrb[0].mxu0
      %v2409 = vadd.f32 %v2040, %v2408
      %v2410 = vpop.f32.mrb[0].mxu0
      %v2411 = vpop.f32.mrb[0].mxu0
      %v2412 = vadd.f32 %v2043, %v2411
      %v2413 = vpop.f32.mrb[0].mxu0
      %2414 = vmatprep.mubr.bf16.mxu0 %v701
      %2415 = vmatmul.mubr.bf16.gmra.mrb[0].mxu0 %v428
      %v2416 = vpop.f32.mrb[0].mxu0
      %v2417 = vadd.f32 %v2048, %v2416
      %v2418 = vpop.f32.mrb[0].mxu0
      %v2419 = vpop.f32.mrb[0].mxu0
      %v2420 = vadd.f32 %v2051, %v2419
      %v2421 = vpop.f32.mrb[0].mxu0
      %2422 = vdwg.mxu0
      %2423 = vmatprep.subr.bf16.mxu0 0
      %2424 = vmatpush1.bf16.msra.mxu0 %v2166
      %2425 = vmatprep.subr.bf16.mxu0 0
      %2426 = vmatpush1.bf16.msra.mxu0 %v2167
      %2427 = vmatprep.subr.bf16.mxu0 0
      %2428 = vmatpush1.bf16.msra.mxu0 %v2168
      %2429 = vmatprep.subr.bf16.mxu0 0
      %2430 = vmatpush1.bf16.msra.mxu0 %v2169
      %2431 = vmatprep.subr.bf16.mxu0 0
      %2432 = vmatpush1.bf16.msra.mxu0 %v2170
      %2433 = vmatprep.subr.bf16.mxu0 0
      %2434 = vmatpush1.bf16.msra.mxu0 %v2171
      %2435 = vmatprep.subr.bf16.mxu0 0
      %2436 = vmatpush1.bf16.msra.mxu0 %v2172
      %2437 = vmatprep.subr.bf16.mxu0 0
      %2438 = vmatpush1.bf16.msra.mxu0 %v2173
      %2439 = vmatprep.subr.bf16.mxu0 0
      %2440 = vmatpush1.bf16.msra.mxu0 0
      %2441 = vmatprep.subr.bf16.mxu0 0
      %2442 = vmatpush1.bf16.msra.mxu0 0
      %2443 = vmatprep.subr.bf16.mxu0 0
      %2444 = vmatpush1.bf16.msra.mxu0 0
      %2445 = vmatprep.subr.bf16.mxu0 0
      %2446 = vmatpush1.bf16.msra.mxu0 0
      %2447 = vmatprep.subr.bf16.mxu0 0
      %2448 = vmatpush1.bf16.msra.mxu0 0
      %2449 = vmatprep.subr.bf16.mxu0 0
      %2450 = vmatpush1.bf16.msra.mxu0 0
      %2451 = vmatprep.subr.bf16.mxu0 0
      %2452 = vmatpush1.bf16.msra.mxu0 0
      %2453 = vmatprep.subr.bf16.mxu0 0
      %2454 = vmatpush1.bf16.msra.mxu0 0
      %2455 = vmatprep.mubr.bf16.mxu0 0
      %2456 = vmatmul.mubr.bf16.gmra.mrb[0].mxu0 %v729
      %v2457 = vpop.f32.mrb[0].mxu0
      %v2458 = vadd.f32 %v2233, %v2457
      %v2459 = vpop.f32.mrb[0].mxu0
      %v2460 = vpop.f32.mrb[0].mxu0
      %v2461 = vadd.f32 %v2236, %v2460
      %v2462 = vpop.f32.mrb[0].mxu0
      %2463 = vmatprep.mubr.bf16.mxu0 0
      %2464 = vmatmul.mubr.bf16.gmra.mrb[0].mxu0 %v731
      %v2465 = vpop.f32.mrb[0].mxu0
      %v2466 = vadd.f32 %v2241, %v2465
      %v2467 = vpop.f32.mrb[0].mxu0
      %v2468 = vpop.f32.mrb[0].mxu0
      %v2469 = vadd.f32 %v2244, %v2468
      %v2470 = vpop.f32.mrb[0].mxu0
      %2471 = vmatprep.mubr.bf16.mxu0 0
      %2472 = vmatmul.mubr.bf16.gmra.mrb[0].mxu0 %v733
      %v2473 = vpop.f32.mrb[0].mxu0
      %v2474 = vadd.f32 %v2249, %v2473
      %v2475 = vpop.f32.mrb[0].mxu0
      %v2476 = vpop.f32.mrb[0].mxu0
      %v2477 = vadd.f32 %v2252, %v2476
      %v2478 = vpop.f32.mrb[0].mxu0
      %2479 = vmatprep.mubr.bf16.mxu0 0
      %2480 = vmatmul.mubr.bf16.gmra.mrb[0].mxu0 %v736
      %v2481 = vpop.f32.mrb[0].mxu0
      %v2482 = vadd.f32 %v2257, %v2481
      %v2483 = vpop.f32.mrb[0].mxu0
      %v2484 = vpop.f32.mrb[0].mxu0
      %v2485 = vadd.f32 %v2260, %v2484
      %v2486 = vpop.f32.mrb[0].mxu0
      %2487 = vmatprep.mubr.bf16.mxu0 0
      %2488 = vmatmul.mubr.bf16.gmra.mrb[0].mxu0 %v738
      %v2489 = vpop.f32.mrb[0].mxu0
      %v2490 = vadd.f32 %v2265, %v2489
      %v2491 = vpop.f32.mrb[0].mxu0
      %v2492 = vpop.f32.mrb[0].mxu0
      %v2493 = vadd.f32 %v2268, %v2492
      %v2494 = vpop.f32.mrb[0].mxu0
      %2495 = vmatprep.mubr.bf16.mxu0 0
      %2496 = vmatmul.mubr.bf16.gmra.mrb[0].mxu0 %v740
      %v2497 = vpop.f32.mrb[0].mxu0
      %v2498 = vadd.f32 %v2273, %v2497
      %v2499 = vpop.f32.mrb[0].mxu0
      %v2500 = vpop.f32.mrb[0].mxu0
      %v2501 = vadd.f32 %v2276, %v2500
      %v2502 = vpop.f32.mrb[0].mxu0
      %2503 = vmatprep.mubr.bf16.mxu0 0
      %2504 = vmatmul.mubr.bf16.gmra.mrb[0].mxu0 %v743
      %v2505 = vpop.f32.mrb[0].mxu0
      %v2506 = vadd.f32 %v2281, %v2505
      %v2507 = vpop.f32.mrb[0].mxu0
      %v2508 = vpop.f32.mrb[0].mxu0
      %v2509 = vadd.f32 %v2284, %v2508
      %v2510 = vpop.f32.mrb[0].mxu0
      %2511 = vmatprep.mubr.bf16.mxu0 0
      %2512 = vmatmul.mubr.bf16.gmra.mrb[0].mxu0 %v745
      %v2513 = vpop.f32.mrb[0].mxu0
      %v2514 = vadd.f32 %v2289, %v2513
      %v2515 = vpop.f32.mrb[0].mxu0
      %v2516 = vpop.f32.mrb[0].mxu0
      %v2517 = vadd.f32 %v2292, %v2516
      %v2518 = vpop.f32.mrb[0].mxu0
      %2519 = vmatprep.mubr.bf16.mxu0 0
      %2520 = vmatmul.mubr.bf16.gmra.mrb[0].mxu0 %v747
      %v2521 = vpop.f32.mrb[0].mxu0
      %v2522 = vadd.f32 %v2297, %v2521
      %v2523 = vpop.f32.mrb[0].mxu0
      %v2524 = vpop.f32.mrb[0].mxu0
      %v2525 = vadd.f32 %v2300, %v2524
      %v2526 = vpop.f32.mrb[0].mxu0
      %2527 = vmatprep.mubr.bf16.mxu0 0
      %2528 = vmatmul.mubr.bf16.gmra.mrb[0].mxu0 %v750
      %v2529 = vpop.f32.mrb[0].mxu0
      %v2530 = vadd.f32 %v2305, %v2529
      %v2531 = vpop.f32.mrb[0].mxu0
      %v2532 = vpop.f32.mrb[0].mxu0
      %v2533 = vadd.f32 %v2308, %v2532
      %v2534 = vpop.f32.mrb[0].mxu0
      %2535 = vmatprep.mubr.bf16.mxu0 0
      %2536 = vmatmul.mubr.bf16.gmra.mrb[0].mxu0 %v752
      %v2537 = vpop.f32.mrb[0].mxu0
      %v2538 = vadd.f32 %v2313, %v2537
      %v2539 = vpop.f32.mrb[0].mxu0
      %v2540 = vpop.f32.mrb[0].mxu0
      %v2541 = vadd.f32 %v2316, %v2540
      %v2542 = vpop.f32.mrb[0].mxu0
      %2543 = vmatprep.mubr.bf16.mxu0 0
      %2544 = vmatmul.mubr.bf16.gmra.mrb[0].mxu0 %v754
      %v2545 = vpop.f32.mrb[0].mxu0
      %v2546 = vadd.f32 %v2321, %v2545
      %v2547 = vpop.f32.mrb[0].mxu0
      %v2548 = vpop.f32.mrb[0].mxu0
      %v2549 = vadd.f32 %v2324, %v2548
      %v2550 = vpop.f32.mrb[0].mxu0
      %2551 = vmatprep.mubr.bf16.mxu0 0
      %2552 = vmatmul.mubr.bf16.gmra.mrb[0].mxu0 %v757
      %v2553 = vpop.f32.mrb[0].mxu0
      %v2554 = vadd.f32 %v2329, %v2553
      %v2555 = vpop.f32.mrb[0].mxu0
      %v2556 = vpop.f32.mrb[0].mxu0
      %v2557 = vadd.f32 %v2332, %v2556
      %v2558 = vpop.f32.mrb[0].mxu0
      %2559 = vmatprep.mubr.bf16.mxu0 0
      %2560 = vmatmul.mubr.bf16.gmra.mrb[0].mxu0 %v759
      %v2561 = vpop.f32.mrb[0].mxu0
      %v2562 = vadd.f32 %v2337, %v2561
      %v2563 = vpop.f32.mrb[0].mxu0
      %v2564 = vpop.f32.mrb[0].mxu0
      %v2565 = vadd.f32 %v2340, %v2564
      %v2566 = vpop.f32.mrb[0].mxu0
      %2567 = vmatprep.mubr.bf16.mxu0 0
      %2568 = vmatmul.mubr.bf16.gmra.mrb[0].mxu0 %v761
      %v2569 = vpop.f32.mrb[0].mxu0
      %v2570 = vadd.f32 %v2345, %v2569
      %v2571 = vpop.f32.mrb[0].mxu0
      %v2572 = vpop.f32.mrb[0].mxu0
      %v2573 = vadd.f32 %v2348, %v2572
      %v2574 = vpop.f32.mrb[0].mxu0
      %2575 = vmatprep.mubr.bf16.mxu0 0
      %2576 = vmatmul.mubr.bf16.gmra.mrb[0].mxu0 %v764
      %v2577 = vpop.f32.mrb[0].mxu0
      %v2578 = vadd.f32 %v2353, %v2577
      %v2579 = vpop.f32.mrb[0].mxu0
      %v2580 = vpop.f32.mrb[0].mxu0
      %v2581 = vadd.f32 %v2356, %v2580
      %v2582 = vpop.f32.mrb[0].mxu0
      %2583 = vmatprep.mubr.bf16.mxu0 0
      %2584 = vmatmul.mubr.bf16.gmra.mrb[0].mxu0 %v766
      %v2585 = vpop.f32.mrb[0].mxu0
      %v2586 = vadd.f32 %v2361, %v2585
      %v2587 = vpop.f32.mrb[0].mxu0
      %v2588 = vpop.f32.mrb[0].mxu0
      %v2589 = vadd.f32 %v2364, %v2588
      %v2590 = vpop.f32.mrb[0].mxu0
      %2591 = vmatprep.mubr.bf16.mxu0 0
      %2592 = vmatmul.mubr.bf16.gmra.mrb[0].mxu0 %v768
      %v2593 = vpop.f32.mrb[0].mxu0
      %v2594 = vadd.f32 %v2369, %v2593
      %v2595 = vpop.f32.mrb[0].mxu0
      %v2596 = vpop.f32.mrb[0].mxu0
      %v2597 = vadd.f32 %v2372, %v2596
      %v2598 = vpop.f32.mrb[0].mxu0
      %2599 = vmatprep.mubr.bf16.mxu0 0
      %2600 = vmatmul.mubr.bf16.gmra.mrb[0].mxu0 %v771
      %v2601 = vpop.f32.mrb[0].mxu0
      %v2602 = vadd.f32 %v2377, %v2601
      %v2603 = vpop.f32.mrb[0].mxu0
      %v2604 = vpop.f32.mrb[0].mxu0
      %v2605 = vadd.f32 %v2380, %v2604
      %v2606 = vpop.f32.mrb[0].mxu0
      %2607 = vmatprep.mubr.bf16.mxu0 0
      %2608 = vmatmul.mubr.bf16.gmra.mrb[0].mxu0 %v773
      %v2609 = vpop.f32.mrb[0].mxu0
      %v2610 = vadd.f32 %v2385, %v2609
      %v2611 = vpop.f32.mrb[0].mxu0
      %v2612 = vpop.f32.mrb[0].mxu0
      %v2613 = vadd.f32 %v2388, %v2612
      %v2614 = vpop.f32.mrb[0].mxu0
      %2615 = vmatprep.mubr.bf16.mxu0 0
      %2616 = vmatmul.mubr.bf16.gmra.mrb[0].mxu0 %v775
      %v2617 = vpop.f32.mrb[0].mxu0
      %v2618 = vadd.f32 %v2393, %v2617
      %v2619 = vpop.f32.mrb[0].mxu0
      %v2620 = vpop.f32.mrb[0].mxu0
      %v2621 = vadd.f32 %v2396, %v2620
      %v2622 = vpop.f32.mrb[0].mxu0
      %2623 = vmatprep.mubr.bf16.mxu0 0
      %2624 = vmatmul.mubr.bf16.gmra.mrb[0].mxu0 %v778
      %v2625 = vpop.f32.mrb[0].mxu0
      %v2626 = vadd.f32 %v2401, %v2625
      %v2627 = vpop.f32.mrb[0].mxu0
      %v2628 = vpop.f32.mrb[0].mxu0
      %v2629 = vadd.f32 %v2404, %v2628
      %v2630 = vpop.f32.mrb[0].mxu0
      %2631 = vmatprep.mubr.bf16.mxu0 0
      %2632 = vmatmul.mubr.bf16.gmra.mrb[0].mxu0 %v780
      %v2633 = vpop.f32.mrb[0].mxu0
      %v2634 = vadd.f32 %v2409, %v2633
      %v2635 = vpop.f32.mrb[0].mxu0
      %v2636 = vpop.f32.mrb[0].mxu0
      %v2637 = vadd.f32 %v2412, %v2636
      %v2638 = vpop.f32.mrb[0].mxu0
      %2639 = vmatprep.mubr.bf16.mxu0 0
      %2640 = vmatmul.mubr.bf16.gmra.mrb[0].mxu0 %v782
      %v2641 = vpop.f32.mrb[0].mxu0
      %v2642 = vadd.f32 %v2417, %v2641
      %v2643 = vpop.f32.mrb[0].mxu0
      %v2644 = vpop.f32.mrb[0].mxu0
      %v2645 = vadd.f32 %v2420, %v2644
      %v2646 = vpop.f32.mrb[0].mxu0
      %2647 = vdwg.mxu0
      %s2648 = sadd.s32 %s249, 2
      %s2649 = smul.u32 %s2648, 7
      %s2650 = smul.addr %s2649, 4
      %s2651 = scalar_lea.vmem %s237, %s2650
      %v2652 = vld [vmem:[%s2651] sm:$0xf]
      %v2653 = vld [vmem:[%s2651 + $0x4] sm:$0xf]
      %v2654 = vld [vmem:[%s2651 + $0x8] sm:$0xf]
      %v2655 = vld [vmem:[%s2651 + $0xc] sm:$0xf]
      %v2656 = vld [vmem:[%s2651 + $0x10] sm:$0xf]
      %v2657 = vld [vmem:[%s2651 + $0x14] sm:$0xf]
      %v2658 = vld [vmem:[%s2651 + $0x18] sm:$0x1]
      %v2659 = vld [vmem:[%s2651 + $0x1c] sm:$0xf]
      %v2660 = vld [vmem:[%s2651 + $0x20] sm:$0xf]
      %v2661 = vld [vmem:[%s2651 + $0x24] sm:$0xf]
      %v2662 = vld [vmem:[%s2651 + $0x28] sm:$0xf]
      %v2663 = vld [vmem:[%s2651 + $0x2c] sm:$0xf]
      %v2664 = vld [vmem:[%s2651 + $0x30] sm:$0xf]
      %v2665 = vld [vmem:[%s2651 + $0x34] sm:$0x1]
      %v2666 = vld [vmem:[%s2651 + $0x38] sm:$0xf]
      %v2667 = vld [vmem:[%s2651 + $0x3c] sm:$0xf]
      %v2668 = vld [vmem:[%s2651 + $0x40] sm:$0xf]
      %v2669 = vld [vmem:[%s2651 + $0x44] sm:$0xf]
      %v2670 = vld [vmem:[%s2651 + $0x48] sm:$0xf]
      %v2671 = vld [vmem:[%s2651 + $0x4c] sm:$0xf]
      %v2672 = vld [vmem:[%s2651 + $0x50] sm:$0x1]
      %v2673 = vld [vmem:[%s2651 + $0x54] sm:$0xf]
      %v2674 = vld [vmem:[%s2651 + $0x58] sm:$0xf]
      %v2675 = vld [vmem:[%s2651 + $0x5c] sm:$0xf]
      %v2676 = vld [vmem:[%s2651 + $0x60] sm:$0xf]
      %v2677 = vld [vmem:[%s2651 + $0x64] sm:$0xf]
      %v2678 = vld [vmem:[%s2651 + $0x68] sm:$0xf]
      %v2679 = vld [vmem:[%s2651 + $0x6c] sm:$0x1]
      %v2680 = vld [vmem:[%s2651 + $0x70] sm:$0xf]
      %v2681 = vld [vmem:[%s2651 + $0x74] sm:$0xf]
      %v2682 = vld [vmem:[%s2651 + $0x78] sm:$0xf]
      %v2683 = vld [vmem:[%s2651 + $0x7c] sm:$0xf]
      %v2684 = vld [vmem:[%s2651 + $0x80] sm:$0xf]
      %v2685 = vld [vmem:[%s2651 + $0x84] sm:$0xf]
      %v2686 = vld [vmem:[%s2651 + $0x88] sm:$0x1]
      %v2687 = vld [vmem:[%s2651 + $0x8c] sm:$0xf]
      %v2688 = vld [vmem:[%s2651 + $0x90] sm:$0xf]
      %v2689 = vld [vmem:[%s2651 + $0x94] sm:$0xf]
      %v2690 = vld [vmem:[%s2651 + $0x98] sm:$0xf]
      %v2691 = vld [vmem:[%s2651 + $0x9c] sm:$0xf]
      %v2692 = vld [vmem:[%s2651 + $0xa0] sm:$0xf]
      %v2693 = vld [vmem:[%s2651 + $0xa4] sm:$0x1]
      %v2694 = vld [vmem:[%s2651 + $0xa8] sm:$0xf]
      %v2695 = vld [vmem:[%s2651 + $0xac] sm:$0xf]
      %v2696 = vld [vmem:[%s2651 + $0xb0] sm:$0xf]
      %v2697 = vld [vmem:[%s2651 + $0xb4] sm:$0xf]
      %v2698 = vld [vmem:[%s2651 + $0xb8] sm:$0xf]
      %v2699 = vld [vmem:[%s2651 + $0xbc] sm:$0xf]
      %v2700 = vld [vmem:[%s2651 + $0xc0] sm:$0x1]
      %v2701 = vld [vmem:[%s2651 + $0xc4] sm:$0xf]
      %v2702 = vld [vmem:[%s2651 + $0xc8] sm:$0xf]
      %v2703 = vld [vmem:[%s2651 + $0xcc] sm:$0xf]
      %v2704 = vld [vmem:[%s2651 + $0xd0] sm:$0xf]
      %v2705 = vld [vmem:[%s2651 + $0xd4] sm:$0xf]
      %v2706 = vld [vmem:[%s2651 + $0xd8] sm:$0xf]
      %v2707 = vld [vmem:[%s2651 + $0xdc] sm:$0x1]
      %v2756 = vunpack.c.l.b16 %v2652
      %v2757 = vunpack.c.l.b16 %v2653
      %v2758 = vunpack.c.l.b16 %v2654
      %v2759 = vunpack.c.l.b16 %v2655
      %v2760 = vunpack.c.l.b16 %v2656
      %v2761 = vunpack.c.l.b16 %v2657
      %v2762 = vunpack.c.l.b16 %v2659
      %v2763 = vunpack.c.l.b16 %v2660
      %v2764 = vunpack.c.l.b16 %v2661
      %v2765 = vunpack.c.l.b16 %v2662
      %v2766 = vunpack.c.l.b16 %v2663
      %v2767 = vunpack.c.l.b16 %v2664
      %v2768 = vunpack.c.l.b16 %v2666
      %v2769 = vunpack.c.l.b16 %v2667
      %v2770 = vunpack.c.l.b16 %v2668
      %v2771 = vunpack.c.l.b16 %v2669
      %v2772 = vunpack.c.l.b16 %v2670
      %v2773 = vunpack.c.l.b16 %v2671
      %v2774 = vunpack.c.l.b16 %v2673
      %v2775 = vunpack.c.l.b16 %v2674
      %v2776 = vunpack.c.l.b16 %v2675
      %v2777 = vunpack.c.l.b16 %v2676
      %v2778 = vunpack.c.l.b16 %v2677
      %v2779 = vunpack.c.l.b16 %v2678
      %v2780 = vunpack.c.l.b16 %v2680
      %v2781 = vunpack.c.l.b16 %v2681
      %v2782 = vunpack.c.l.b16 %v2682
      %v2783 = vunpack.c.l.b16 %v2683
      %v2784 = vunpack.c.l.b16 %v2684
      %v2785 = vunpack.c.l.b16 %v2685
      %v2786 = vunpack.c.l.b16 %v2687
      %v2787 = vunpack.c.l.b16 %v2688
      %v2788 = vunpack.c.l.b16 %v2689
      %v2789 = vunpack.c.l.b16 %v2690
      %v2790 = vunpack.c.l.b16 %v2691
      %v2791 = vunpack.c.l.b16 %v2692
      %v2792 = vunpack.c.l.b16 %v2694
      %v2793 = vunpack.c.l.b16 %v2695
      %v2794 = vunpack.c.l.b16 %v2696
      %v2795 = vunpack.c.l.b16 %v2697
      %v2796 = vunpack.c.l.b16 %v2698
      %v2797 = vunpack.c.l.b16 %v2699
      %v2798 = vunpack.c.l.b16 %v2701
      %v2799 = vunpack.c.l.b16 %v2702
      %v2800 = vunpack.c.l.b16 %v2703
      %v2801 = vunpack.c.l.b16 %v2704
      %v2802 = vunpack.c.l.b16 %v2705
      %v2803 = vunpack.c.l.b16 %v2706
      %v2804 = vpack.c.b16 %v2757, %v2756
      %v2805 = vpack.c.b16 %v2759, %v2758
      %v2806 = vpack.c.b16 %v2761, %v2760
      %v2807 = vpack.c.b16 %v2763, %v2762
      %v2808 = vpack.c.b16 %v2765, %v2764
      %v2809 = vpack.c.b16 %v2767, %v2766
      %v2810 = vpack.c.b16 %v2769, %v2768
      %v2811 = vpack.c.b16 %v2771, %v2770
      %v2812 = vpack.c.b16 %v2773, %v2772
      %v2813 = vpack.c.b16 %v2775, %v2774
      %v2814 = vpack.c.b16 %v2777, %v2776
      %v2815 = vpack.c.b16 %v2779, %v2778
      %v2816 = vpack.c.b16 %v2781, %v2780
      %v2817 = vpack.c.b16 %v2783, %v2782
      %v2818 = vpack.c.b16 %v2785, %v2784
      %v2819 = vpack.c.b16 %v2787, %v2786
      %v2820 = vpack.c.b16 %v2789, %v2788
      %v2821 = vpack.c.b16 %v2791, %v2790
      %v2822 = vpack.c.b16 %v2793, %v2792
      %v2823 = vpack.c.b16 %v2795, %v2794
      %v2824 = vpack.c.b16 %v2797, %v2796
      %v2825 = vpack.c.b16 %v2799, %v2798
      %v2826 = vpack.c.b16 %v2801, %v2800
      %v2827 = vpack.c.b16 %v2803, %v2802
      %v2860 = vunpack.c.l.b16 %v2658
      %v2861 = vunpack.c.l.b16 %v2665
      %v2862 = vunpack.c.l.b16 %v2672
      %v2863 = vunpack.c.l.b16 %v2679
      %v2864 = vunpack.c.l.b16 %v2686
      %v2865 = vunpack.c.l.b16 %v2693
      %v2866 = vunpack.c.l.b16 %v2700
      %v2867 = vunpack.c.l.b16 %v2707
      %v2868 = vpack.c.b16 %v2860, %v2860
      %v2869 = vpack.c.b16 %v2861, %v2861
      %v2870 = vpack.c.b16 %v2862, %v2862
      %v2871 = vpack.c.b16 %v2863, %v2863
      %v2872 = vpack.c.b16 %v2864, %v2864
      %v2873 = vpack.c.b16 %v2865, %v2865
      %v2874 = vpack.c.b16 %v2866, %v2866
      %v2875 = vpack.c.b16 %v2867, %v2867
      %v2877 = vshrl.u32 %v2804, 16
      %v2879 = vshll.u32 %v2804, 16
      %v2881 = vrot.slane %v2879, 1
      %v2882 = vor.u32 %v2877, %v2881
      %v2884 = vshll.u32 %v2805, 16
      %v2886 = vrot.slane %v2884, 1
      %v2887 = vsel %vm477, %v2882, %v2886
      %v2888 = vshrl.u32 %v2805, 16
      %v2890 = vor.u32 %v2888, %v2886
      %v2892 = vshll.u32 %v2806, 16
      %v2894 = vrot.slane %v2892, 1
      %v2895 = vsel %vm477, %v2890, %v2894
      %v2896 = vshrl.u32 %v2806, 16
      %v2898 = vor.u32 %v2896, %v2894
      %v2900 = vshll.u32 %v2868, 16
      %v2902 = vrot.slane %v2900, 1
      %v2903 = vsel %vm477, %v2898, %v2902
      %v2905 = vshrl.u32 %v2807, 16
      %v2907 = vshll.u32 %v2807, 16
      %v2909 = vrot.slane %v2907, 1
      %v2910 = vor.u32 %v2905, %v2909
      %v2912 = vshll.u32 %v2808, 16
      %v2914 = vrot.slane %v2912, 1
      %v2915 = vsel %vm477, %v2910, %v2914
      %v2916 = vshrl.u32 %v2808, 16
      %v2918 = vor.u32 %v2916, %v2914
      %v2920 = vshll.u32 %v2809, 16
      %v2922 = vrot.slane %v2920, 1
      %v2923 = vsel %vm477, %v2918, %v2922
      %v2924 = vshrl.u32 %v2809, 16
      %v2926 = vor.u32 %v2924, %v2922
      %v2928 = vshll.u32 %v2869, 16
      %v2930 = vrot.slane %v2928, 1
      %v2931 = vsel %vm477, %v2926, %v2930
      %v2933 = vshrl.u32 %v2810, 16
      %v2935 = vshll.u32 %v2810, 16
      %v2937 = vrot.slane %v2935, 1
      %v2938 = vor.u32 %v2933, %v2937
      %v2940 = vshll.u32 %v2811, 16
      %v2942 = vrot.slane %v2940, 1
      %v2943 = vsel %vm477, %v2938, %v2942
      %v2944 = vshrl.u32 %v2811, 16
      %v2946 = vor.u32 %v2944, %v2942
      %v2948 = vshll.u32 %v2812, 16
      %v2950 = vrot.slane %v2948, 1
      %v2951 = vsel %vm477, %v2946, %v2950
      %v2952 = vshrl.u32 %v2812, 16
      %v2954 = vor.u32 %v2952, %v2950
      %v2956 = vshll.u32 %v2870, 16
      %v2958 = vrot.slane %v2956, 1
      %v2959 = vsel %vm477, %v2954, %v2958
      %v2961 = vshrl.u32 %v2813, 16
      %v2963 = vshll.u32 %v2813, 16
      %v2965 = vrot.slane %v2963, 1
      %v2966 = vor.u32 %v2961, %v2965
      %v2968 = vshll.u32 %v2814, 16
      %v2970 = vrot.slane %v2968, 1
      %v2971 = vsel %vm477, %v2966, %v2970
      %v2972 = vshrl.u32 %v2814, 16
      %v2974 = vor.u32 %v2972, %v2970
      %v2976 = vshll.u32 %v2815, 16
      %v2978 = vrot.slane %v2976, 1
      %v2979 = vsel %vm477, %v2974, %v2978
      %v2980 = vshrl.u32 %v2815, 16
      %v2982 = vor.u32 %v2980, %v2978
      %v2984 = vshll.u32 %v2871, 16
      %v2986 = vrot.slane %v2984, 1
      %v2987 = vsel %vm477, %v2982, %v2986
      %v2989 = vshrl.u32 %v2816, 16
      %v2991 = vshll.u32 %v2816, 16
      %v2993 = vrot.slane %v2991, 1
      %v2994 = vor.u32 %v2989, %v2993
      %v2996 = vshll.u32 %v2817, 16
      %v2998 = vrot.slane %v2996, 1
      %v2999 = vsel %vm477, %v2994, %v2998
      %v3000 = vshrl.u32 %v2817, 16
      %v3002 = vor.u32 %v3000, %v2998
      %v3004 = vshll.u32 %v2818, 16
      %v3006 = vrot.slane %v3004, 1
      %v3007 = vsel %vm477, %v3002, %v3006
      %v3008 = vshrl.u32 %v2818, 16
      %v3010 = vor.u32 %v3008, %v3006
      %v3012 = vshll.u32 %v2872, 16
      %v3014 = vrot.slane %v3012, 1
      %v3015 = vsel %vm477, %v3010, %v3014
      %v3017 = vshrl.u32 %v2819, 16
      %v3019 = vshll.u32 %v2819, 16
      %v3021 = vrot.slane %v3019, 1
      %v3022 = vor.u32 %v3017, %v3021
      %v3024 = vshll.u32 %v2820, 16
      %v3026 = vrot.slane %v3024, 1
      %v3027 = vsel %vm477, %v3022, %v3026
      %v3028 = vshrl.u32 %v2820, 16
      %v3030 = vor.u32 %v3028, %v3026
      %v3032 = vshll.u32 %v2821, 16
      %v3034 = vrot.slane %v3032, 1
      %v3035 = vsel %vm477, %v3030, %v3034
      %v3036 = vshrl.u32 %v2821, 16
      %v3038 = vor.u32 %v3036, %v3034
      %v3040 = vshll.u32 %v2873, 16
      %v3042 = vrot.slane %v3040, 1
      %v3043 = vsel %vm477, %v3038, %v3042
      %v3045 = vshrl.u32 %v2822, 16
      %v3047 = vshll.u32 %v2822, 16
      %v3049 = vrot.slane %v3047, 1
      %v3050 = vor.u32 %v3045, %v3049
      %v3052 = vshll.u32 %v2823, 16
      %v3054 = vrot.slane %v3052, 1
      %v3055 = vsel %vm477, %v3050, %v3054
      %v3056 = vshrl.u32 %v2823, 16
      %v3058 = vor.u32 %v3056, %v3054
      %v3060 = vshll.u32 %v2824, 16
      %v3062 = vrot.slane %v3060, 1
      %v3063 = vsel %vm477, %v3058, %v3062
      %v3064 = vshrl.u32 %v2824, 16
      %v3066 = vor.u32 %v3064, %v3062
      %v3068 = vshll.u32 %v2874, 16
      %v3070 = vrot.slane %v3068, 1
      %v3071 = vsel %vm477, %v3066, %v3070
      %v3073 = vshrl.u32 %v2825, 16
      %v3075 = vshll.u32 %v2825, 16
      %v3077 = vrot.slane %v3075, 1
      %v3078 = vor.u32 %v3073, %v3077
      %v3080 = vshll.u32 %v2826, 16
      %v3082 = vrot.slane %v3080, 1
      %v3083 = vsel %vm477, %v3078, %v3082
      %v3084 = vshrl.u32 %v2826, 16
      %v3086 = vor.u32 %v3084, %v3082
      %v3088 = vshll.u32 %v2827, 16
      %v3090 = vrot.slane %v3088, 1
      %v3091 = vsel %vm477, %v3086, %v3090
      %v3092 = vshrl.u32 %v2827, 16
      %v3094 = vor.u32 %v3092, %v3090
      %v3096 = vshll.u32 %v2875, 16
      %v3098 = vrot.slane %v3096, 1
      %v3099 = vsel %vm477, %v3094, %v3098
      %v3124 = vrot.slane %v2804, 1
      %v3125 = vrot.slane %v2805, 1
      %v3126 = vsel %vm726, %v3124, %v3125
      %v3127 = vrot.slane %v2806, 1
      %v3128 = vsel %vm726, %v3125, %v3127
      %v3129 = vrot.slane %v2868, 1
      %v3130 = vsel %vm726, %v3127, %v3129
      %v3131 = vrot.slane %v2807, 1
      %v3132 = vrot.slane %v2808, 1
      %v3133 = vsel %vm726, %v3131, %v3132
      %v3134 = vrot.slane %v2809, 1
      %v3135 = vsel %vm726, %v3132, %v3134
      %v3136 = vrot.slane %v2869, 1
      %v3137 = vsel %vm726, %v3134, %v3136
      %v3138 = vrot.slane %v2810, 1
      %v3139 = vrot.slane %v2811, 1
      %v3140 = vsel %vm726, %v3138, %v3139
      %v3141 = vrot.slane %v2812, 1
      %v3142 = vsel %vm726, %v3139, %v3141
      %v3143 = vrot.slane %v2870, 1
      %v3144 = vsel %vm726, %v3141, %v3143
      %v3145 = vrot.slane %v2813, 1
      %v3146 = vrot.slane %v2814, 1
      %v3147 = vsel %vm726, %v3145, %v3146
      %v3148 = vrot.slane %v2815, 1
      %v3149 = vsel %vm726, %v3146, %v3148
      %v3150 = vrot.slane %v2871, 1
      %v3151 = vsel %vm726, %v3148, %v3150
      %v3152 = vrot.slane %v2816, 1
      %v3153 = vrot.slane %v2817, 1
      %v3154 = vsel %vm726, %v3152, %v3153
      %v3155 = vrot.slane %v2818, 1
      %v3156 = vsel %vm726, %v3153, %v3155
      %v3157 = vrot.slane %v2872, 1
      %v3158 = vsel %vm726, %v3155, %v3157
      %v3159 = vrot.slane %v2819, 1
      %v3160 = vrot.slane %v2820, 1
      %v3161 = vsel %vm726, %v3159, %v3160
      %v3162 = vrot.slane %v2821, 1
      %v3163 = vsel %vm726, %v3160, %v3162
      %v3164 = vrot.slane %v2873, 1
      %v3165 = vsel %vm726, %v3162, %v3164
      %v3166 = vrot.slane %v2822, 1
      %v3167 = vrot.slane %v2823, 1
      %v3168 = vsel %vm726, %v3166, %v3167
      %v3169 = vrot.slane %v2824, 1
      %v3170 = vsel %vm726, %v3167, %v3169
      %v3171 = vrot.slane %v2874, 1
      %v3172 = vsel %vm726, %v3169, %v3171
      %v3173 = vrot.slane %v2825, 1
      %v3174 = vrot.slane %v2826, 1
      %v3175 = vsel %vm726, %v3173, %v3174
      %v3176 = vrot.slane %v2827, 1
      %v3177 = vsel %vm726, %v3174, %v3176
      %v3178 = vrot.slane %v2875, 1
      %v3179 = vsel %vm726, %v3176, %v3178
      %s3204 = scalar_lea.vmem %s1, 384
      %v3205 = vld [vmem:[%s3204] sm:$0xf]
      %v3206 = vld [vmem:[%s3204 + $0x4] sm:$0xf]
      %v3207 = vld [vmem:[%s3204 + $0x8] sm:$0xf]
      %v3208 = vld [vmem:[%s3204 + $0xc] sm:$0xf]
      %v3209 = vld [vmem:[%s3204 + $0x10] sm:$0xf]
      %v3210 = vld [vmem:[%s3204 + $0x14] sm:$0xf]
      %v3211 = vld [vmem:[%s3204 + $0x18] sm:$0xf]
      %v3212 = vld [vmem:[%s3204 + $0x1c] sm:$0xf]
      %v3213 = vld [vmem:[%s3204 + $0x20] sm:$0xf]
      %v3214 = vld [vmem:[%s3204 + $0x24] sm:$0xf]
      %v3215 = vld [vmem:[%s3204 + $0x28] sm:$0xf]
      %v3216 = vld [vmem:[%s3204 + $0x2c] sm:$0xf]
      %v3217 = vld [vmem:[%s3204 + $0x30] sm:$0xf]
      %v3218 = vld [vmem:[%s3204 + $0x34] sm:$0xf]
      %v3219 = vld [vmem:[%s3204 + $0x38] sm:$0xf]
      %v3220 = vld [vmem:[%s3204 + $0x3c] sm:$0xf]
      %v3221 = vld [vmem:[%s3204 + $0x40] sm:$0xf]
      %v3222 = vld [vmem:[%s3204 + $0x44] sm:$0xf]
      %v3223 = vld [vmem:[%s3204 + $0x48] sm:$0xf]
      %v3224 = vld [vmem:[%s3204 + $0x4c] sm:$0xf]
      %v3225 = vld [vmem:[%s3204 + $0x50] sm:$0xf]
      %v3226 = vld [vmem:[%s3204 + $0x54] sm:$0xf]
      %v3227 = vld [vmem:[%s3204 + $0x58] sm:$0xf]
      %v3228 = vld [vmem:[%s3204 + $0x5c] sm:$0xf]
      %v3229 = vld [vmem:[%s3204 + $0x60] sm:$0xf]
      %v3230 = vld [vmem:[%s3204 + $0x64] sm:$0xf]
      %v3231 = vld [vmem:[%s3204 + $0x68] sm:$0xf]
      %v3232 = vld [vmem:[%s3204 + $0x6c] sm:$0xf]
      %v3233 = vld [vmem:[%s3204 + $0x70] sm:$0xf]
      %v3234 = vld [vmem:[%s3204 + $0x74] sm:$0xf]
      %v3235 = vld [vmem:[%s3204 + $0x78] sm:$0xf]
      %v3236 = vld [vmem:[%s3204 + $0x7c] sm:$0xf]
      %v3237 = vld [vmem:[%s3204 + $0x80] sm:$0xf]
      %v3238 = vld [vmem:[%s3204 + $0x84] sm:$0xf]
      %v3239 = vld [vmem:[%s3204 + $0x88] sm:$0xf]
      %v3240 = vld [vmem:[%s3204 + $0x8c] sm:$0xf]
      %v3241 = vld [vmem:[%s3204 + $0x90] sm:$0xf]
      %v3242 = vld [vmem:[%s3204 + $0x94] sm:$0xf]
      %v3243 = vld [vmem:[%s3204 + $0x98] sm:$0xf]
      %v3244 = vld [vmem:[%s3204 + $0x9c] sm:$0xf]
      %v3245 = vld [vmem:[%s3204 + $0xa0] sm:$0xf]
      %v3246 = vld [vmem:[%s3204 + $0xa4] sm:$0xf]
      %v3247 = vld [vmem:[%s3204 + $0xa8] sm:$0xf]
      %v3248 = vld [vmem:[%s3204 + $0xac] sm:$0xf]
      %v3249 = vld [vmem:[%s3204 + $0xb0] sm:$0xf]
      %v3250 = vld [vmem:[%s3204 + $0xb4] sm:$0xf]
      %v3251 = vld [vmem:[%s3204 + $0xb8] sm:$0xf]
      %v3252 = vld [vmem:[%s3204 + $0xbc] sm:$0xf]
      %v3301 = vunpack.c.l.b16 %v3205
      %v3302 = vunpack.c.l.b16 %v3206
      %v3303 = vunpack.c.l.b16 %v3207
      %v3304 = vunpack.c.l.b16 %v3208
      %v3305 = vunpack.c.l.b16 %v3209
      %v3306 = vunpack.c.l.b16 %v3210
      %v3307 = vunpack.c.l.b16 %v3211
      %v3308 = vunpack.c.l.b16 %v3212
      %v3309 = vunpack.c.l.b16 %v3213
      %v3310 = vunpack.c.l.b16 %v3214
      %v3311 = vunpack.c.l.b16 %v3215
      %v3312 = vunpack.c.l.b16 %v3216
      %v3313 = vunpack.c.l.b16 %v3217
      %v3314 = vunpack.c.l.b16 %v3218
      %v3315 = vunpack.c.l.b16 %v3219
      %v3316 = vunpack.c.l.b16 %v3220
      %v3317 = vunpack.c.l.b16 %v3221
      %v3318 = vunpack.c.l.b16 %v3222
      %v3319 = vunpack.c.l.b16 %v3223
      %v3320 = vunpack.c.l.b16 %v3224
      %v3321 = vunpack.c.l.b16 %v3225
      %v3322 = vunpack.c.l.b16 %v3226
      %v3323 = vunpack.c.l.b16 %v3227
      %v3324 = vunpack.c.l.b16 %v3228
      %v3325 = vunpack.c.l.b16 %v3229
      %v3326 = vunpack.c.l.b16 %v3230
      %v3327 = vunpack.c.l.b16 %v3231
      %v3328 = vunpack.c.l.b16 %v3232
      %v3329 = vunpack.c.l.b16 %v3233
      %v3330 = vunpack.c.l.b16 %v3234
      %v3331 = vunpack.c.l.b16 %v3235
      %v3332 = vunpack.c.l.b16 %v3236
      %v3333 = vunpack.c.l.b16 %v3237
      %v3334 = vunpack.c.l.b16 %v3238
      %v3335 = vunpack.c.l.b16 %v3239
      %v3336 = vunpack.c.l.b16 %v3240
      %v3337 = vunpack.c.l.b16 %v3241
      %v3338 = vunpack.c.l.b16 %v3242
      %v3339 = vunpack.c.l.b16 %v3243
      %v3340 = vunpack.c.l.b16 %v3244
      %v3341 = vunpack.c.l.b16 %v3245
      %v3342 = vunpack.c.l.b16 %v3246
      %v3343 = vunpack.c.l.b16 %v3247
      %v3344 = vunpack.c.l.b16 %v3248
      %v3345 = vunpack.c.l.b16 %v3249
      %v3346 = vunpack.c.l.b16 %v3250
      %v3347 = vunpack.c.l.b16 %v3251
      %v3348 = vunpack.c.l.b16 %v3252
      %v3349 = vpack.c.b16 %v3302, %v3301
      %v3350 = vpack.c.b16 %v3304, %v3303
      %v3351 = vpack.c.b16 %v3306, %v3305
      %v3352 = vpack.c.b16 %v3308, %v3307
      %v3353 = vpack.c.b16 %v3310, %v3309
      %v3354 = vpack.c.b16 %v3312, %v3311
      %v3355 = vpack.c.b16 %v3314, %v3313
      %v3356 = vpack.c.b16 %v3316, %v3315
      %v3357 = vpack.c.b16 %v3318, %v3317
      %v3358 = vpack.c.b16 %v3320, %v3319
      %v3359 = vpack.c.b16 %v3322, %v3321
      %v3360 = vpack.c.b16 %v3324, %v3323
      %v3361 = vpack.c.b16 %v3326, %v3325
      %v3362 = vpack.c.b16 %v3328, %v3327
      %v3363 = vpack.c.b16 %v3330, %v3329
      %v3364 = vpack.c.b16 %v3332, %v3331
      %v3365 = vpack.c.b16 %v3334, %v3333
      %v3366 = vpack.c.b16 %v3336, %v3335
      %v3367 = vpack.c.b16 %v3338, %v3337
      %v3368 = vpack.c.b16 %v3340, %v3339
      %v3369 = vpack.c.b16 %v3342, %v3341
      %v3370 = vpack.c.b16 %v3344, %v3343
      %v3371 = vpack.c.b16 %v3346, %v3345
      %v3372 = vpack.c.b16 %v3348, %v3347
      %3397 = vmatprep.subr.bf16.mxu0 0
      %3398 = vmatpush1.bf16.msra.mxu0 %v3349
      %3399 = vmatprep.subr.bf16.mxu0 0
      %3400 = vmatpush1.bf16.msra.mxu0 %v3350
      %3401 = vmatprep.subr.bf16.mxu0 0
      %3402 = vmatpush1.bf16.msra.mxu0 %v3351
      %3403 = vmatprep.subr.bf16.mxu0 0
      %3404 = vmatpush1.bf16.msra.mxu0 %v3352
      %3405 = vmatprep.subr.bf16.mxu0 0
      %3406 = vmatpush1.bf16.msra.mxu0 %v3353
      %3407 = vmatprep.subr.bf16.mxu0 0
      %3408 = vmatpush1.bf16.msra.mxu0 %v3354
      %3409 = vmatprep.subr.bf16.mxu0 0
      %3410 = vmatpush1.bf16.msra.mxu0 %v3355
      %3411 = vmatprep.subr.bf16.mxu0 0
      %3412 = vmatpush1.bf16.msra.mxu0 %v3356
      %3413 = vmatprep.subr.bf16.mxu0 0
      %3414 = vmatpush1.bf16.msra.mxu0 %v3357
      %3415 = vmatprep.subr.bf16.mxu0 0
      %3416 = vmatpush1.bf16.msra.mxu0 %v3358
      %3417 = vmatprep.subr.bf16.mxu0 0
      %3418 = vmatpush1.bf16.msra.mxu0 %v3359
      %3419 = vmatprep.subr.bf16.mxu0 0
      %3420 = vmatpush1.bf16.msra.mxu0 %v3360
      %3421 = vmatprep.subr.bf16.mxu0 0
      %3422 = vmatpush1.bf16.msra.mxu0 %v3361
      %3423 = vmatprep.subr.bf16.mxu0 0
      %3424 = vmatpush1.bf16.msra.mxu0 %v3362
      %3425 = vmatprep.subr.bf16.mxu0 0
      %3426 = vmatpush1.bf16.msra.mxu0 %v3363
      %3427 = vmatprep.subr.bf16.mxu0 0
      %3428 = vmatpush1.bf16.msra.mxu0 %v3364
      %3429 = vmatprep.mubr.bf16.mxu0 %v2887
      %3430 = vmatmul.mubr.bf16.gmra.mrb[0].mxu0 %v2804
      %v3431 = vpop.f32.mrb[0].mxu0
      %v3432 = vadd.f32 0.0, %v3431
      %v3433 = vpop.f32.mrb[0].mxu0
      %v3434 = vpop.f32.mrb[0].mxu0
      %v3435 = vadd.f32 0.0, %v3434
      %v3436 = vpop.f32.mrb[0].mxu0
      %3437 = vmatprep.mubr.bf16.mxu0 %v2895
      %3438 = vmatmul.mubr.bf16.gmra.mrb[0].mxu0 %v2805
      %v3439 = vpop.f32.mrb[0].mxu0
      %v3440 = vadd.f32 0.0, %v3439
      %v3441 = vpop.f32.mrb[0].mxu0
      %v3442 = vpop.f32.mrb[0].mxu0
      %v3443 = vadd.f32 0.0, %v3442
      %v3444 = vpop.f32.mrb[0].mxu0
      %3445 = vmatprep.mubr.bf16.mxu0 %v2903
      %3446 = vmatmul.mubr.bf16.gmra.mrb[0].mxu0 %v2806
      %v3447 = vpop.f32.mrb[0].mxu0
      %v3448 = vadd.f32 0.0, %v3447
      %v3449 = vpop.f32.mrb[0].mxu0
      %v3450 = vpop.f32.mrb[0].mxu0
      %v3451 = vadd.f32 0.0, %v3450
      %v3452 = vpop.f32.mrb[0].mxu0
      %3453 = vmatprep.mubr.bf16.mxu0 %v2915
      %3454 = vmatmul.mubr.bf16.gmra.mrb[0].mxu0 %v2807
      %v3455 = vpop.f32.mrb[0].mxu0
      %v3456 = vadd.f32 0.0, %v3455
      %v3457 = vpop.f32.mrb[0].mxu0
      %v3458 = vpop.f32.mrb[0].mxu0
      %v3459 = vadd.f32 0.0, %v3458
      %v3460 = vpop.f32.mrb[0].mxu0
      %3461 = vmatprep.mubr.bf16.mxu0 %v2923
      %3462 = vmatmul.mubr.bf16.gmra.mrb[0].mxu0 %v2808
      %v3463 = vpop.f32.mrb[0].mxu0
      %v3464 = vadd.f32 0.0, %v3463
      %v3465 = vpop.f32.mrb[0].mxu0
      %v3466 = vpop.f32.mrb[0].mxu0
      %v3467 = vadd.f32 0.0, %v3466
      %v3468 = vpop.f32.mrb[0].mxu0
      %3469 = vmatprep.mubr.bf16.mxu0 %v2931
      %3470 = vmatmul.mubr.bf16.gmra.mrb[0].mxu0 %v2809
      %v3471 = vpop.f32.mrb[0].mxu0
      %v3472 = vadd.f32 0.0, %v3471
      %v3473 = vpop.f32.mrb[0].mxu0
      %v3474 = vpop.f32.mrb[0].mxu0
      %v3475 = vadd.f32 0.0, %v3474
      %v3476 = vpop.f32.mrb[0].mxu0
      %3477 = vmatprep.mubr.bf16.mxu0 %v2943
      %3478 = vmatmul.mubr.bf16.gmra.mrb[0].mxu0 %v2810
      %v3479 = vpop.f32.mrb[0].mxu0
      %v3480 = vadd.f32 0.0, %v3479
      %v3481 = vpop.f32.mrb[0].mxu0
      %v3482 = vpop.f32.mrb[0].mxu0
      %v3483 = vadd.f32 0.0, %v3482
      %v3484 = vpop.f32.mrb[0].mxu0
      %3485 = vmatprep.mubr.bf16.mxu0 %v2951
      %3486 = vmatmul.mubr.bf16.gmra.mrb[0].mxu0 %v2811
      %v3487 = vpop.f32.mrb[0].mxu0
      %v3488 = vadd.f32 0.0, %v3487
      %v3489 = vpop.f32.mrb[0].mxu0
      %v3490 = vpop.f32.mrb[0].mxu0
      %v3491 = vadd.f32 0.0, %v3490
      %v3492 = vpop.f32.mrb[0].mxu0
      %3493 = vmatprep.mubr.bf16.mxu0 %v2959
      %3494 = vmatmul.mubr.bf16.gmra.mrb[0].mxu0 %v2812
      %v3495 = vpop.f32.mrb[0].mxu0
      %v3496 = vadd.f32 0.0, %v3495
      %v3497 = vpop.f32.mrb[0].mxu0
      %v3498 = vpop.f32.mrb[0].mxu0
      %v3499 = vadd.f32 0.0, %v3498
      %v3500 = vpop.f32.mrb[0].mxu0
      %3501 = vmatprep.mubr.bf16.mxu0 %v2971
      %3502 = vmatmul.mubr.bf16.gmra.mrb[0].mxu0 %v2813
      %v3503 = vpop.f32.mrb[0].mxu0
      %v3504 = vadd.f32 0.0, %v3503
      %v3505 = vpop.f32.mrb[0].mxu0
      %v3506 = vpop.f32.mrb[0].mxu0
      %v3507 = vadd.f32 0.0, %v3506
      %v3508 = vpop.f32.mrb[0].mxu0
      %3509 = vmatprep.mubr.bf16.mxu0 %v2979
      %3510 = vmatmul.mubr.bf16.gmra.mrb[0].mxu0 %v2814
      %v3511 = vpop.f32.mrb[0].mxu0
      %v3512 = vadd.f32 0.0, %v3511
      %v3513 = vpop.f32.mrb[0].mxu0
      %v3514 = vpop.f32.mrb[0].mxu0
      %v3515 = vadd.f32 0.0, %v3514
      %v3516 = vpop.f32.mrb[0].mxu0
      %3517 = vmatprep.mubr.bf16.mxu0 %v2987
      %3518 = vmatmul.mubr.bf16.gmra.mrb[0].mxu0 %v2815
      %v3519 = vpop.f32.mrb[0].mxu0
      %v3520 = vadd.f32 0.0, %v3519
      %v3521 = vpop.f32.mrb[0].mxu0
      %v3522 = vpop.f32.mrb[0].mxu0
      %v3523 = vadd.f32 0.0, %v3522
      %v3524 = vpop.f32.mrb[0].mxu0
      %3525 = vmatprep.mubr.bf16.mxu0 %v2999
      %3526 = vmatmul.mubr.bf16.gmra.mrb[0].mxu0 %v2816
      %v3527 = vpop.f32.mrb[0].mxu0
      %v3528 = vadd.f32 0.0, %v3527
      %v3529 = vpop.f32.mrb[0].mxu0
      %v3530 = vpop.f32.mrb[0].mxu0
      %v3531 = vadd.f32 0.0, %v3530
      %v3532 = vpop.f32.mrb[0].mxu0
      %3533 = vmatprep.mubr.bf16.mxu0 %v3007
      %3534 = vmatmul.mubr.bf16.gmra.mrb[0].mxu0 %v2817
      %v3535 = vpop.f32.mrb[0].mxu0
      %v3536 = vadd.f32 0.0, %v3535
      %v3537 = vpop.f32.mrb[0].mxu0
      %v3538 = vpop.f32.mrb[0].mxu0
      %v3539 = vadd.f32 0.0, %v3538
      %v3540 = vpop.f32.mrb[0].mxu0
      %3541 = vmatprep.mubr.bf16.mxu0 %v3015
      %3542 = vmatmul.mubr.bf16.gmra.mrb[0].mxu0 %v2818
      %v3543 = vpop.f32.mrb[0].mxu0
      %v3544 = vadd.f32 0.0, %v3543
      %v3545 = vpop.f32.mrb[0].mxu0
      %v3546 = vpop.f32.mrb[0].mxu0
      %v3547 = vadd.f32 0.0, %v3546
      %v3548 = vpop.f32.mrb[0].mxu0
      %3549 = vmatprep.mubr.bf16.mxu0 %v3027
      %3550 = vmatmul.mubr.bf16.gmra.mrb[0].mxu0 %v2819
      %v3551 = vpop.f32.mrb[0].mxu0
      %v3552 = vadd.f32 0.0, %v3551
      %v3553 = vpop.f32.mrb[0].mxu0
      %v3554 = vpop.f32.mrb[0].mxu0
      %v3555 = vadd.f32 0.0, %v3554
      %v3556 = vpop.f32.mrb[0].mxu0
      %3557 = vmatprep.mubr.bf16.mxu0 %v3035
      %3558 = vmatmul.mubr.bf16.gmra.mrb[0].mxu0 %v2820
      %v3559 = vpop.f32.mrb[0].mxu0
      %v3560 = vadd.f32 0.0, %v3559
      %v3561 = vpop.f32.mrb[0].mxu0
      %v3562 = vpop.f32.mrb[0].mxu0
      %v3563 = vadd.f32 0.0, %v3562
      %v3564 = vpop.f32.mrb[0].mxu0
      %3565 = vmatprep.mubr.bf16.mxu0 %v3043
      %3566 = vmatmul.mubr.bf16.gmra.mrb[0].mxu0 %v2821
      %v3567 = vpop.f32.mrb[0].mxu0
      %v3568 = vadd.f32 0.0, %v3567
      %v3569 = vpop.f32.mrb[0].mxu0
      %v3570 = vpop.f32.mrb[0].mxu0
      %v3571 = vadd.f32 0.0, %v3570
      %v3572 = vpop.f32.mrb[0].mxu0
      %3573 = vmatprep.mubr.bf16.mxu0 %v3055
      %3574 = vmatmul.mubr.bf16.gmra.mrb[0].mxu0 %v2822
      %v3575 = vpop.f32.mrb[0].mxu0
      %v3576 = vadd.f32 0.0, %v3575
      %v3577 = vpop.f32.mrb[0].mxu0
      %v3578 = vpop.f32.mrb[0].mxu0
      %v3579 = vadd.f32 0.0, %v3578
      %v3580 = vpop.f32.mrb[0].mxu0
      %3581 = vmatprep.mubr.bf16.mxu0 %v3063
      %3582 = vmatmul.mubr.bf16.gmra.mrb[0].mxu0 %v2823
      %v3583 = vpop.f32.mrb[0].mxu0
      %v3584 = vadd.f32 0.0, %v3583
      %v3585 = vpop.f32.mrb[0].mxu0
      %v3586 = vpop.f32.mrb[0].mxu0
      %v3587 = vadd.f32 0.0, %v3586
      %v3588 = vpop.f32.mrb[0].mxu0
      %3589 = vmatprep.mubr.bf16.mxu0 %v3071
      %3590 = vmatmul.mubr.bf16.gmra.mrb[0].mxu0 %v2824
      %v3591 = vpop.f32.mrb[0].mxu0
      %v3592 = vadd.f32 0.0, %v3591
      %v3593 = vpop.f32.mrb[0].mxu0
      %v3594 = vpop.f32.mrb[0].mxu0
      %v3595 = vadd.f32 0.0, %v3594
      %v3596 = vpop.f32.mrb[0].mxu0
      %3597 = vmatprep.mubr.bf16.mxu0 %v3083
      %3598 = vmatmul.mubr.bf16.gmra.mrb[0].mxu0 %v2825
      %v3599 = vpop.f32.mrb[0].mxu0
      %v3600 = vadd.f32 0.0, %v3599
      %v3601 = vpop.f32.mrb[0].mxu0
      %v3602 = vpop.f32.mrb[0].mxu0
      %v3603 = vadd.f32 0.0, %v3602
      %v3604 = vpop.f32.mrb[0].mxu0
      %3605 = vmatprep.mubr.bf16.mxu0 %v3091
      %3606 = vmatmul.mubr.bf16.gmra.mrb[0].mxu0 %v2826
      %v3607 = vpop.f32.mrb[0].mxu0
      %v3608 = vadd.f32 0.0, %v3607
      %v3609 = vpop.f32.mrb[0].mxu0
      %v3610 = vpop.f32.mrb[0].mxu0
      %v3611 = vadd.f32 0.0, %v3610
      %v3612 = vpop.f32.mrb[0].mxu0
      %3613 = vmatprep.mubr.bf16.mxu0 %v3099
      %3614 = vmatmul.mubr.bf16.gmra.mrb[0].mxu0 %v2827
      %v3615 = vpop.f32.mrb[0].mxu0
      %v3616 = vadd.f32 0.0, %v3615
      %v3617 = vpop.f32.mrb[0].mxu0
      %v3618 = vpop.f32.mrb[0].mxu0
      %v3619 = vadd.f32 0.0, %v3618
      %v3620 = vpop.f32.mrb[0].mxu0
      %3621 = vdwg.mxu0
      %3622 = vmatprep.subr.bf16.mxu0 0
      %3623 = vmatpush1.bf16.msra.mxu0 %v3365
      %3624 = vmatprep.subr.bf16.mxu0 0
      %3625 = vmatpush1.bf16.msra.mxu0 %v3366
      %3626 = vmatprep.subr.bf16.mxu0 0
      %3627 = vmatpush1.bf16.msra.mxu0 %v3367
      %3628 = vmatprep.subr.bf16.mxu0 0
      %3629 = vmatpush1.bf16.msra.mxu0 %v3368
      %3630 = vmatprep.subr.bf16.mxu0 0
      %3631 = vmatpush1.bf16.msra.mxu0 %v3369
      %3632 = vmatprep.subr.bf16.mxu0 0
      %3633 = vmatpush1.bf16.msra.mxu0 %v3370
      %3634 = vmatprep.subr.bf16.mxu0 0
      %3635 = vmatpush1.bf16.msra.mxu0 %v3371
      %3636 = vmatprep.subr.bf16.mxu0 0
      %3637 = vmatpush1.bf16.msra.mxu0 %v3372
      %3638 = vmatprep.subr.bf16.mxu0 0
      %3639 = vmatpush1.bf16.msra.mxu0 0
      %3640 = vmatprep.subr.bf16.mxu0 0
      %3641 = vmatpush1.bf16.msra.mxu0 0
      %3642 = vmatprep.subr.bf16.mxu0 0
      %3643 = vmatpush1.bf16.msra.mxu0 0
      %3644 = vmatprep.subr.bf16.mxu0 0
      %3645 = vmatpush1.bf16.msra.mxu0 0
      %3646 = vmatprep.subr.bf16.mxu0 0
      %3647 = vmatpush1.bf16.msra.mxu0 0
      %3648 = vmatprep.subr.bf16.mxu0 0
      %3649 = vmatpush1.bf16.msra.mxu0 0
      %3650 = vmatprep.subr.bf16.mxu0 0
      %3651 = vmatpush1.bf16.msra.mxu0 0
      %3652 = vmatprep.subr.bf16.mxu0 0
      %3653 = vmatpush1.bf16.msra.mxu0 0
      %3654 = vmatprep.mubr.bf16.mxu0 0
      %3655 = vmatmul.mubr.bf16.gmra.mrb[0].mxu0 %v3126
      %v3656 = vpop.f32.mrb[0].mxu0
      %v3657 = vadd.f32 %v3432, %v3656
      %v3658 = vpop.f32.mrb[0].mxu0
      %v3659 = vpop.f32.mrb[0].mxu0
      %v3660 = vadd.f32 %v3435, %v3659
      %v3661 = vpop.f32.mrb[0].mxu0
      %3662 = vmatprep.mubr.bf16.mxu0 0
      %3663 = vmatmul.mubr.bf16.gmra.mrb[0].mxu0 %v3128
      %v3664 = vpop.f32.mrb[0].mxu0
      %v3665 = vadd.f32 %v3440, %v3664
      %v3666 = vpop.f32.mrb[0].mxu0
      %v3667 = vpop.f32.mrb[0].mxu0
      %v3668 = vadd.f32 %v3443, %v3667
      %v3669 = vpop.f32.mrb[0].mxu0
      %3670 = vmatprep.mubr.bf16.mxu0 0
      %3671 = vmatmul.mubr.bf16.gmra.mrb[0].mxu0 %v3130
      %v3672 = vpop.f32.mrb[0].mxu0
      %v3673 = vadd.f32 %v3448, %v3672
      %v3674 = vpop.f32.mrb[0].mxu0
      %v3675 = vpop.f32.mrb[0].mxu0
      %v3676 = vadd.f32 %v3451, %v3675
      %v3677 = vpop.f32.mrb[0].mxu0
      %3678 = vmatprep.mubr.bf16.mxu0 0
      %3679 = vmatmul.mubr.bf16.gmra.mrb[0].mxu0 %v3133
      %v3680 = vpop.f32.mrb[0].mxu0
      %v3681 = vadd.f32 %v3456, %v3680
      %v3682 = vpop.f32.mrb[0].mxu0
      %v3683 = vpop.f32.mrb[0].mxu0
      %v3684 = vadd.f32 %v3459, %v3683
      %v3685 = vpop.f32.mrb[0].mxu0
      %3686 = vmatprep.mubr.bf16.mxu0 0
      %3687 = vmatmul.mubr.bf16.gmra.mrb[0].mxu0 %v3135
      %v3688 = vpop.f32.mrb[0].mxu0
      %v3689 = vadd.f32 %v3464, %v3688
      %v3690 = vpop.f32.mrb[0].mxu0
      %v3691 = vpop.f32.mrb[0].mxu0
      %v3692 = vadd.f32 %v3467, %v3691
      %v3693 = vpop.f32.mrb[0].mxu0
      %3694 = vmatprep.mubr.bf16.mxu0 0
      %3695 = vmatmul.mubr.bf16.gmra.mrb[0].mxu0 %v3137
      %v3696 = vpop.f32.mrb[0].mxu0
      %v3697 = vadd.f32 %v3472, %v3696
      %v3698 = vpop.f32.mrb[0].mxu0
      %v3699 = vpop.f32.mrb[0].mxu0
      %v3700 = vadd.f32 %v3475, %v3699
      %v3701 = vpop.f32.mrb[0].mxu0
      %3702 = vmatprep.mubr.bf16.mxu0 0
      %3703 = vmatmul.mubr.bf16.gmra.mrb[0].mxu0 %v3140
      %v3704 = vpop.f32.mrb[0].mxu0
      %v3705 = vadd.f32 %v3480, %v3704
      %v3706 = vpop.f32.mrb[0].mxu0
      %v3707 = vpop.f32.mrb[0].mxu0
      %v3708 = vadd.f32 %v3483, %v3707
      %v3709 = vpop.f32.mrb[0].mxu0
      %3710 = vmatprep.mubr.bf16.mxu0 0
      %3711 = vmatmul.mubr.bf16.gmra.mrb[0].mxu0 %v3142
      %v3712 = vpop.f32.mrb[0].mxu0
      %v3713 = vadd.f32 %v3488, %v3712
      %v3714 = vpop.f32.mrb[0].mxu0
      %v3715 = vpop.f32.mrb[0].mxu0
      %v3716 = vadd.f32 %v3491, %v3715
      %v3717 = vpop.f32.mrb[0].mxu0
      %3718 = vmatprep.mubr.bf16.mxu0 0
      %3719 = vmatmul.mubr.bf16.gmra.mrb[0].mxu0 %v3144
      %v3720 = vpop.f32.mrb[0].mxu0
      %v3721 = vadd.f32 %v3496, %v3720
      %v3722 = vpop.f32.mrb[0].mxu0
      %v3723 = vpop.f32.mrb[0].mxu0
      %v3724 = vadd.f32 %v3499, %v3723
      %v3725 = vpop.f32.mrb[0].mxu0
      %3726 = vmatprep.mubr.bf16.mxu0 0
      %3727 = vmatmul.mubr.bf16.gmra.mrb[0].mxu0 %v3147
      %v3728 = vpop.f32.mrb[0].mxu0
      %v3729 = vadd.f32 %v3504, %v3728
      %v3730 = vpop.f32.mrb[0].mxu0
      %v3731 = vpop.f32.mrb[0].mxu0
      %v3732 = vadd.f32 %v3507, %v3731
      %v3733 = vpop.f32.mrb[0].mxu0
      %3734 = vmatprep.mubr.bf16.mxu0 0
      %3735 = vmatmul.mubr.bf16.gmra.mrb[0].mxu0 %v3149
      %v3736 = vpop.f32.mrb[0].mxu0
      %v3737 = vadd.f32 %v3512, %v3736
      %v3738 = vpop.f32.mrb[0].mxu0
      %v3739 = vpop.f32.mrb[0].mxu0
      %v3740 = vadd.f32 %v3515, %v3739
      %v3741 = vpop.f32.mrb[0].mxu0
      %3742 = vmatprep.mubr.bf16.mxu0 0
      %3743 = vmatmul.mubr.bf16.gmra.mrb[0].mxu0 %v3151
      %v3744 = vpop.f32.mrb[0].mxu0
      %v3745 = vadd.f32 %v3520, %v3744
      %v3746 = vpop.f32.mrb[0].mxu0
      %v3747 = vpop.f32.mrb[0].mxu0
      %v3748 = vadd.f32 %v3523, %v3747
      %v3749 = vpop.f32.mrb[0].mxu0
      %3750 = vmatprep.mubr.bf16.mxu0 0
      %3751 = vmatmul.mubr.bf16.gmra.mrb[0].mxu0 %v3154
      %v3752 = vpop.f32.mrb[0].mxu0
      %v3753 = vadd.f32 %v3528, %v3752
      %v3754 = vpop.f32.mrb[0].mxu0
      %v3755 = vpop.f32.mrb[0].mxu0
      %v3756 = vadd.f32 %v3531, %v3755
      %v3757 = vpop.f32.mrb[0].mxu0
      %3758 = vmatprep.mubr.bf16.mxu0 0
      %3759 = vmatmul.mubr.bf16.gmra.mrb[0].mxu0 %v3156
      %v3760 = vpop.f32.mrb[0].mxu0
      %v3761 = vadd.f32 %v3536, %v3760
      %v3762 = vpop.f32.mrb[0].mxu0
      %v3763 = vpop.f32.mrb[0].mxu0
      %v3764 = vadd.f32 %v3539, %v3763
      %v3765 = vpop.f32.mrb[0].mxu0
      %3766 = vmatprep.mubr.bf16.mxu0 0
      %3767 = vmatmul.mubr.bf16.gmra.mrb[0].mxu0 %v3158
      %v3768 = vpop.f32.mrb[0].mxu0
      %v3769 = vadd.f32 %v3544, %v3768
      %v3770 = vpop.f32.mrb[0].mxu0
      %v3771 = vpop.f32.mrb[0].mxu0
      %v3772 = vadd.f32 %v3547, %v3771
      %v3773 = vpop.f32.mrb[0].mxu0
      %3774 = vmatprep.mubr.bf16.mxu0 0
      %3775 = vmatmul.mubr.bf16.gmra.mrb[0].mxu0 %v3161
      %v3776 = vpop.f32.mrb[0].mxu0
      %v3777 = vadd.f32 %v3552, %v3776
      %v3778 = vpop.f32.mrb[0].mxu0
      %v3779 = vpop.f32.mrb[0].mxu0
      %v3780 = vadd.f32 %v3555, %v3779
      %v3781 = vpop.f32.mrb[0].mxu0
      %3782 = vmatprep.mubr.bf16.mxu0 0
      %3783 = vmatmul.mubr.bf16.gmra.mrb[0].mxu0 %v3163
      %v3784 = vpop.f32.mrb[0].mxu0
      %v3785 = vadd.f32 %v3560, %v3784
      %v3786 = vpop.f32.mrb[0].mxu0
      %v3787 = vpop.f32.mrb[0].mxu0
      %v3788 = vadd.f32 %v3563, %v3787
      %v3789 = vpop.f32.mrb[0].mxu0
      %3790 = vmatprep.mubr.bf16.mxu0 0
      %3791 = vmatmul.mubr.bf16.gmra.mrb[0].mxu0 %v3165
      %v3792 = vpop.f32.mrb[0].mxu0
      %v3793 = vadd.f32 %v3568, %v3792
      %v3794 = vpop.f32.mrb[0].mxu0
      %v3795 = vpop.f32.mrb[0].mxu0
      %v3796 = vadd.f32 %v3571, %v3795
      %v3797 = vpop.f32.mrb[0].mxu0
      %3798 = vmatprep.mubr.bf16.mxu0 0
      %3799 = vmatmul.mubr.bf16.gmra.mrb[0].mxu0 %v3168
      %v3800 = vpop.f32.mrb[0].mxu0
      %v3801 = vadd.f32 %v3576, %v3800
      %v3802 = vpop.f32.mrb[0].mxu0
      %v3803 = vpop.f32.mrb[0].mxu0
      %v3804 = vadd.f32 %v3579, %v3803
      %v3805 = vpop.f32.mrb[0].mxu0
      %3806 = vmatprep.mubr.bf16.mxu0 0
      %3807 = vmatmul.mubr.bf16.gmra.mrb[0].mxu0 %v3170
      %v3808 = vpop.f32.mrb[0].mxu0
      %v3809 = vadd.f32 %v3584, %v3808
      %v3810 = vpop.f32.mrb[0].mxu0
      %v3811 = vpop.f32.mrb[0].mxu0
      %v3812 = vadd.f32 %v3587, %v3811
      %v3813 = vpop.f32.mrb[0].mxu0
      %3814 = vmatprep.mubr.bf16.mxu0 0
      %3815 = vmatmul.mubr.bf16.gmra.mrb[0].mxu0 %v3172
      %v3816 = vpop.f32.mrb[0].mxu0
      %v3817 = vadd.f32 %v3592, %v3816
      %v3818 = vpop.f32.mrb[0].mxu0
      %v3819 = vpop.f32.mrb[0].mxu0
      %v3820 = vadd.f32 %v3595, %v3819
      %v3821 = vpop.f32.mrb[0].mxu0
      %3822 = vmatprep.mubr.bf16.mxu0 0
      %3823 = vmatmul.mubr.bf16.gmra.mrb[0].mxu0 %v3175
      %v3824 = vpop.f32.mrb[0].mxu0
      %v3825 = vadd.f32 %v3600, %v3824
      %v3826 = vpop.f32.mrb[0].mxu0
      %v3827 = vpop.f32.mrb[0].mxu0
      %v3828 = vadd.f32 %v3603, %v3827
      %v3829 = vpop.f32.mrb[0].mxu0
      %3830 = vmatprep.mubr.bf16.mxu0 0
      %3831 = vmatmul.mubr.bf16.gmra.mrb[0].mxu0 %v3177
      %v3832 = vpop.f32.mrb[0].mxu0
      %v3833 = vadd.f32 %v3608, %v3832
      %v3834 = vpop.f32.mrb[0].mxu0
      %v3835 = vpop.f32.mrb[0].mxu0
      %v3836 = vadd.f32 %v3611, %v3835
      %v3837 = vpop.f32.mrb[0].mxu0
      %3838 = vmatprep.mubr.bf16.mxu0 0
      %3839 = vmatmul.mubr.bf16.gmra.mrb[0].mxu0 %v3179
      %v3840 = vpop.f32.mrb[0].mxu0
      %v3841 = vadd.f32 %v3616, %v3840
      %v3842 = vpop.f32.mrb[0].mxu0
      %v3843 = vpop.f32.mrb[0].mxu0
      %v3844 = vadd.f32 %v3619, %v3843
      %v3845 = vpop.f32.mrb[0].mxu0
      %3846 = vdwg.mxu0
      %v3847 = vadd.f32 %v2458, %v3657
      %v3848 = vadd.f32 %v2461, %v3660
      %v3849 = vadd.f32 %v2466, %v3665
      %v3850 = vadd.f32 %v2469, %v3668
      %v3851 = vadd.f32 %v2474, %v3673
      %v3852 = vadd.f32 %v2477, %v3676
      %v3853 = vadd.f32 %v2482, %v3681
      %v3854 = vadd.f32 %v2485, %v3684
      %v3855 = vadd.f32 %v2490, %v3689
      %v3856 = vadd.f32 %v2493, %v3692
      %v3857 = vadd.f32 %v2498, %v3697
      %v3858 = vadd.f32 %v2501, %v3700
      %v3859 = vadd.f32 %v2506, %v3705
      %v3860 = vadd.f32 %v2509, %v3708
      %v3861 = vadd.f32 %v2514, %v3713
      %v3862 = vadd.f32 %v2517, %v3716
      %v3863 = vadd.f32 %v2522, %v3721
      %v3864 = vadd.f32 %v2525, %v3724
      %v3865 = vadd.f32 %v2530, %v3729
      %v3866 = vadd.f32 %v2533, %v3732
      %v3867 = vadd.f32 %v2538, %v3737
      %v3868 = vadd.f32 %v2541, %v3740
      %v3869 = vadd.f32 %v2546, %v3745
      %v3870 = vadd.f32 %v2549, %v3748
      %v3871 = vadd.f32 %v2554, %v3753
      %v3872 = vadd.f32 %v2557, %v3756
      %v3873 = vadd.f32 %v2562, %v3761
      %v3874 = vadd.f32 %v2565, %v3764
      %v3875 = vadd.f32 %v2570, %v3769
      %v3876 = vadd.f32 %v2573, %v3772
      %v3877 = vadd.f32 %v2578, %v3777
      %v3878 = vadd.f32 %v2581, %v3780
      %v3879 = vadd.f32 %v2586, %v3785
      %v3880 = vadd.f32 %v2589, %v3788
      %v3881 = vadd.f32 %v2594, %v3793
      %v3882 = vadd.f32 %v2597, %v3796
      %v3883 = vadd.f32 %v2602, %v3801
      %v3884 = vadd.f32 %v2605, %v3804
      %v3885 = vadd.f32 %v2610, %v3809
      %v3886 = vadd.f32 %v2613, %v3812
      %v3887 = vadd.f32 %v2618, %v3817
      %v3888 = vadd.f32 %v2621, %v3820
      %v3889 = vadd.f32 %v2626, %v3825
      %v3890 = vadd.f32 %v2629, %v3828
      %v3891 = vadd.f32 %v2634, %v3833
      %v3892 = vadd.f32 %v2637, %v3836
      %v3893 = vadd.f32 %v2642, %v3841
      %v3894 = vadd.f32 %v2645, %v3844
      %v3895 = vld [vmem:[%s2] sm:$0x1]
      %v3897 = vlaneseq
      %v3898 = vshrl.u32 %v3897, 7
      %v3899 = vsub.s32 0, %v3898
      %v3900 = vrot.slane %v3895, %v3899
      %v3902 = vadd.f32 %v3847, %v3900
      %v3903 = vadd.f32 %v3848, %v3900
      %v3904 = vadd.f32 %v3849, %v3900
      %v3905 = vadd.f32 %v3850, %v3900
      %v3906 = vadd.f32 %v3851, %v3900
      %v3907 = vadd.f32 %v3852, %v3900
      %v3908 = vadd.f32 %v3853, %v3900
      %v3909 = vadd.f32 %v3854, %v3900
      %v3910 = vadd.f32 %v3855, %v3900
      %v3911 = vadd.f32 %v3856, %v3900
      %v3912 = vadd.f32 %v3857, %v3900
      %v3913 = vadd.f32 %v3858, %v3900
      %v3914 = vadd.f32 %v3859, %v3900
      %v3915 = vadd.f32 %v3860, %v3900
      %v3916 = vadd.f32 %v3861, %v3900
      %v3917 = vadd.f32 %v3862, %v3900
      %v3918 = vadd.f32 %v3863, %v3900
      %v3919 = vadd.f32 %v3864, %v3900
      %v3920 = vadd.f32 %v3865, %v3900
      %v3921 = vadd.f32 %v3866, %v3900
      %v3922 = vadd.f32 %v3867, %v3900
      %v3923 = vadd.f32 %v3868, %v3900
      %v3924 = vadd.f32 %v3869, %v3900
      %v3925 = vadd.f32 %v3870, %v3900
      %v3926 = vadd.f32 %v3871, %v3900
      %v3927 = vadd.f32 %v3872, %v3900
      %v3928 = vadd.f32 %v3873, %v3900
      %v3929 = vadd.f32 %v3874, %v3900
      %v3930 = vadd.f32 %v3875, %v3900
      %v3931 = vadd.f32 %v3876, %v3900
      %v3932 = vadd.f32 %v3877, %v3900
      %v3933 = vadd.f32 %v3878, %v3900
      %v3934 = vadd.f32 %v3879, %v3900
      %v3935 = vadd.f32 %v3880, %v3900
      %v3936 = vadd.f32 %v3881, %v3900
      %v3937 = vadd.f32 %v3882, %v3900
      %v3938 = vadd.f32 %v3883, %v3900
      %v3939 = vadd.f32 %v3884, %v3900
      %v3940 = vadd.f32 %v3885, %v3900
      %v3941 = vadd.f32 %v3886, %v3900
      %v3942 = vadd.f32 %v3887, %v3900
      %v3943 = vadd.f32 %v3888, %v3900
      %v3944 = vadd.f32 %v3889, %v3900
      %v3945 = vadd.f32 %v3890, %v3900
      %v3946 = vadd.f32 %v3891, %v3900
      %v3947 = vadd.f32 %v3892, %v3900
      %v3948 = vadd.f32 %v3893, %v3900
      %v3949 = vadd.f32 %v3894, %v3900
      %v3950 = vmax.f32 %v3902, 0.0
      %v3951 = vmax.f32 %v3903, 0.0
      %v3952 = vmax.f32 %v3904, 0.0
      %v3953 = vmax.f32 %v3905, 0.0
      %v3954 = vmax.f32 %v3906, 0.0
      %v3955 = vmax.f32 %v3907, 0.0
      %v3956 = vmax.f32 %v3908, 0.0
      %v3957 = vmax.f32 %v3909, 0.0
      %v3958 = vmax.f32 %v3910, 0.0
      %v3959 = vmax.f32 %v3911, 0.0
      %v3960 = vmax.f32 %v3912, 0.0
      %v3961 = vmax.f32 %v3913, 0.0
      %v3962 = vmax.f32 %v3914, 0.0
      %v3963 = vmax.f32 %v3915, 0.0
      %v3964 = vmax.f32 %v3916, 0.0
      %v3965 = vmax.f32 %v3917, 0.0
      %v3966 = vmax.f32 %v3918, 0.0
      %v3967 = vmax.f32 %v3919, 0.0
      %v3968 = vmax.f32 %v3920, 0.0
      %v3969 = vmax.f32 %v3921, 0.0
      %v3970 = vmax.f32 %v3922, 0.0
      %v3971 = vmax.f32 %v3923, 0.0
      %v3972 = vmax.f32 %v3924, 0.0
      %v3973 = vmax.f32 %v3925, 0.0
      %v3974 = vmax.f32 %v3926, 0.0
      %v3975 = vmax.f32 %v3927, 0.0
      %v3976 = vmax.f32 %v3928, 0.0
      %v3977 = vmax.f32 %v3929, 0.0
      %v3978 = vmax.f32 %v3930, 0.0
      %v3979 = vmax.f32 %v3931, 0.0
      %v3980 = vmax.f32 %v3932, 0.0
      %v3981 = vmax.f32 %v3933, 0.0
      %v3982 = vmax.f32 %v3934, 0.0
      %v3983 = vmax.f32 %v3935, 0.0
      %v3984 = vmax.f32 %v3936, 0.0
      %v3985 = vmax.f32 %v3937, 0.0
      %v3986 = vmax.f32 %v3938, 0.0
      %v3987 = vmax.f32 %v3939, 0.0
      %v3988 = vmax.f32 %v3940, 0.0
      %v3989 = vmax.f32 %v3941, 0.0
      %v3990 = vmax.f32 %v3942, 0.0
      %v3991 = vmax.f32 %v3943, 0.0
      %v3992 = vmax.f32 %v3944, 0.0
      %v3993 = vmax.f32 %v3945, 0.0
      %v3994 = vmax.f32 %v3946, 0.0
      %v3995 = vmax.f32 %v3947, 0.0
      %v3996 = vmax.f32 %v3948, 0.0
      %v3997 = vmax.f32 %v3949, 0.0
      %v3998 = vpack.c.bf16 %v3951, %v3950
      %v3999 = vpack.c.bf16 %v3953, %v3952
      %v4000 = vpack.c.bf16 %v3955, %v3954
      %v4001 = vpack.c.bf16 %v3957, %v3956
      %v4002 = vpack.c.bf16 %v3959, %v3958
      %v4003 = vpack.c.bf16 %v3961, %v3960
      %v4004 = vpack.c.bf16 %v3963, %v3962
      %v4005 = vpack.c.bf16 %v3965, %v3964
      %v4006 = vpack.c.bf16 %v3967, %v3966
      %v4007 = vpack.c.bf16 %v3969, %v3968
      %v4008 = vpack.c.bf16 %v3971, %v3970
      %v4009 = vpack.c.bf16 %v3973, %v3972
      %v4010 = vpack.c.bf16 %v3975, %v3974
      %v4011 = vpack.c.bf16 %v3977, %v3976
      %v4012 = vpack.c.bf16 %v3979, %v3978
      %v4013 = vpack.c.bf16 %v3981, %v3980
      %v4014 = vpack.c.bf16 %v3983, %v3982
      %v4015 = vpack.c.bf16 %v3985, %v3984
      %v4016 = vpack.c.bf16 %v3987, %v3986
      %v4017 = vpack.c.bf16 %v3989, %v3988
      %v4018 = vpack.c.bf16 %v3991, %v3990
      %v4019 = vpack.c.bf16 %v3993, %v3992
      %v4020 = vpack.c.bf16 %v3995, %v3994
      %v4021 = vpack.c.bf16 %v3997, %v3996
      %v4022 = vld [vmem:[%s3] sm:$0xf]
      %v4023 = vld [vmem:[%s4] sm:$0xff]
      %4025 = vset.pattern.permute.xlu0 0
      %4026 = vperm.xlu0 %4025, %v4023
      %v4027 = vpop.permute.xlu0 %4026
      %vm4029 = vcmask 130048
      %v4031 = vsel %vm4029, %v4022, 0
      %v4034 = vsel %vm4029, %v3998, 0
      %v4037 = vsel %vm4029, %v3999, 0
      %v4040 = vsel %vm4029, %v4000, 0
      %v4043 = vsel %vm4029, %v4001, 0
      %v4046 = vsel %vm4029, %v4002, 0
      %v4049 = vsel %vm4029, %v4003, 0
      %v4052 = vsel %vm4029, %v4004, 0
      %v4055 = vsel %vm4029, %v4005, 0
      %v4058 = vsel %vm4029, %v4006, 0
      %v4061 = vsel %vm4029, %v4007, 0
      %v4064 = vsel %vm4029, %v4008, 0
      %v4067 = vsel %vm4029, %v4009, 0
      %v4070 = vsel %vm4029, %v4010, 0
      %v4073 = vsel %vm4029, %v4011, 0
      %v4076 = vsel %vm4029, %v4012, 0
      %v4079 = vsel %vm4029, %v4013, 0
      %v4082 = vsel %vm4029, %v4014, 0
      %v4085 = vsel %vm4029, %v4015, 0
      %v4088 = vsel %vm4029, %v4016, 0
      %v4091 = vsel %vm4029, %v4017, 0
      %v4094 = vsel %vm4029, %v4018, 0
      %v4097 = vsel %vm4029, %v4019, 0
      %v4100 = vsel %vm4029, %v4020, 0
      %v4103 = vsel %vm4029, %v4021, 0
      %4105 = vmatprep.subr.bf16.mxu0 0
      %4106 = vmatpush1.bf16.xpose.msra.mxu0 %v4034
      %4107 = vmatprep.subr.bf16.mxu0 0
      %4108 = vmatpush1.bf16.xpose.msra.mxu0 %v4037
      %4109 = vmatprep.subr.bf16.mxu0 0
      %4110 = vmatpush1.bf16.xpose.msra.mxu0 %v4040
      %4111 = vmatprep.subr.bf16.mxu0 0
      %4112 = vmatpush1.bf16.xpose.msra.mxu0 %v4043
      %4113 = vmatprep.subr.bf16.mxu0 0
      %4114 = vmatpush1.bf16.xpose.msra.mxu0 %v4046
      %4115 = vmatprep.subr.bf16.mxu0 0
      %4116 = vmatpush1.bf16.xpose.msra.mxu0 %v4049
      %4117 = vmatprep.subr.bf16.mxu0 0
      %4118 = vmatpush1.bf16.xpose.msra.mxu0 %v4052
      %4119 = vmatprep.subr.bf16.mxu0 0
      %4120 = vmatpush1.bf16.xpose.msra.mxu0 %v4055
      %4121 = vmatprep.subr.bf16.mxu0 0
      %4122 = vmatpush1.bf16.xpose.msra.mxu0 %v4058
      %4123 = vmatprep.subr.bf16.mxu0 0
      %4124 = vmatpush1.bf16.xpose.msra.mxu0 %v4061
      %4125 = vmatprep.subr.bf16.mxu0 0
      %4126 = vmatpush1.bf16.xpose.msra.mxu0 %v4064
      %4127 = vmatprep.subr.bf16.mxu0 0
      %4128 = vmatpush1.bf16.xpose.msra.mxu0 %v4067
      %4129 = vmatprep.subr.bf16.mxu0 0
      %4130 = vmatpush1.bf16.xpose.msra.mxu0 %v4070
      %4131 = vmatprep.subr.bf16.mxu0 0
      %4132 = vmatpush1.bf16.xpose.msra.mxu0 %v4073
      %4133 = vmatprep.subr.bf16.mxu0 0
      %4134 = vmatpush1.bf16.xpose.msra.mxu0 %v4076
      %4135 = vmatprep.subr.bf16.mxu0 0
      %4136 = vmatpush1.bf16.xpose.msra.mxu0 %v4079
      %4137 = vmatprep.mubr.bf16.mxu0 0
      %4138 = vmatmul.mubr.bf16.gmra.mrb[0].mxu0 %v4031
      %v4139 = vpop.f32.mrb[0].mxu0
      %v4140 = vadd.f32 %v4027, %v4139
      %v4141 = vpop.f32.mrb[0].mxu0
      %v4142 = vadd.f32 %v4027, %v4141
      %v4143 = vpop.f32.mrb[0].mxu0
      %v4144 = vpop.f32.mrb[0].mxu0
      %4145 = vdwg.mxu0
      %4146 = vmatprep.subr.bf16.mxu0 0
      %4147 = vmatpush1.bf16.xpose.msra.mxu0 %v4082
      %4148 = vmatprep.subr.bf16.mxu0 0
      %4149 = vmatpush1.bf16.xpose.msra.mxu0 %v4085
      %4150 = vmatprep.subr.bf16.mxu0 0
      %4151 = vmatpush1.bf16.xpose.msra.mxu0 %v4088
      %4152 = vmatprep.subr.bf16.mxu0 0
      %4153 = vmatpush1.bf16.xpose.msra.mxu0 %v4091
      %4154 = vmatprep.subr.bf16.mxu0 0
      %4155 = vmatpush1.bf16.xpose.msra.mxu0 %v4094
      %4156 = vmatprep.subr.bf16.mxu0 0
      %4157 = vmatpush1.bf16.xpose.msra.mxu0 %v4097
      %4158 = vmatprep.subr.bf16.mxu0 0
      %4159 = vmatpush1.bf16.xpose.msra.mxu0 %v4100
      %4160 = vmatprep.subr.bf16.mxu0 0
      %4161 = vmatpush1.bf16.xpose.msra.mxu0 %v4103
      %4162 = vmatprep.subr.bf16.mxu0 0
      %4163 = vmatpush1.bf16.xpose.msra.mxu0 0
      %4164 = vmatprep.subr.bf16.mxu0 0
      %4165 = vmatpush1.bf16.xpose.msra.mxu0 0
      %4166 = vmatprep.subr.bf16.mxu0 0
      %4167 = vmatpush1.bf16.xpose.msra.mxu0 0
      %4168 = vmatprep.subr.bf16.mxu0 0
      %4169 = vmatpush1.bf16.xpose.msra.mxu0 0
      %4170 = vmatprep.subr.bf16.mxu0 0
      %4171 = vmatpush1.bf16.xpose.msra.mxu0 0
      %4172 = vmatprep.subr.bf16.mxu0 0
      %4173 = vmatpush1.bf16.xpose.msra.mxu0 0
      %4174 = vmatprep.subr.bf16.mxu0 0
      %4175 = vmatpush1.bf16.xpose.msra.mxu0 0
      %4176 = vmatprep.subr.bf16.mxu0 0
      %4177 = vmatpush1.bf16.xpose.msra.mxu0 0
      %4178 = vmatprep.mubr.bf16.mxu0 0
      %4179 = vmatmul.mubr.bf16.gmra.mrb[0].mxu0 %v4031
      %v4180 = vpop.f32.mrb[0].mxu0
      %v4181 = vadd.f32 %v4027, %v4180
      %v4182 = vpop.f32.mrb[0].mxu0
      %v4183 = vpop.f32.mrb[0].mxu0
      %v4184 = vpop.f32.mrb[0].mxu0
      %4185 = vdwg.mxu0
      %v4186 = vrot.slane %v4140, 4
      %v4187 = vmax.f32 %v4140, %v4186
      %v4188 = vrot.slane %v4187, 2
      %v4189 = vmax.f32 %v4187, %v4188
      %v4190 = vrot.slane %v4189, 1
      %v4191 = vmax.f32 %v4189, %v4190
      %v4192 = vrot.slane %v4142, 4
      %v4193 = vmax.f32 %v4142, %v4192
      %v4194 = vrot.slane %v4193, 2
      %v4195 = vmax.f32 %v4193, %v4194
      %v4196 = vrot.slane %v4195, 1
      %v4197 = vmax.f32 %v4195, %v4196
      %v4198 = vrot.slane %v4181, 4
      %v4199 = vmax.f32 %v4181, %v4198
      %v4200 = vrot.slane %v4199, 2
      %v4201 = vmax.f32 %v4199, %v4200
      %v4202 = vrot.slane %v4201, 1
      %v4203 = vmax.f32 %v4201, %v4202
      %v4204 = vsub.f32 %v4140, %v4191
      %v4205 = vsub.f32 %v4142, %v4197
      %v4206 = vsub.f32 %v4181, %v4203
      %v4207 = vmul.f32 %v4204, 1.442695
      %v4208 = vpow.pop %v4207
      %v4209 = vmul.f32 %v4205, 1.442695
      %v4210 = vpow.pop %v4209
      %v4211 = vmul.f32 %v4206, 1.442695
      %v4212 = vpow.pop %v4211
      %v4213 = vrot.slane %v4208, 4
      %v4214 = vadd.f32 %v4208, %v4213
      %v4215 = vrot.slane %v4214, 2
      %v4216 = vadd.f32 %v4214, %v4215
      %v4217 = vrot.slane %v4216, 1
      %v4218 = vadd.f32 %v4216, %v4217
      %v4219 = vrot.slane %v4210, 4
      %v4220 = vadd.f32 %v4210, %v4219
      %v4221 = vrot.slane %v4220, 2
      %v4222 = vadd.f32 %v4220, %v4221
      %v4223 = vrot.slane %v4222, 1
      %v4224 = vadd.f32 %v4222, %v4223
      %v4225 = vrot.slane %v4212, 4
      %v4226 = vadd.f32 %v4212, %v4225
      %v4227 = vrot.slane %v4226, 2
      %v4228 = vadd.f32 %v4226, %v4227
      %v4229 = vrot.slane %v4228, 1
      %v4230 = vadd.f32 %v4228, %v4229
      %v4231 = vlog2.pop %v4218
      %v4232 = vmul.f32 %v4231, 0.6931472
      %v4233 = vlog2.pop %v4224
      %v4234 = vmul.f32 %v4233, 0.6931472
      %v4235 = vlog2.pop %v4230
      %v4236 = vmul.f32 %v4235, 0.6931472
      %v4237 = vsub.f32 %v4204, %v4232
      %v4238 = vsub.f32 %v4205, %v4234
      %v4239 = vsub.f32 %v4206, %v4236
      %4240 = vst [vmem:[%s246] sm:$0xff] %v4237
      %4241 = vst [vmem:[%s246 + $0x8] sm:$0xff] %v4238
      %4242 = vst [vmem:[%s246 + $0x10] sm:$0xff] %v4239
      %s4243 = smul.u32 3, %s21
      %p4244 = scmp.lt.s32.totalorder %s20, 1
      %s4245 = scalar_select %p4244, %s20, 1
      %p4246 = scmp.lt.s32.totalorder %s4243, 17
      %s4247 = scalar_select %p4246, %s4243, 17
      %s4248 = smul.addr %s4245, 18
      %s4249 = sadd.s32 %s4247, %s4248
      %s4250 = smul.addr %s4249, 8
      %s4251 = scalar_lea.vmem %s5, %s4250
      // Predicated region
      $region41: #{semantic_decoder_forward.3} parent=39 // pred_check
        %p4252 = pneg %p158
      $region42: #{semantic_decoder_forward.3} parent=39 // pred_check_branch
        %4254 = sbr.rel (%p4252) target = $region44
      $region43: #{semantic_decoder_forward.3} parent=39 // pred_region
        %s4255 = smul.u32 3, %s21
      $region44: #{semantic_decoder_forward.3} parent=39 // pred_fallthru
        _
    $region40: #{semantic_decoder_forward.3} parent=5 // pred_fallthru
      _
    %p4256 = scmp.le.s32.totalorder 2, %s11
    // Predicated region
    $region45: #{semantic_decoder_forward.3} parent=5 // pred_check
      %p4257 = pneg %p4256
    $region46: #{semantic_decoder_forward.3} parent=5 // pred_check_branch
      %4259 = sbr.rel (%p4257) target = $region48
    $region47: #{semantic_decoder_forward.3} parent=5 // pred_region
      %s4260 = ssub.s32 %s11, 2
      // Predicated region
      $region49: #{semantic_decoder_forward.3} parent=47 // pred_check
        %p4261 = pneg %p164
      $region50: #{semantic_decoder_forward.3} parent=47 // pred_check_branch
        %4263 = sbr.rel (%p4261) target = $region52
      $region51: #{semantic_decoder_forward.3} parent=47 // pred_region
        %s4264 = smul.u32 3, %s23
        %p4265 = scmp.lt.s32.totalorder %s22, 1
        %s4266 = scalar_select %p4265, %s22, 1
        %p4267 = scmp.lt.s32.totalorder %s4264, 17
        %s4268 = scalar_select %p4267, %s4264, 17
        %s4269 = smul.addr %s4266, 18
        %s4270 = sadd.s32 %s4268, %s4269
        %s4271 = smul.addr %s4270, 8
        %s4272 = scalar_lea.vmem %s5, %s4271
      $region52: #{semantic_decoder_forward.3} parent=47 // pred_fallthru
        _
    $region48: #{semantic_decoder_forward.3} parent=5 // pred_fallthru
      _
  $region6: #{semantic_decoder_forward.3} parent=0 // loop_footer
    %s15 = sadd.s32 1, %s11
  $region7: #{semantic_decoder_forward.3} parent=0 // loop_footer_branch
    %10 = sbr.rel target = $region3
  $region8: #{semantic_decoder_forward.3} parent=0 // loop_exit
    _

</llo_original>
